<compile_context>
chip_gen: v7x
topology: tpu7x:2x2x1
jax: 0.10.0
libtpu: 0.0.40
codegen_flags: <defaults>
</compile_context>

<pallas_src>
import functools

import jax
import jax.numpy as jnp
from jax.experimental import pallas as pl
from jax.experimental.pallas import tpu as pltpu

LN_EPS = 1e-5                      # torch.nn.LayerNorm default
_VMEM_LIMIT = 32 * 1024 * 1024     # safe on v5e (128M) / v6e (128M) / v7x (64M)


def _row_tile(n):
    """Row tile: big enough to fill the MXU, >=2 grid steps when possible."""
    if n <= 256:
        return n          # single full block (exempt from the 8-multiple rule)
    if n <= 1024:
        return 128
    return 256


# ----------------------------------------------------------------------------
# Kernel 1: plain linear projection   out = x @ W      (W stored in bf16)
# Used to precompute the node-side contributions of the edge-block MLP.
# ----------------------------------------------------------------------------
def _linear_kernel(x_ref, w_ref, o_ref):
    x = x_ref[...].astype(jnp.bfloat16)
    o_ref[...] = jnp.dot(x, w_ref[...], preferred_element_type=jnp.float32)


def linear_proj(x, w):
    n, din = x.shape
    dout = w.shape[1]
    tm = _row_tile(n)
    return pl.pallas_call(
        _linear_kernel,
        grid=(pl.cdiv(n, tm),),
        in_specs=[
            pl.BlockSpec((tm, din), lambda i: (i, 0)),
            pl.BlockSpec((din, dout), lambda i: (0, 0)),
        ],
        out_specs=pl.BlockSpec((tm, dout), lambda i: (i, 0)),
        out_shape=jax.ShapeDtypeStruct((n, dout), jnp.float32),
        compiler_params=pltpu.CompilerParams(
            dimension_semantics=("parallel",),
            vmem_limit_bytes=_VMEM_LIMIT),
    )(x, w)


# ----------------------------------------------------------------------------
# Kernel 2: fused GraphCast MLP block
#   hidden = sum_k  x_dot[k] @ W1[k]  +  sum_j x_add[j]  +  b1
#   hidden = SiLU(hidden)                                    (f32)
#   y      = hidden @ W2 + b2
#   y      = LayerNorm(y) * gamma + beta                     (single-pass stats)
#   out    = y + x_dot[0]                                    (fused residual)
# ----------------------------------------------------------------------------
def _fused_mlp_kernel(*refs, n_dot, n_add, residual):
    xs_dot = refs[:n_dot]
    xs_add = refs[n_dot:n_dot + n_add]
    w1s = refs[n_dot + n_add:n_dot + n_add + n_dot]
    b1_ref, w2_ref, b2_ref, g_ref, beta_ref = refs[2 * n_dot + n_add:
                                                   2 * n_dot + n_add + 5]
    o_ref = refs[-1]

    # First layer: sum of partial matmuls (bf16 MXU operands, f32 accumulate).
    hid = jnp.dot(xs_dot[0][...].astype(jnp.bfloat16), w1s[0][...],
                  preferred_element_type=jnp.float32)
    for x_ref, w_ref in zip(xs_dot[1:], w1s[1:]):
        hid += jnp.dot(x_ref[...].astype(jnp.bfloat16), w_ref[...],
                       preferred_element_type=jnp.float32)
    for x_ref in xs_add:
        hid += x_ref[...]
    hid += b1_ref[...]

    # SiLU in f32 (EUP sigmoid + VPU mul).
    hid = hid * jax.nn.sigmoid(hid)

    y = jnp.dot(hid.astype(jnp.bfloat16), w2_ref[...],
                preferred_element_type=jnp.float32) + b2_ref[...]

    # LayerNorm, one-pass statistics.
    mu = jnp.mean(y, axis=-1, keepdims=True)
    ms = jnp.mean(y * y, axis=-1, keepdims=True)
    var = ms - mu * mu
    y = (y - mu) * jax.lax.rsqrt(var + LN_EPS)
    y = y * g_ref[...] + beta_ref[...]

    if residual:
        y = y + xs_dot[0][...]          # fused residual with the first input
    o_ref[...] = y.astype(o_ref.dtype)


def fused_mlp(xs_dot, xs_add, p, *, residual=True):
    """Row-tiled fused MLP; xs_dot[k] pairs with p['w1'][k], xs_add are
    pre-projected hidden contributions added directly."""
    n = xs_dot[0].shape[0]
    dout = p["w2"].shape[1]
    tm = _row_tile(n)

    def row_spec(d):
        return pl.BlockSpec((tm, d), lambda i: (i, 0))

    def full_spec(a):
        return pl.BlockSpec(a.shape, lambda i: (0, 0))

    in_specs = ([row_spec(x.shape[1]) for x in xs_dot]
                + [row_spec(x.shape[1]) for x in xs_add]
                + [full_spec(w) for w in p["w1"]]
                + [full_spec(p["b1"]), full_spec(p["w2"]), full_spec(p["b2"]),
                   full_spec(p["gamma"]), full_spec(p["beta"])])

    kernel = functools.partial(_fused_mlp_kernel, n_dot=len(xs_dot),
                               n_add=len(xs_add), residual=residual)
    return pl.pallas_call(
        kernel,
        grid=(pl.cdiv(n, tm),),
        in_specs=in_specs,
        out_specs=row_spec(dout),
        out_shape=jax.ShapeDtypeStruct((n, dout), jnp.float32),
        compiler_params=pltpu.CompilerParams(
            dimension_semantics=("parallel",),
            vmem_limit_bytes=_VMEM_LIMIT),
    )(*xs_dot, *xs_add, *p["w1"], p["b1"], p["w2"], p["b2"],
      p["gamma"], p["beta"])


# ----------------------------------------------------------------------------
# Parameter init (deterministic, synthetic).  Weights stored in bf16 for MXU /
# HBM; biases and LayerNorm affine params in f32.
# ----------------------------------------------------------------------------
def _init_edge_mlp(key, hdim):
    k1, k2 = jax.random.split(key)
    s1 = 1.0 / jnp.sqrt(3 * hdim)
    s2 = 1.0 / jnp.sqrt(hdim)
    w1_full = jax.random.uniform(k1, (3 * hdim, hdim), jnp.float32, -s1, s1)
    w2 = jax.random.uniform(k2, (hdim, hdim), jnp.float32, -s2, s2)
    return {
        # edge slice of W1 (used inside the fused MLP kernel)
        "w1": [w1_full[:hdim].astype(jnp.bfloat16)],
        # [H, 2H]: (src-slice | dst-slice) of W1, applied at node granularity
        "w1_nodes": jnp.concatenate(
            [w1_full[hdim:2 * hdim], w1_full[2 * hdim:]], axis=1
        ).astype(jnp.bfloat16),
        "b1": jnp.zeros((1, hdim), jnp.float32),
        "w2": w2.astype(jnp.bfloat16),
        "b2": jnp.zeros((1, hdim), jnp.float32),
        "gamma": jnp.ones((1, hdim), jnp.float32),
        "beta": jnp.zeros((1, hdim), jnp.float32),
    }


def _init_node_mlp(key, hdim):
    k1, k2 = jax.random.split(key)
    s1 = 1.0 / jnp.sqrt(2 * hdim)
    s2 = 1.0 / jnp.sqrt(hdim)
    w1_full = jax.random.uniform(k1, (2 * hdim, hdim), jnp.float32, -s1, s1)
    w2 = jax.random.uniform(k2, (hdim, hdim), jnp.float32, -s2, s2)
    return {
        "w1": [w1_full[:hdim].astype(jnp.bfloat16),
               w1_full[hdim:].astype(jnp.bfloat16)],
        "b1": jnp.zeros((1, hdim), jnp.float32),
        "w2": w2.astype(jnp.bfloat16),
        "b2": jnp.zeros((1, hdim), jnp.float32),
        "gamma": jnp.ones((1, hdim), jnp.float32),
        "beta": jnp.zeros((1, hdim), jnp.float32),
    }


def init_processor_params(key, hidden_dim, processor_layers):
    keys = jax.random.split(key, 2 * processor_layers)
    return {
        "edge_blocks": [_init_edge_mlp(keys[2 * i], hidden_dim)
                        for i in range(processor_layers)],
        "node_blocks": [_init_node_mlp(keys[2 * i + 1], hidden_dim)
                        for i in range(processor_layers)],
    }


# ----------------------------------------------------------------------------
# GraphCastProcessor forward
# ----------------------------------------------------------------------------
def graphcast_processor_forward(params, mesh_feats, edge_feats,
                                src_idx, dst_idx):
    n_feats, e_feats = mesh_feats, edge_feats
    num_nodes, hdim = n_feats.shape
    for pe, pn in zip(params["edge_blocks"], params["node_blocks"]):
        # ---- MeshEdgeBlock: MLP([e | n[src] | n[dst]]) + e ------------------
        # Node-side partial projections are computed once per layer at node
        # granularity and gathered to edges; the [E, 3H] concat never exists.
        proj = linear_proj(n_feats, pe["w1_nodes"])             # [N, 2H]
        src_h = jnp.take(proj[:, :hdim], src_idx, axis=0)       # [E, H]
        dst_h = jnp.take(proj[:, hdim:], dst_idx, axis=0)       # [E, H]
        e_feats = fused_mlp([e_feats], [src_h, dst_h], pe)

        # ---- MeshNodeBlock: MLP([n | sum_{edges} e]) + n --------------------
        # NOTE: the reference forward aggregates with the *src* index.
        # TODO(synk): scatter-sum aggregation stays in plain JAX (segment_sum);
        # a Pallas version needs data-dependent DMA (scalar-prefetch gather).
        agg = jax.ops.segment_sum(e_feats, src_idx, num_segments=num_nodes)
        n_feats = fused_mlp([n_feats, agg], [], pn)
    return n_feats, e_feats


# ----------------------------------------------------------------------------
# Plain-JAX reference (concat formulation) for numerical validation.
# ----------------------------------------------------------------------------
def _mlp_ref(x, w1_full, b1, w2, b2, gamma, beta):
    h = jnp.dot(x.astype(jnp.bfloat16), w1_full,
                preferred_element_type=jnp.float32) + b1
    h = h * jax.nn.sigmoid(h)
    y = jnp.dot(h.astype(jnp.bfloat16), w2,
                preferred_element_type=jnp.float32) + b2
    mu = jnp.mean(y, axis=-1, keepdims=True)
    var = jnp.mean(jnp.square(y - mu), axis=-1, keepdims=True)
    y = (y - mu) * jax.lax.rsqrt(var + LN_EPS)
    return y * gamma + beta


def reference_forward(params, mesh_feats, edge_feats, src_idx, dst_idx):
    n_feats, e_feats = mesh_feats, edge_feats
    num_nodes, hdim = n_feats.shape
    for pe, pn in zip(params["edge_blocks"], params["node_blocks"]):
        w1_e = jnp.concatenate([pe["w1"][0],
                                pe["w1_nodes"][:, :hdim],
                                pe["w1_nodes"][:, hdim:]], axis=0)
        cat = jnp.concatenate([e_feats, n_feats[src_idx], n_feats[dst_idx]],
                              axis=-1)
        e_feats = _mlp_ref(cat, w1_e, pe["b1"], pe["w2"], pe["b2"],
                           pe["gamma"], pe["beta"]) + e_feats

        agg = jax.ops.segment_sum(e_feats, src_idx, num_segments=num_nodes)
        cat = jnp.concatenate([n_feats, agg], axis=-1)
        w1_n = jnp.concatenate(pn["w1"], axis=0)
        n_feats = _mlp_ref(cat, w1_n, pn["b1"], pn["w2"], pn["b2"],
                           pn["gamma"], pn["beta"]) + n_feats
    return n_feats, e_feats


# ----------------------------------------------------------------------------
if __name__ == "__main__":
    HIDDEN = 128        # lane-dense feature dim (multiple of 128)
    N_MESH = 256
    E_M2M = 512
    LAYERS = 2

    key = jax.random.PRNGKey(0)
    kp, kn, ke, ks, kd = jax.random.split(key, 5)

    params = init_processor_params(kp, HIDDEN, LAYERS)

    mesh_feats = jax.random.normal(kn, (N_MESH, HIDDEN), jnp.float32)
    edge_feats = jax.random.normal(ke, (E_M2M, HIDDEN), jnp.float32)
    src_idx = jax.random.randint(ks, (E_M2M,), 0, N_MESH, jnp.int32)
    dst_idx = jax.random.randint(kd, (E_M2M,), 0, N_MESH, jnp.int32)

    fwd = jax.jit(graphcast_processor_forward)
    n_out, e_out = fwd(params, mesh_feats, edge_feats, src_idx, dst_idx)
    n_out, e_out = jax.block_until_ready((n_out, e_out))

    assert n_out.shape == (N_MESH, HIDDEN)
    assert e_out.shape == (E_M2M, HIDDEN)
    assert bool(jnp.all(jnp.isfinite(n_out)))
    assert bool(jnp.all(jnp.isfinite(e_out)))

    # Numerical check against the plain-JAX concat-MLP reference.
    n_ref, e_ref = jax.jit(reference_forward)(params, mesh_feats, edge_feats,
                                              src_idx, dst_idx)
    assert bool(jnp.allclose(n_out, n_ref, atol=2e-2, rtol=2e-2))
    assert bool(jnp.allclose(e_out, e_ref, atol=2e-2, rtol=2e-2))

    print("KERNEL_OK")
</pallas_src>

<mosaic_0001>
module attributes {stable_mosaic.version = 11 : i64} {
  func.func @_linear_kernel(%arg0: i32, %arg1: memref<256x128xf32, #tpu.memory_space<vmem>>, %arg2: memref<128x256xbf16, #tpu.memory_space<vmem>>, %arg3: memref<256x256xf32, #tpu.memory_space<vmem>>) attributes {dimension_semantics = [#tpu.dimension_semantics<parallel>], iteration_bounds = array<i64: 1>, scalar_prefetch = 0 : i64, scratch_operands = 0 : i64, tpu.core_type = #tpu.core_type<tc>, window_params = [{transform_indices = @transform_0, window_bounds = array<i64: 256, 128>}, {pipeline_mode = #tpu.pipeline_mode<synchronous>, transform_indices = @transform_1, window_bounds = array<i64: 128, 256>}, {transform_indices = @transform_2, window_bounds = array<i64: 256, 256>}]} {
    %c0 = arith.constant 0 : index
    %c0_0 = arith.constant 0 : index
    %0 = vector.load %arg1[%c0, %c0_0] : memref<256x128xf32, #tpu.memory_space<vmem>>, vector<256x128xf32>
    %1 = arith.truncf %0 : vector<256x128xf32> to vector<256x128xbf16>
    %c0_1 = arith.constant 0 : index
    %c0_2 = arith.constant 0 : index
    %2 = vector.load %arg2[%c0_1, %c0_2] : memref<128x256xbf16, #tpu.memory_space<vmem>>, vector<128x256xbf16>
    %cst = arith.constant dense<0.000000e+00> : vector<256x256xf32>
    %3 = tpu.matmul %1, %2, %cst {dimension_numbers = #tpu.dot_dimension_numbers<[1], [0], [0], [1], [0, 0, 1, 1], [], []>} : vector<256x128xbf16>, vector<128x256xbf16>, vector<256x256xf32> -> vector<256x256xf32>
    %c0_3 = arith.constant 0 : index
    %c0_4 = arith.constant 0 : index
    %4 = vector.load %arg3[%c0_3, %c0_4] : memref<256x256xf32, #tpu.memory_space<vmem>>, vector<256x256xf32>
    tpu.vector_store %arg3[%c0_3, %c0_4], %3 {strides = array<i32>} : memref<256x256xf32, #tpu.memory_space<vmem>>, vector<256x256xf32>,
    return
  }
  func.func @transform_0(%arg0: i32) -> (i32, i32) {
    %c0_i32 = arith.constant 0 : i32
    %c0_i32_0 = arith.constant 0 : i32
    return %arg0, %c0_i32 : i32, i32
  }
  func.func @transform_1(%arg0: i32) -> (i32, i32) {
    %c0_i32 = arith.constant 0 : i32
    %c0_i32_0 = arith.constant 0 : i32
    %c0_i32_1 = arith.constant 0 : i32
    return %c0_i32, %c0_i32_0 : i32, i32
  }
  func.func @transform_2(%arg0: i32) -> (i32, i32) {
    %c0_i32 = arith.constant 0 : i32
    %c0_i32_0 = arith.constant 0 : i32
    return %arg0, %c0_i32 : i32, i32
  }
}

module attributes {stable_mosaic.version = 11 : i64} {
  func.func @_fused_mlp_kernel(%arg0: i32, %arg1: memref<128x128xf32, #tpu.memory_space<vmem>>, %arg2: memref<128x128xf32, #tpu.memory_space<vmem>>, %arg3: memref<128x128xf32, #tpu.memory_space<vmem>>, %arg4: memref<128x128xbf16, #tpu.memory_space<vmem>>, %arg5: memref<1x128xf32, #tpu.memory_space<vmem>>, %arg6: memref<128x128xbf16, #tpu.memory_space<vmem>>, %arg7: memref<1x128xf32, #tpu.memory_space<vmem>>, %arg8: memref<1x128xf32, #tpu.memory_space<vmem>>, %arg9: memref<1x128xf32, #tpu.memory_space<vmem>>, %arg10: memref<128x128xf32, #tpu.memory_space<vmem>>) attributes {dimension_semantics = [#tpu.dimension_semantics<parallel>], iteration_bounds = array<i64: 4>, scalar_prefetch = 0 : i64, scratch_operands = 0 : i64, tpu.core_type = #tpu.core_type<tc>, window_params = [{transform_indices = @transform_0, window_bounds = array<i64: 128, 128>}, {transform_indices = @transform_1, window_bounds = array<i64: 128, 128>}, {transform_indices = @transform_2, window_bounds = array<i64: 128, 128>}, {pipeline_mode = #tpu.pipeline_mode<synchronous>, transform_indices = @transform_3, window_bounds = array<i64: 128, 128>}, {pipeline_mode = #tpu.pipeline_mode<synchronous>, transform_indices = @transform_4, window_bounds = array<i64: 1, 128>}, {pipeline_mode = #tpu.pipeline_mode<synchronous>, transform_indices = @transform_5, window_bounds = array<i64: 128, 128>}, {pipeline_mode = #tpu.pipeline_mode<synchronous>, transform_indices = @transform_6, window_bounds = array<i64: 1, 128>}, {pipeline_mode = #tpu.pipeline_mode<synchronous>, transform_indices = @transform_7, window_bounds = array<i64: 1, 128>}, {pipeline_mode = #tpu.pipeline_mode<synchronous>, transform_indices = @transform_8, window_bounds = array<i64: 1, 128>}, {transform_indices = @transform_9, window_bounds = array<i64: 128, 128>}]} {
    %c0 = arith.constant 0 : index
    %c0_0 = arith.constant 0 : index
    %0 = vector.load %arg1[%c0, %c0_0] : memref<128x128xf32, #tpu.memory_space<vmem>>, vector<128x128xf32>
    %1 = arith.truncf %0 : vector<128x128xf32> to vector<128x128xbf16>
    %c0_1 = arith.constant 0 : index
    %c0_2 = arith.constant 0 : index
    %2 = vector.load %arg4[%c0_1, %c0_2] : memref<128x128xbf16, #tpu.memory_space<vmem>>, vector<128x128xbf16>
    %cst = arith.constant dense<0.000000e+00> : vector<128x128xf32>
    %3 = tpu.matmul %1, %2, %cst {dimension_numbers = #tpu.dot_dimension_numbers<[1], [0], [0], [1], [0, 0, 1, 1], [], []>} : vector<128x128xbf16>, vector<128x128xbf16>, vector<128x128xf32> -> vector<128x128xf32>
    %c0_3 = arith.constant 0 : index
    %c0_4 = arith.constant 0 : index
    %4 = vector.load %arg2[%c0_3, %c0_4] : memref<128x128xf32, #tpu.memory_space<vmem>>, vector<128x128xf32>
    %5 = arith.addf %3, %4 : vector<128x128xf32>
    %c0_5 = arith.constant 0 : index
    %c0_6 = arith.constant 0 : index
    %6 = vector.load %arg3[%c0_5, %c0_6] : memref<128x128xf32, #tpu.memory_space<vmem>>, vector<128x128xf32>
    %7 = arith.addf %5, %6 : vector<128x128xf32>
    %c0_7 = arith.constant 0 : index
    %c0_8 = arith.constant 0 : index
    %8 = vector.load %arg5[%c0_7, %c0_8] : memref<1x128xf32, #tpu.memory_space<vmem>>, vector<1x128xf32>
    %9 = vector.broadcast %8 : vector<1x128xf32> to vector<128x128xf32>
    %10 = arith.addf %7, %9 : vector<128x128xf32>
    %11 = arith.negf %10 : vector<128x128xf32>
    %12 = math.exp %11 : vector<128x128xf32>
    %cst_9 = arith.constant 1.000000e+00 : f32
    %13 = vector.broadcast %cst_9 : f32 to vector<128x128xf32>
    %14 = arith.addf %13, %12 : vector<128x128xf32>
    %15 = arith.divf %13, %14 : vector<128x128xf32>
    %16 = arith.mulf %10, %15 : vector<128x128xf32>
    %17 = arith.truncf %16 : vector<128x128xf32> to vector<128x128xbf16>
    %c0_10 = arith.constant 0 : index
    %c0_11 = arith.constant 0 : index
    %18 = vector.load %arg6[%c0_10, %c0_11] : memref<128x128xbf16, #tpu.memory_space<vmem>>, vector<128x128xbf16>
    %cst_12 = arith.constant dense<0.000000e+00> : vector<128x128xf32>
    %19 = tpu.matmul %17, %18, %cst_12 {dimension_numbers = #tpu.dot_dimension_numbers<[1], [0], [0], [1], [0, 0, 1, 1], [], []>} : vector<128x128xbf16>, vector<128x128xbf16>, vector<128x128xf32> -> vector<128x128xf32>
    %c0_13 = arith.constant 0 : index
    %c0_14 = arith.constant 0 : index
    %20 = vector.load %arg7[%c0_13, %c0_14] : memref<1x128xf32, #tpu.memory_space<vmem>>, vector<1x128xf32>
    %21 = vector.broadcast %20 : vector<1x128xf32> to vector<128x128xf32>
    %22 = arith.addf %19, %21 : vector<128x128xf32>
    %cst_15 = arith.constant dense<0.000000e+00> : vector<128xf32>
    %23 = vector.multi_reduction <add>, %22, %cst_15 [1] : vector<128x128xf32> to vector<128xf32>
    %24 = vector.shape_cast %23 : vector<128xf32> to vector<128x1xf32>
    %cst_16 = arith.constant 1.280000e+02 : f32
    %25 = vector.broadcast %cst_16 : f32 to vector<128x1xf32>
    %26 = arith.divf %24, %25 : vector<128x1xf32>
    %27 = arith.mulf %22, %22 : vector<128x128xf32>
    %cst_17 = arith.constant dense<0.000000e+00> : vector<128xf32>
    %28 = vector.multi_reduction <add>, %27, %cst_17 [1] : vector<128x128xf32> to vector<128xf32>
    %29 = vector.shape_cast %28 : vector<128xf32> to vector<128x1xf32>
    %cst_18 = arith.constant 1.280000e+02 : f32
    %30 = vector.broadcast %cst_18 : f32 to vector<128x1xf32>
    %31 = arith.divf %29, %30 : vector<128x1xf32>
    %32 = arith.mulf %26, %26 : vector<128x1xf32>
    %33 = arith.subf %31, %32 : vector<128x1xf32>
    %34 = vector.broadcast %26 : vector<128x1xf32> to vector<128x128xf32>
    %35 = arith.subf %22, %34 : vector<128x128xf32>
    %cst_19 = arith.constant 9.99999974E-6 : f32
    %36 = vector.broadcast %cst_19 : f32 to vector<128x1xf32>
    %37 = arith.addf %33, %36 : vector<128x1xf32>
    %38 = math.rsqrt %37 : vector<128x1xf32>
    %39 = vector.broadcast %38 : vector<128x1xf32> to vector<128x128xf32>
    %40 = arith.mulf %35, %39 : vector<128x128xf32>
    %c0_20 = arith.constant 0 : index
    %c0_21 = arith.constant 0 : index
    %41 = vector.load %arg8[%c0_20, %c0_21] : memref<1x128xf32, #tpu.memory_space<vmem>>, vector<1x128xf32>
    %42 = vector.broadcast %41 : vector<1x128xf32> to vector<128x128xf32>
    %43 = arith.mulf %40, %42 : vector<128x128xf32>
    %c0_22 = arith.constant 0 : index
    %c0_23 = arith.constant 0 : index
    %44 = vector.load %arg9[%c0_22, %c0_23] : memref<1x128xf32, #tpu.memory_space<vmem>>, vector<1x128xf32>
    %45 = vector.broadcast %44 : vector<1x128xf32> to vector<128x128xf32>
    %46 = arith.addf %43, %45 : vector<128x128xf32>
    %c0_24 = arith.constant 0 : index
    %c0_25 = arith.constant 0 : index
    %47 = vector.load %arg1[%c0_24, %c0_25] : memref<128x128xf32, #tpu.memory_space<vmem>>, vector<128x128xf32>
    %48 = arith.addf %46, %47 : vector<128x128xf32>
    %c0_26 = arith.constant 0 : index
    %c0_27 = arith.constant 0 : index
    %49 = vector.load %arg10[%c0_26, %c0_27] : memref<128x128xf32, #tpu.memory_space<vmem>>, vector<128x128xf32>
    tpu.vector_store %arg10[%c0_26, %c0_27], %48 {strides = array<i32>} : memref<128x128xf32, #tpu.memory_space<vmem>>, vector<128x128xf32>,
    return
  }
  func.func @transform_0(%arg0: i32) -> (i32, i32) {
    %c0_i32 = arith.constant 0 : i32
    %c0_i32_0 = arith.constant 0 : i32
    return %arg0, %c0_i32 : i32, i32
  }
  func.func @transform_1(%arg0: i32) -> (i32, i32) {
    %c0_i32 = arith.constant 0 : i32
    %c0_i32_0 = arith.constant 0 : i32
    return %arg0, %c0_i32 : i32, i32
  }
  func.func @transform_2(%arg0: i32) -> (i32, i32) {
    %c0_i32 = arith.constant 0 : i32
    %c0_i32_0 = arith.constant 0 : i32
    return %arg0, %c0_i32 : i32, i32
  }
  func.func @transform_3(%arg0: i32) -> (i32, i32) {
    %c0_i32 = arith.constant 0 : i32
    %c0_i32_0 = arith.constant 0 : i32
    %c0_i32_1 = arith.constant 0 : i32
    return %c0_i32, %c0_i32_0 : i32, i32
  }
  func.func @transform_4(%arg0: i32) -> (i32, i32) {
    %c0_i32 = arith.constant 0 : i32
    %c0_i32_0 = arith.constant 0 : i32
    %c0_i32_1 = arith.constant 0 : i32
    return %c0_i32, %c0_i32_0 : i32, i32
  }
  func.func @transform_5(%arg0: i32) -> (i32, i32) {
    %c0_i32 = arith.constant 0 : i32
    %c0_i32_0 = arith.constant 0 : i32
    %c0_i32_1 = arith.constant 0 : i32
    return %c0_i32, %c0_i32_0 : i32, i32
  }
  func.func @transform_6(%arg0: i32) -> (i32, i32) {
    %c0_i32 = arith.constant 0 : i32
    %c0_i32_0 = arith.constant 0 : i32
    %c0_i32_1 = arith.constant 0 : i32
    return %c0_i32, %c0_i32_0 : i32, i32
  }
  func.func @transform_7(%arg0: i32) -> (i32, i32) {
    %c0_i32 = arith.constant 0 : i32
    %c0_i32_0 = arith.constant 0 : i32
    %c0_i32_1 = arith.constant 0 : i32
    return %c0_i32, %c0_i32_0 : i32, i32
  }
  func.func @transform_8(%arg0: i32) -> (i32, i32) {
    %c0_i32 = arith.constant 0 : i32
    %c0_i32_0 = arith.constant 0 : i32
    %c0_i32_1 = arith.constant 0 : i32
    return %c0_i32, %c0_i32_0 : i32, i32
  }
  func.func @transform_9(%arg0: i32) -> (i32, i32) {
    %c0_i32 = arith.constant 0 : i32
    %c0_i32_0 = arith.constant 0 : i32
    return %arg0, %c0_i32 : i32, i32
  }
}

module attributes {stable_mosaic.version = 11 : i64} {
  func.func @_fused_mlp_kernel(%arg0: i32, %arg1: memref<256x128xf32, #tpu.memory_space<vmem>>, %arg2: memref<256x128xf32, #tpu.memory_space<vmem>>, %arg3: memref<128x128xbf16, #tpu.memory_space<vmem>>, %arg4: memref<128x128xbf16, #tpu.memory_space<vmem>>, %arg5: memref<1x128xf32, #tpu.memory_space<vmem>>, %arg6: memref<128x128xbf16, #tpu.memory_space<vmem>>, %arg7: memref<1x128xf32, #tpu.memory_space<vmem>>, %arg8: memref<1x128xf32, #tpu.memory_space<vmem>>, %arg9: memref<1x128xf32, #tpu.memory_space<vmem>>, %arg10: memref<256x128xf32, #tpu.memory_space<vmem>>) attributes {dimension_semantics = [#tpu.dimension_semantics<parallel>], iteration_bounds = array<i64: 1>, scalar_prefetch = 0 : i64, scratch_operands = 0 : i64, tpu.core_type = #tpu.core_type<tc>, window_params = [{transform_indices = @transform_0, window_bounds = array<i64: 256, 128>}, {transform_indices = @transform_1, window_bounds = array<i64: 256, 128>}, {pipeline_mode = #tpu.pipeline_mode<synchronous>, transform_indices = @transform_2, window_bounds = array<i64: 128, 128>}, {pipeline_mode = #tpu.pipeline_mode<synchronous>, transform_indices = @transform_3, window_bounds = array<i64: 128, 128>}, {pipeline_mode = #tpu.pipeline_mode<synchronous>, transform_indices = @transform_4, window_bounds = array<i64: 1, 128>}, {pipeline_mode = #tpu.pipeline_mode<synchronous>, transform_indices = @transform_5, window_bounds = array<i64: 128, 128>}, {pipeline_mode = #tpu.pipeline_mode<synchronous>, transform_indices = @transform_6, window_bounds = array<i64: 1, 128>}, {pipeline_mode = #tpu.pipeline_mode<synchronous>, transform_indices = @transform_7, window_bounds = array<i64: 1, 128>}, {pipeline_mode = #tpu.pipeline_mode<synchronous>, transform_indices = @transform_8, window_bounds = array<i64: 1, 128>}, {transform_indices = @transform_9, window_bounds = array<i64: 256, 128>}]} {
    %c0 = arith.constant 0 : index
    %c0_0 = arith.constant 0 : index
    %0 = vector.load %arg1[%c0, %c0_0] : memref<256x128xf32, #tpu.memory_space<vmem>>, vector<256x128xf32>
    %1 = arith.truncf %0 : vector<256x128xf32> to vector<256x128xbf16>
    %c0_1 = arith.constant 0 : index
    %c0_2 = arith.constant 0 : index
    %2 = vector.load %arg3[%c0_1, %c0_2] : memref<128x128xbf16, #tpu.memory_space<vmem>>, vector<128x128xbf16>
    %cst = arith.constant dense<0.000000e+00> : vector<256x128xf32>
    %3 = tpu.matmul %1, %2, %cst {dimension_numbers = #tpu.dot_dimension_numbers<[1], [0], [0], [1], [0, 0, 1, 1], [], []>} : vector<256x128xbf16>, vector<128x128xbf16>, vector<256x128xf32> -> vector<256x128xf32>
    %c0_3 = arith.constant 0 : index
    %c0_4 = arith.constant 0 : index
    %4 = vector.load %arg2[%c0_3, %c0_4] : memref<256x128xf32, #tpu.memory_space<vmem>>, vector<256x128xf32>
    %5 = arith.truncf %4 : vector<256x128xf32> to vector<256x128xbf16>
    %c0_5 = arith.constant 0 : index
    %c0_6 = arith.constant 0 : index
    %6 = vector.load %arg4[%c0_5, %c0_6] : memref<128x128xbf16, #tpu.memory_space<vmem>>, vector<128x128xbf16>
    %cst_7 = arith.constant dense<0.000000e+00> : vector<256x128xf32>
    %7 = tpu.matmul %5, %6, %cst_7 {dimension_numbers = #tpu.dot_dimension_numbers<[1], [0], [0], [1], [0, 0, 1, 1], [], []>} : vector<256x128xbf16>, vector<128x128xbf16>, vector<256x128xf32> -> vector<256x128xf32>
    %8 = arith.addf %3, %7 : vector<256x128xf32>
    %c0_8 = arith.constant 0 : index
    %c0_9 = arith.constant 0 : index
    %9 = vector.load %arg5[%c0_8, %c0_9] : memref<1x128xf32, #tpu.memory_space<vmem>>, vector<1x128xf32>
    %10 = vector.broadcast %9 : vector<1x128xf32> to vector<256x128xf32>
    %11 = arith.addf %8, %10 : vector<256x128xf32>
    %12 = arith.negf %11 : vector<256x128xf32>
    %13 = math.exp %12 : vector<256x128xf32>
    %cst_10 = arith.constant 1.000000e+00 : f32
    %14 = vector.broadcast %cst_10 : f32 to vector<256x128xf32>
    %15 = arith.addf %14, %13 : vector<256x128xf32>
    %16 = arith.divf %14, %15 : vector<256x128xf32>
    %17 = arith.mulf %11, %16 : vector<256x128xf32>
    %18 = arith.truncf %17 : vector<256x128xf32> to vector<256x128xbf16>
    %c0_11 = arith.constant 0 : index
    %c0_12 = arith.constant 0 : index
    %19 = vector.load %arg6[%c0_11, %c0_12] : memref<128x128xbf16, #tpu.memory_space<vmem>>, vector<128x128xbf16>
    %cst_13 = arith.constant dense<0.000000e+00> : vector<256x128xf32>
    %20 = tpu.matmul %18, %19, %cst_13 {dimension_numbers = #tpu.dot_dimension_numbers<[1], [0], [0], [1], [0, 0, 1, 1], [], []>} : vector<256x128xbf16>, vector<128x128xbf16>, vector<256x128xf32> -> vector<256x128xf32>
    %c0_14 = arith.constant 0 : index
    %c0_15 = arith.constant 0 : index
    %21 = vector.load %arg7[%c0_14, %c0_15] : memref<1x128xf32, #tpu.memory_space<vmem>>, vector<1x128xf32>
    %22 = vector.broadcast %21 : vector<1x128xf32> to vector<256x128xf32>
    %23 = arith.addf %20, %22 : vector<256x128xf32>
    %cst_16 = arith.constant dense<0.000000e+00> : vector<256xf32>
    %24 = vector.multi_reduction <add>, %23, %cst_16 [1] : vector<256x128xf32> to vector<256xf32>
    %25 = vector.shape_cast %24 : vector<256xf32> to vector<256x1xf32>
    %cst_17 = arith.constant 1.280000e+02 : f32
    %26 = vector.broadcast %cst_17 : f32 to vector<256x1xf32>
    %27 = arith.divf %25, %26 : vector<256x1xf32>
    %28 = arith.mulf %23, %23 : vector<256x128xf32>
    %cst_18 = arith.constant dense<0.000000e+00> : vector<256xf32>
    %29 = vector.multi_reduction <add>, %28, %cst_18 [1] : vector<256x128xf32> to vector<256xf32>
    %30 = vector.shape_cast %29 : vector<256xf32> to vector<256x1xf32>
    %cst_19 = arith.constant 1.280000e+02 : f32
    %31 = vector.broadcast %cst_19 : f32 to vector<256x1xf32>
    %32 = arith.divf %30, %31 : vector<256x1xf32>
    %33 = arith.mulf %27, %27 : vector<256x1xf32>
    %34 = arith.subf %32, %33 : vector<256x1xf32>
    %35 = vector.broadcast %27 : vector<256x1xf32> to vector<256x128xf32>
    %36 = arith.subf %23, %35 : vector<256x128xf32>
    %cst_20 = arith.constant 9.99999974E-6 : f32
    %37 = vector.broadcast %cst_20 : f32 to vector<256x1xf32>
    %38 = arith.addf %34, %37 : vector<256x1xf32>
    %39 = math.rsqrt %38 : vector<256x1xf32>
    %40 = vector.broadcast %39 : vector<256x1xf32> to vector<256x128xf32>
    %41 = arith.mulf %36, %40 : vector<256x128xf32>
    %c0_21 = arith.constant 0 : index
    %c0_22 = arith.constant 0 : index
    %42 = vector.load %arg8[%c0_21, %c0_22] : memref<1x128xf32, #tpu.memory_space<vmem>>, vector<1x128xf32>
    %43 = vector.broadcast %42 : vector<1x128xf32> to vector<256x128xf32>
    %44 = arith.mulf %41, %43 : vector<256x128xf32>
    %c0_23 = arith.constant 0 : index
    %c0_24 = arith.constant 0 : index
    %45 = vector.load %arg9[%c0_23, %c0_24] : memref<1x128xf32, #tpu.memory_space<vmem>>, vector<1x128xf32>
    %46 = vector.broadcast %45 : vector<1x128xf32> to vector<256x128xf32>
    %47 = arith.addf %44, %46 : vector<256x128xf32>
    %c0_25 = arith.constant 0 : index
    %c0_26 = arith.constant 0 : index
    %48 = vector.load %arg1[%c0_25, %c0_26] : memref<256x128xf32, #tpu.memory_space<vmem>>, vector<256x128xf32>
    %49 = arith.addf %47, %48 : vector<256x128xf32>
    %c0_27 = arith.constant 0 : index
    %c0_28 = arith.constant 0 : index
    %50 = vector.load %arg10[%c0_27, %c0_28] : memref<256x128xf32, #tpu.memory_space<vmem>>, vector<256x128xf32>
    tpu.vector_store %arg10[%c0_27, %c0_28], %49 {strides = array<i32>} : memref<256x128xf32, #tpu.memory_space<vmem>>, vector<256x128xf32>,
    return
  }
  func.func @transform_0(%arg0: i32) -> (i32, i32) {
    %c0_i32 = arith.constant 0 : i32
    %c0_i32_0 = arith.constant 0 : i32
    return %arg0, %c0_i32 : i32, i32
  }
  func.func @transform_1(%arg0: i32) -> (i32, i32) {
    %c0_i32 = arith.constant 0 : i32
    %c0_i32_0 = arith.constant 0 : i32
    return %arg0, %c0_i32 : i32, i32
  }
  func.func @transform_2(%arg0: i32) -> (i32, i32) {
    %c0_i32 = arith.constant 0 : i32
    %c0_i32_0 = arith.constant 0 : i32
    %c0_i32_1 = arith.constant 0 : i32
    return %c0_i32, %c0_i32_0 : i32, i32
  }
  func.func @transform_3(%arg0: i32) -> (i32, i32) {
    %c0_i32 = arith.constant 0 : i32
    %c0_i32_0 = arith.constant 0 : i32
    %c0_i32_1 = arith.constant 0 : i32
    return %c0_i32, %c0_i32_0 : i32, i32
  }
  func.func @transform_4(%arg0: i32) -> (i32, i32) {
    %c0_i32 = arith.constant 0 : i32
    %c0_i32_0 = arith.constant 0 : i32
    %c0_i32_1 = arith.constant 0 : i32
    return %c0_i32, %c0_i32_0 : i32, i32
  }
  func.func @transform_5(%arg0: i32) -> (i32, i32) {
    %c0_i32 = arith.constant 0 : i32
    %c0_i32_0 = arith.constant 0 : i32
    %c0_i32_1 = arith.constant 0 : i32
    return %c0_i32, %c0_i32_0 : i32, i32
  }
  func.func @transform_6(%arg0: i32) -> (i32, i32) {
    %c0_i32 = arith.constant 0 : i32
    %c0_i32_0 = arith.constant 0 : i32
    %c0_i32_1 = arith.constant 0 : i32
    return %c0_i32, %c0_i32_0 : i32, i32
  }
  func.func @transform_7(%arg0: i32) -> (i32, i32) {
    %c0_i32 = arith.constant 0 : i32
    %c0_i32_0 = arith.constant 0 : i32
    %c0_i32_1 = arith.constant 0 : i32
    return %c0_i32, %c0_i32_0 : i32, i32
  }
  func.func @transform_8(%arg0: i32) -> (i32, i32) {
    %c0_i32 = arith.constant 0 : i32
    %c0_i32_0 = arith.constant 0 : i32
    %c0_i32_1 = arith.constant 0 : i32
    return %c0_i32, %c0_i32_0 : i32, i32
  }
  func.func @transform_9(%arg0: i32) -> (i32, i32) {
    %c0_i32 = arith.constant 0 : i32
    %c0_i32_0 = arith.constant 0 : i32
    return %arg0, %c0_i32 : i32, i32
  }
}

module attributes {stable_mosaic.version = 11 : i64} {
  func.func @_linear_kernel(%arg0: i32, %arg1: memref<256x128xf32, #tpu.memory_space<vmem>>, %arg2: memref<128x256xbf16, #tpu.memory_space<vmem>>, %arg3: memref<256x256xf32, #tpu.memory_space<vmem>>) attributes {dimension_semantics = [#tpu.dimension_semantics<parallel>], iteration_bounds = array<i64: 1>, scalar_prefetch = 0 : i64, scratch_operands = 0 : i64, tpu.core_type = #tpu.core_type<tc>, window_params = [{transform_indices = @transform_0, window_bounds = array<i64: 256, 128>}, {pipeline_mode = #tpu.pipeline_mode<synchronous>, transform_indices = @transform_1, window_bounds = array<i64: 128, 256>}, {transform_indices = @transform_2, window_bounds = array<i64: 256, 256>}]} {
    %c0 = arith.constant 0 : index
    %c0_0 = arith.constant 0 : index
    %0 = vector.load %arg1[%c0, %c0_0] : memref<256x128xf32, #tpu.memory_space<vmem>>, vector<256x128xf32>
    %1 = arith.truncf %0 : vector<256x128xf32> to vector<256x128xbf16>
    %c0_1 = arith.constant 0 : index
    %c0_2 = arith.constant 0 : index
    %2 = vector.load %arg2[%c0_1, %c0_2] : memref<128x256xbf16, #tpu.memory_space<vmem>>, vector<128x256xbf16>
    %cst = arith.constant dense<0.000000e+00> : vector<256x256xf32>
    %3 = tpu.matmul %1, %2, %cst {dimension_numbers = #tpu.dot_dimension_numbers<[1], [0], [0], [1], [0, 0, 1, 1], [], []>} : vector<256x128xbf16>, vector<128x256xbf16>, vector<256x256xf32> -> vector<256x256xf32>
    %c0_3 = arith.constant 0 : index
    %c0_4 = arith.constant 0 : index
    %4 = vector.load %arg3[%c0_3, %c0_4] : memref<256x256xf32, #tpu.memory_space<vmem>>, vector<256x256xf32>
    tpu.vector_store %arg3[%c0_3, %c0_4], %3 {strides = array<i32>} : memref<256x256xf32, #tpu.memory_space<vmem>>, vector<256x256xf32>,
    return
  }
  func.func @transform_0(%arg0: i32) -> (i32, i32) {
    %c0_i32 = arith.constant 0 : i32
    %c0_i32_0 = arith.constant 0 : i32
    return %arg0, %c0_i32 : i32, i32
  }
  func.func @transform_1(%arg0: i32) -> (i32, i32) {
    %c0_i32 = arith.constant 0 : i32
    %c0_i32_0 = arith.constant 0 : i32
    %c0_i32_1 = arith.constant 0 : i32
    return %c0_i32, %c0_i32_0 : i32, i32
  }
  func.func @transform_2(%arg0: i32) -> (i32, i32) {
    %c0_i32 = arith.constant 0 : i32
    %c0_i32_0 = arith.constant 0 : i32
    return %arg0, %c0_i32 : i32, i32
  }
}

module attributes {stable_mosaic.version = 11 : i64} {
  func.func @_fused_mlp_kernel(%arg0: i32, %arg1: memref<256x128xf32, #tpu.memory_space<vmem>>, %arg2: memref<256x128xf32, #tpu.memory_space<vmem>>, %arg3: memref<128x128xbf16, #tpu.memory_space<vmem>>, %arg4: memref<128x128xbf16, #tpu.memory_space<vmem>>, %arg5: memref<1x128xf32, #tpu.memory_space<vmem>>, %arg6: memref<128x128xbf16, #tpu.memory_space<vmem>>, %arg7: memref<1x128xf32, #tpu.memory_space<vmem>>, %arg8: memref<1x128xf32, #tpu.memory_space<vmem>>, %arg9: memref<1x128xf32, #tpu.memory_space<vmem>>, %arg10: memref<256x128xf32, #tpu.memory_space<vmem>>) attributes {dimension_semantics = [#tpu.dimension_semantics<parallel>], iteration_bounds = array<i64: 1>, scalar_prefetch = 0 : i64, scratch_operands = 0 : i64, tpu.core_type = #tpu.core_type<tc>, window_params = [{transform_indices = @transform_0, window_bounds = array<i64: 256, 128>}, {transform_indices = @transform_1, window_bounds = array<i64: 256, 128>}, {pipeline_mode = #tpu.pipeline_mode<synchronous>, transform_indices = @transform_2, window_bounds = array<i64: 128, 128>}, {pipeline_mode = #tpu.pipeline_mode<synchronous>, transform_indices = @transform_3, window_bounds = array<i64: 128, 128>}, {pipeline_mode = #tpu.pipeline_mode<synchronous>, transform_indices = @transform_4, window_bounds = array<i64: 1, 128>}, {pipeline_mode = #tpu.pipeline_mode<synchronous>, transform_indices = @transform_5, window_bounds = array<i64: 128, 128>}, {pipeline_mode = #tpu.pipeline_mode<synchronous>, transform_indices = @transform_6, window_bounds = array<i64: 1, 128>}, {pipeline_mode = #tpu.pipeline_mode<synchronous>, transform_indices = @transform_7, window_bounds = array<i64: 1, 128>}, {pipeline_mode = #tpu.pipeline_mode<synchronous>, transform_indices = @transform_8, window_bounds = array<i64: 1, 128>}, {transform_indices = @transform_9, window_bounds = array<i64: 256, 128>}]} {
    %c0 = arith.constant 0 : index
    %c0_0 = arith.constant 0 : index
    %0 = vector.load %arg1[%c0, %c0_0] : memref<256x128xf32, #tpu.memory_space<vmem>>, vector<256x128xf32>
    %1 = arith.truncf %0 : vector<256x128xf32> to vector<256x128xbf16>
    %c0_1 = arith.constant 0 : index
    %c0_2 = arith.constant 0 : index
    %2 = vector.load %arg3[%c0_1, %c0_2] : memref<128x128xbf16, #tpu.memory_space<vmem>>, vector<128x128xbf16>
    %cst = arith.constant dense<0.000000e+00> : vector<256x128xf32>
    %3 = tpu.matmul %1, %2, %cst {dimension_numbers = #tpu.dot_dimension_numbers<[1], [0], [0], [1], [0, 0, 1, 1], [], []>} : vector<256x128xbf16>, vector<128x128xbf16>, vector<256x128xf32> -> vector<256x128xf32>
    %c0_3 = arith.constant 0 : index
    %c0_4 = arith.constant 0 : index
    %4 = vector.load %arg2[%c0_3, %c0_4] : memref<256x128xf32, #tpu.memory_space<vmem>>, vector<256x128xf32>
    %5 = arith.truncf %4 : vector<256x128xf32> to vector<256x128xbf16>
    %c0_5 = arith.constant 0 : index
    %c0_6 = arith.constant 0 : index
    %6 = vector.load %arg4[%c0_5, %c0_6] : memref<128x128xbf16, #tpu.memory_space<vmem>>, vector<128x128xbf16>
    %cst_7 = arith.constant dense<0.000000e+00> : vector<256x128xf32>
    %7 = tpu.matmul %5, %6, %cst_7 {dimension_numbers = #tpu.dot_dimension_numbers<[1], [0], [0], [1], [0, 0, 1, 1], [], []>} : vector<256x128xbf16>, vector<128x128xbf16>, vector<256x128xf32> -> vector<256x128xf32>
    %8 = arith.addf %3, %7 : vector<256x128xf32>
    %c0_8 = arith.constant 0 : index
    %c0_9 = arith.constant 0 : index
    %9 = vector.load %arg5[%c0_8, %c0_9] : memref<1x128xf32, #tpu.memory_space<vmem>>, vector<1x128xf32>
    %10 = vector.broadcast %9 : vector<1x128xf32> to vector<256x128xf32>
    %11 = arith.addf %8, %10 : vector<256x128xf32>
    %12 = arith.negf %11 : vector<256x128xf32>
    %13 = math.exp %12 : vector<256x128xf32>
    %cst_10 = arith.constant 1.000000e+00 : f32
    %14 = vector.broadcast %cst_10 : f32 to vector<256x128xf32>
    %15 = arith.addf %14, %13 : vector<256x128xf32>
    %16 = arith.divf %14, %15 : vector<256x128xf32>
    %17 = arith.mulf %11, %16 : vector<256x128xf32>
    %18 = arith.truncf %17 : vector<256x128xf32> to vector<256x128xbf16>
    %c0_11 = arith.constant 0 : index
    %c0_12 = arith.constant 0 : index
    %19 = vector.load %arg6[%c0_11, %c0_12] : memref<128x128xbf16, #tpu.memory_space<vmem>>, vector<128x128xbf16>
    %cst_13 = arith.constant dense<0.000000e+00> : vector<256x128xf32>
    %20 = tpu.matmul %18, %19, %cst_13 {dimension_numbers = #tpu.dot_dimension_numbers<[1], [0], [0], [1], [0, 0, 1, 1], [], []>} : vector<256x128xbf16>, vector<128x128xbf16>, vector<256x128xf32> -> vector<256x128xf32>
    %c0_14 = arith.constant 0 : index
    %c0_15 = arith.constant 0 : index
    %21 = vector.load %arg7[%c0_14, %c0_15] : memref<1x128xf32, #tpu.memory_space<vmem>>, vector<1x128xf32>
    %22 = vector.broadcast %21 : vector<1x128xf32> to vector<256x128xf32>
    %23 = arith.addf %20, %22 : vector<256x128xf32>
    %cst_16 = arith.constant dense<0.000000e+00> : vector<256xf32>
    %24 = vector.multi_reduction <add>, %23, %cst_16 [1] : vector<256x128xf32> to vector<256xf32>
    %25 = vector.shape_cast %24 : vector<256xf32> to vector<256x1xf32>
    %cst_17 = arith.constant 1.280000e+02 : f32
    %26 = vector.broadcast %cst_17 : f32 to vector<256x1xf32>
    %27 = arith.divf %25, %26 : vector<256x1xf32>
    %28 = arith.mulf %23, %23 : vector<256x128xf32>
    %cst_18 = arith.constant dense<0.000000e+00> : vector<256xf32>
    %29 = vector.multi_reduction <add>, %28, %cst_18 [1] : vector<256x128xf32> to vector<256xf32>
    %30 = vector.shape_cast %29 : vector<256xf32> to vector<256x1xf32>
    %cst_19 = arith.constant 1.280000e+02 : f32
    %31 = vector.broadcast %cst_19 : f32 to vector<256x1xf32>
    %32 = arith.divf %30, %31 : vector<256x1xf32>
    %33 = arith.mulf %27, %27 : vector<256x1xf32>
    %34 = arith.subf %32, %33 : vector<256x1xf32>
    %35 = vector.broadcast %27 : vector<256x1xf32> to vector<256x128xf32>
    %36 = arith.subf %23, %35 : vector<256x128xf32>
    %cst_20 = arith.constant 9.99999974E-6 : f32
    %37 = vector.broadcast %cst_20 : f32 to vector<256x1xf32>
    %38 = arith.addf %34, %37 : vector<256x1xf32>
    %39 = math.rsqrt %38 : vector<256x1xf32>
    %40 = vector.broadcast %39 : vector<256x1xf32> to vector<256x128xf32>
    %41 = arith.mulf %36, %40 : vector<256x128xf32>
    %c0_21 = arith.constant 0 : index
    %c0_22 = arith.constant 0 : index
    %42 = vector.load %arg8[%c0_21, %c0_22] : memref<1x128xf32, #tpu.memory_space<vmem>>, vector<1x128xf32>
    %43 = vector.broadcast %42 : vector<1x128xf32> to vector<256x128xf32>
    %44 = arith.mulf %41, %43 : vector<256x128xf32>
    %c0_23 = arith.constant 0 : index
    %c0_24 = arith.constant 0 : index
    %45 = vector.load %arg9[%c0_23, %c0_24] : memref<1x128xf32, #tpu.memory_space<vmem>>, vector<1x128xf32>
    %46 = vector.broadcast %45 : vector<1x128xf32> to vector<256x128xf32>
    %47 = arith.addf %44, %46 : vector<256x128xf32>
    %c0_25 = arith.constant 0 : index
    %c0_26 = arith.constant 0 : index
    %48 = vector.load %arg1[%c0_25, %c0_26] : memref<256x128xf32, #tpu.memory_space<vmem>>, vector<256x128xf32>
    %49 = arith.addf %47, %48 : vector<256x128xf32>
    %c0_27 = arith.constant 0 : index
    %c0_28 = arith.constant 0 : index
    %50 = vector.load %arg10[%c0_27, %c0_28] : memref<256x128xf32, #tpu.memory_space<vmem>>, vector<256x128xf32>
    tpu.vector_store %arg10[%c0_27, %c0_28], %49 {strides = array<i32>} : memref<256x128xf32, #tpu.memory_space<vmem>>, vector<256x128xf32>,
    return
  }
  func.func @transform_0(%arg0: i32) -> (i32, i32) {
    %c0_i32 = arith.constant 0 : i32
    %c0_i32_0 = arith.constant 0 : i32
    return %arg0, %c0_i32 : i32, i32
  }
  func.func @transform_1(%arg0: i32) -> (i32, i32) {
    %c0_i32 = arith.constant 0 : i32
    %c0_i32_0 = arith.constant 0 : i32
    return %arg0, %c0_i32 : i32, i32
  }
  func.func @transform_2(%arg0: i32) -> (i32, i32) {
    %c0_i32 = arith.constant 0 : i32
    %c0_i32_0 = arith.constant 0 : i32
    %c0_i32_1 = arith.constant 0 : i32
    return %c0_i32, %c0_i32_0 : i32, i32
  }
  func.func @transform_3(%arg0: i32) -> (i32, i32) {
    %c0_i32 = arith.constant 0 : i32
    %c0_i32_0 = arith.constant 0 : i32
    %c0_i32_1 = arith.constant 0 : i32
    return %c0_i32, %c0_i32_0 : i32, i32
  }
  func.func @transform_4(%arg0: i32) -> (i32, i32) {
    %c0_i32 = arith.constant 0 : i32
    %c0_i32_0 = arith.constant 0 : i32
    %c0_i32_1 = arith.constant 0 : i32
    return %c0_i32, %c0_i32_0 : i32, i32
  }
  func.func @transform_5(%arg0: i32) -> (i32, i32) {
    %c0_i32 = arith.constant 0 : i32
    %c0_i32_0 = arith.constant 0 : i32
    %c0_i32_1 = arith.constant 0 : i32
    return %c0_i32, %c0_i32_0 : i32, i32
  }
  func.func @transform_6(%arg0: i32) -> (i32, i32) {
    %c0_i32 = arith.constant 0 : i32
    %c0_i32_0 = arith.constant 0 : i32
    %c0_i32_1 = arith.constant 0 : i32
    return %c0_i32, %c0_i32_0 : i32, i32
  }
  func.func @transform_7(%arg0: i32) -> (i32, i32) {
    %c0_i32 = arith.constant 0 : i32
    %c0_i32_0 = arith.constant 0 : i32
    %c0_i32_1 = arith.constant 0 : i32
    return %c0_i32, %c0_i32_0 : i32, i32
  }
  func.func @transform_8(%arg0: i32) -> (i32, i32) {
    %c0_i32 = arith.constant 0 : i32
    %c0_i32_0 = arith.constant 0 : i32
    %c0_i32_1 = arith.constant 0 : i32
    return %c0_i32, %c0_i32_0 : i32, i32
  }
  func.func @transform_9(%arg0: i32) -> (i32, i32) {
    %c0_i32 = arith.constant 0 : i32
    %c0_i32_0 = arith.constant 0 : i32
    return %arg0, %c0_i32 : i32, i32
  }
}

</mosaic_0001>

<llo_original>
// kernel: graphcast_processor_forward.6
$region0: #{graphcast_processor_forward.6}
  #allocation0 [shape = 'u32[]', space=smem, size = 0x4, offset = 0x4, fixed_abs, tag = 'smem constant byte address 0x4 - core index']
  #allocation1 [shape = 'u32[144,128]{1,0:T(1,128)}', space=vmem, size = 0x12000, scoped, tag = 'internal scratch']
  %s0 = inlined_call_operand.hbm [shape: f32[256,128], index: 0, kind: input, shape index: {}]
  %s1 = inlined_call_operand.hbm [shape: bf16[128,256], index: 1, kind: input, shape index: {}]
  %s2 = inlined_call_operand.vmem [shape: f32[256,256], index: 2, kind: output, shape index: {}]
  %s3 = sld [smem:[#allocation0]]
  $region26: #{graphcast_processor_forward.6} parent=0
    _
  %s5 = ssub.s32 1, %s3
  %s6 = scalar_select 0, %s5, %s3
  $region1: #{graphcast_processor_forward.6} parent=0
    #allocation2 [shape = 'u8[131072]{0}', space=vmem, size = 0x20000, scoped, tag = 'input window, operand 0, single buffered']
    #allocation3 [shape = 's32[1]{0}', space=sflag, size = 0x4, scoped, tag = 'scoped memory for graphcast_processor_forward.6']
    #allocation4 [shape = 'u8[65536]{0}', space=vmem, size = 0x10000, scoped, tag = 'input window, operand 1, single buffered']
    #allocation5 [shape = 's32[1]{0}', space=sflag, size = 0x4, scoped, tag = 'scoped memory for graphcast_processor_forward.6']
    %7 = vsyncpa [#allocation3], 0
    %8 = vsyncpa [#allocation5], 0
    // Predicated region
    $region2: #{graphcast_processor_forward.6} parent=1 // pred_check
      _
    $region3: #{graphcast_processor_forward.6} parent=1 // pred_check_branch
      %10 = sbr.rel (0) target = $region5
    $region4: #{graphcast_processor_forward.6} parent=1 // pred_region
      %s12 = ssub.s32 4096, 4096
      %13 = vsyncadd [#allocation3], %s12
      %s14 = sshll.u32 [#allocation2], 4
      %s15 = int_to_ptr.vmem [resolvable:$true] %s14
      %20 = dma.hbm_to_vmem [thread:$0]  %s0, 4096, %s15, [#allocation3], 128, 128, 8
    $region5: #{graphcast_processor_forward.6} parent=1 // pred_fallthru
      _
    // Predicated region
    $region6: #{graphcast_processor_forward.6} parent=1 // pred_check
      _
    $region7: #{graphcast_processor_forward.6} parent=1 // pred_check_branch
      %22 = sbr.rel (0) target = $region9
    $region8: #{graphcast_processor_forward.6} parent=1 // pred_region
      %s24 = ssub.s32 2048, 2048
      %25 = vsyncadd [#allocation5], %s24
      %s26 = sshll.u32 [#allocation4], 4
      %s27 = int_to_ptr.vmem [resolvable:$true] %s26
      %32 = dma.hbm_to_vmem [thread:$0]  %s1, 2048, %s27, [#allocation5], 128, 128, 8
    $region9: #{graphcast_processor_forward.6} parent=1 // pred_fallthru
      _
    // Predicated region
    $region10: #{graphcast_processor_forward.6} parent=1 // pred_check
      _
    $region11: #{graphcast_processor_forward.6} parent=1 // pred_check_branch
      %34 = sbr.rel (0) target = $region13
    $region12: #{graphcast_processor_forward.6} parent=1 // pred_region
      %35 = dma.done [#allocation3], 4096
    $region13: #{graphcast_processor_forward.6} parent=1 // pred_fallthru
      _
    // Predicated region
    $region14: #{graphcast_processor_forward.6} parent=1 // pred_check
      _
    $region15: #{graphcast_processor_forward.6} parent=1 // pred_check_branch
      %37 = sbr.rel (0) target = $region17
    $region16: #{graphcast_processor_forward.6} parent=1 // pred_region
      %38 = dma.done [#allocation5], 2048
    $region17: #{graphcast_processor_forward.6} parent=1 // pred_fallthru
      _
    %v40 = vld [vmem:[#allocation2] sm:$0xff]
    %v41 = vld [vmem:[#allocation2 + $0x8] sm:$0xff]
    %v42 = vld [vmem:[#allocation2 + $0x10] sm:$0xff]
    %v43 = vld [vmem:[#allocation2 + $0x18] sm:$0xff]
    %v44 = vld [vmem:[#allocation2 + $0x20] sm:$0xff]
    %v45 = vld [vmem:[#allocation2 + $0x28] sm:$0xff]
    %v46 = vld [vmem:[#allocation2 + $0x30] sm:$0xff]
    %v47 = vld [vmem:[#allocation2 + $0x38] sm:$0xff]
    %v48 = vld [vmem:[#allocation2 + $0x40] sm:$0xff]
    %v49 = vld [vmem:[#allocation2 + $0x48] sm:$0xff]
    %v50 = vld [vmem:[#allocation2 + $0x50] sm:$0xff]
    %v51 = vld [vmem:[#allocation2 + $0x58] sm:$0xff]
    %v52 = vld [vmem:[#allocation2 + $0x60] sm:$0xff]
    %v53 = vld [vmem:[#allocation2 + $0x68] sm:$0xff]
    %v54 = vld [vmem:[#allocation2 + $0x70] sm:$0xff]
    %v55 = vld [vmem:[#allocation2 + $0x78] sm:$0xff]
    %v56 = vld [vmem:[#allocation2 + $0x80] sm:$0xff]
    %v57 = vld [vmem:[#allocation2 + $0x88] sm:$0xff]
    %v58 = vld [vmem:[#allocation2 + $0x90] sm:$0xff]
    %v59 = vld [vmem:[#allocation2 + $0x98] sm:$0xff]
    %v60 = vld [vmem:[#allocation2 + $0xa0] sm:$0xff]
    %v61 = vld [vmem:[#allocation2 + $0xa8] sm:$0xff]
    %v62 = vld [vmem:[#allocation2 + $0xb0] sm:$0xff]
    %v63 = vld [vmem:[#allocation2 + $0xb8] sm:$0xff]
    %v64 = vld [vmem:[#allocation2 + $0xc0] sm:$0xff]
    %v65 = vld [vmem:[#allocation2 + $0xc8] sm:$0xff]
    %v66 = vld [vmem:[#allocation2 + $0xd0] sm:$0xff]
    %v67 = vld [vmem:[#allocation2 + $0xd8] sm:$0xff]
    %v68 = vld [vmem:[#allocation2 + $0xe0] sm:$0xff]
    %v69 = vld [vmem:[#allocation2 + $0xe8] sm:$0xff]
    %v70 = vld [vmem:[#allocation2 + $0xf0] sm:$0xff]
    %v71 = vld [vmem:[#allocation2 + $0xf8] sm:$0xff]
    %v72 = vpack.c.bf16 %v41, %v40
    %v73 = vpack.c.bf16 %v43, %v42
    %v74 = vpack.c.bf16 %v45, %v44
    %v75 = vpack.c.bf16 %v47, %v46
    %v76 = vpack.c.bf16 %v49, %v48
    %v77 = vpack.c.bf16 %v51, %v50
    %v78 = vpack.c.bf16 %v53, %v52
    %v79 = vpack.c.bf16 %v55, %v54
    %v80 = vpack.c.bf16 %v57, %v56
    %v81 = vpack.c.bf16 %v59, %v58
    %v82 = vpack.c.bf16 %v61, %v60
    %v83 = vpack.c.bf16 %v63, %v62
    %v84 = vpack.c.bf16 %v65, %v64
    %v85 = vpack.c.bf16 %v67, %v66
    %v86 = vpack.c.bf16 %v69, %v68
    %v87 = vpack.c.bf16 %v71, %v70
    %v88 = vld [vmem:[#allocation4] sm:$0xff]
    %v89 = vld [vmem:[#allocation4 + $0x8] sm:$0xff]
    %v90 = vld [vmem:[#allocation4 + $0x10] sm:$0xff]
    %v91 = vld [vmem:[#allocation4 + $0x18] sm:$0xff]
    %v92 = vld [vmem:[#allocation4 + $0x20] sm:$0xff]
    %v93 = vld [vmem:[#allocation4 + $0x28] sm:$0xff]
    %v94 = vld [vmem:[#allocation4 + $0x30] sm:$0xff]
    %v95 = vld [vmem:[#allocation4 + $0x38] sm:$0xff]
    %v96 = vld [vmem:[#allocation4 + $0x40] sm:$0xff]
    %v97 = vld [vmem:[#allocation4 + $0x48] sm:$0xff]
    %v98 = vld [vmem:[#allocation4 + $0x50] sm:$0xff]
    %v99 = vld [vmem:[#allocation4 + $0x58] sm:$0xff]
    %v100 = vld [vmem:[#allocation4 + $0x60] sm:$0xff]
    %v101 = vld [vmem:[#allocation4 + $0x68] sm:$0xff]
    %v102 = vld [vmem:[#allocation4 + $0x70] sm:$0xff]
    %v103 = vld [vmem:[#allocation4 + $0x78] sm:$0xff]
    %v120 = vunpack.c.l.b16 %v88
    %v121 = vunpack.c.h.b16 %v88
    %v122 = vunpack.c.l.b16 %v89
    %v123 = vunpack.c.h.b16 %v89
    %v124 = vunpack.c.l.b16 %v90
    %v125 = vunpack.c.h.b16 %v90
    %v126 = vunpack.c.l.b16 %v91
    %v127 = vunpack.c.h.b16 %v91
    %v128 = vunpack.c.l.b16 %v92
    %v129 = vunpack.c.h.b16 %v92
    %v130 = vunpack.c.l.b16 %v93
    %v131 = vunpack.c.h.b16 %v93
    %v132 = vunpack.c.l.b16 %v94
    %v133 = vunpack.c.h.b16 %v94
    %v134 = vunpack.c.l.b16 %v95
    %v135 = vunpack.c.h.b16 %v95
    %v136 = vunpack.c.l.b16 %v96
    %v137 = vunpack.c.h.b16 %v96
    %v138 = vunpack.c.l.b16 %v97
    %v139 = vunpack.c.h.b16 %v97
    %v140 = vunpack.c.l.b16 %v98
    %v141 = vunpack.c.h.b16 %v98
    %v142 = vunpack.c.l.b16 %v99
    %v143 = vunpack.c.h.b16 %v99
    %v144 = vunpack.c.l.b16 %v100
    %v145 = vunpack.c.h.b16 %v100
    %v146 = vunpack.c.l.b16 %v101
    %v147 = vunpack.c.h.b16 %v101
    %v148 = vunpack.c.l.b16 %v102
    %v149 = vunpack.c.h.b16 %v102
    %v150 = vunpack.c.l.b16 %v103
    %v151 = vunpack.c.h.b16 %v103
    %v152 = vpack.c.b16 %v122, %v120
    %v153 = vpack.c.b16 %v123, %v121
    %v154 = vpack.c.b16 %v126, %v124
    %v155 = vpack.c.b16 %v127, %v125
    %v156 = vpack.c.b16 %v130, %v128
    %v157 = vpack.c.b16 %v131, %v129
    %v158 = vpack.c.b16 %v134, %v132
    %v159 = vpack.c.b16 %v135, %v133
    %v160 = vpack.c.b16 %v138, %v136
    %v161 = vpack.c.b16 %v139, %v137
    %v162 = vpack.c.b16 %v142, %v140
    %v163 = vpack.c.b16 %v143, %v141
    %v164 = vpack.c.b16 %v146, %v144
    %v165 = vpack.c.b16 %v147, %v145
    %v166 = vpack.c.b16 %v150, %v148
    %v167 = vpack.c.b16 %v151, %v149
    %184 = vmatprep.subr.bf16.mxu0 %v153
    %185 = vmatpush1.bf16.msra.mxu0 %v152
    %186 = vmatprep.subr.bf16.mxu0 %v155
    %187 = vmatpush1.bf16.msra.mxu0 %v154
    %188 = vmatprep.subr.bf16.mxu0 %v157
    %189 = vmatpush1.bf16.msra.mxu0 %v156
    %190 = vmatprep.subr.bf16.mxu0 %v159
    %191 = vmatpush1.bf16.msra.mxu0 %v158
    %192 = vmatprep.subr.bf16.mxu0 %v161
    %193 = vmatpush1.bf16.msra.mxu0 %v160
    %194 = vmatprep.subr.bf16.mxu0 %v163
    %195 = vmatpush1.bf16.msra.mxu0 %v162
    %196 = vmatprep.subr.bf16.mxu0 %v165
    %197 = vmatpush1.bf16.msra.mxu0 %v164
    %198 = vmatprep.subr.bf16.mxu0 %v167
    %199 = vmatpush1.bf16.msra.mxu0 %v166
    %200 = vmatprep.subr.bf16.mxu0 0
    %201 = vmatpush1.bf16.msra.mxu0 0
    %202 = vmatprep.subr.bf16.mxu0 0
    %203 = vmatpush1.bf16.msra.mxu0 0
    %204 = vmatprep.subr.bf16.mxu0 0
    %205 = vmatpush1.bf16.msra.mxu0 0
    %206 = vmatprep.subr.bf16.mxu0 0
    %207 = vmatpush1.bf16.msra.mxu0 0
    %208 = vmatprep.subr.bf16.mxu0 0
    %209 = vmatpush1.bf16.msra.mxu0 0
    %210 = vmatprep.subr.bf16.mxu0 0
    %211 = vmatpush1.bf16.msra.mxu0 0
    %212 = vmatprep.subr.bf16.mxu0 0
    %213 = vmatpush1.bf16.msra.mxu0 0
    %214 = vmatprep.subr.bf16.mxu0 0
    %215 = vmatpush1.bf16.msra.mxu0 0
    %216 = vmatprep.mubr.bf16.mxu0 0
    %217 = vmatmul.mubr.bf16.gmra.mrb[0].mxu0 %v72
    %v218 = vpop.f32.mrb[0].mxu0
    %v219 = vadd.f32 0.0, %v218
    %v220 = vpop.f32.mrb[0].mxu0
    %v221 = vadd.f32 0.0, %v220
    %v222 = vpop.f32.mrb[0].mxu0
    %v223 = vadd.f32 0.0, %v222
    %v224 = vpop.f32.mrb[0].mxu0
    %v225 = vadd.f32 0.0, %v224
    %226 = vmatprep.mubr.bf16.mxu0 0
    %227 = vmatmul.mubr.bf16.gmra.mrb[0].mxu0 %v73
    %v228 = vpop.f32.mrb[0].mxu0
    %v229 = vadd.f32 0.0, %v228
    %v230 = vpop.f32.mrb[0].mxu0
    %v231 = vadd.f32 0.0, %v230
    %v232 = vpop.f32.mrb[0].mxu0
    %v233 = vadd.f32 0.0, %v232
    %v234 = vpop.f32.mrb[0].mxu0
    %v235 = vadd.f32 0.0, %v234
    %236 = vmatprep.mubr.bf16.mxu0 0
    %237 = vmatmul.mubr.bf16.gmra.mrb[0].mxu0 %v74
    %v238 = vpop.f32.mrb[0].mxu0
    %v239 = vadd.f32 0.0, %v238
    %v240 = vpop.f32.mrb[0].mxu0
    %v241 = vadd.f32 0.0, %v240
    %v242 = vpop.f32.mrb[0].mxu0
    %v243 = vadd.f32 0.0, %v242
    %v244 = vpop.f32.mrb[0].mxu0
    %v245 = vadd.f32 0.0, %v244
    %246 = vmatprep.mubr.bf16.mxu0 0
    %247 = vmatmul.mubr.bf16.gmra.mrb[0].mxu0 %v75
    %v248 = vpop.f32.mrb[0].mxu0
    %v249 = vadd.f32 0.0, %v248
    %v250 = vpop.f32.mrb[0].mxu0
    %v251 = vadd.f32 0.0, %v250
    %v252 = vpop.f32.mrb[0].mxu0
    %v253 = vadd.f32 0.0, %v252
    %v254 = vpop.f32.mrb[0].mxu0
    %v255 = vadd.f32 0.0, %v254
    %256 = vmatprep.mubr.bf16.mxu0 0
    %257 = vmatmul.mubr.bf16.gmra.mrb[0].mxu0 %v76
    %v258 = vpop.f32.mrb[0].mxu0
    %v259 = vadd.f32 0.0, %v258
    %v260 = vpop.f32.mrb[0].mxu0
    %v261 = vadd.f32 0.0, %v260
    %v262 = vpop.f32.mrb[0].mxu0
    %v263 = vadd.f32 0.0, %v262
    %v264 = vpop.f32.mrb[0].mxu0
    %v265 = vadd.f32 0.0, %v264
    %266 = vmatprep.mubr.bf16.mxu0 0
    %267 = vmatmul.mubr.bf16.gmra.mrb[0].mxu0 %v77
    %v268 = vpop.f32.mrb[0].mxu0
    %v269 = vadd.f32 0.0, %v268
    %v270 = vpop.f32.mrb[0].mxu0
    %v271 = vadd.f32 0.0, %v270
    %v272 = vpop.f32.mrb[0].mxu0
    %v273 = vadd.f32 0.0, %v272
    %v274 = vpop.f32.mrb[0].mxu0
    %v275 = vadd.f32 0.0, %v274
    %276 = vmatprep.mubr.bf16.mxu0 0
    %277 = vmatmul.mubr.bf16.gmra.mrb[0].mxu0 %v78
    %v278 = vpop.f32.mrb[0].mxu0
    %v279 = vadd.f32 0.0, %v278
    %v280 = vpop.f32.mrb[0].mxu0
    %v281 = vadd.f32 0.0, %v280
    %v282 = vpop.f32.mrb[0].mxu0
    %v283 = vadd.f32 0.0, %v282
    %v284 = vpop.f32.mrb[0].mxu0
    %v285 = vadd.f32 0.0, %v284
    %286 = vmatprep.mubr.bf16.mxu0 0
    %287 = vmatmul.mubr.bf16.gmra.mrb[0].mxu0 %v79
    %v288 = vpop.f32.mrb[0].mxu0
    %v289 = vadd.f32 0.0, %v288
    %v290 = vpop.f32.mrb[0].mxu0
    %v291 = vadd.f32 0.0, %v290
    %v292 = vpop.f32.mrb[0].mxu0
    %v293 = vadd.f32 0.0, %v292
    %v294 = vpop.f32.mrb[0].mxu0
    %v295 = vadd.f32 0.0, %v294
    %296 = vmatprep.mubr.bf16.mxu0 0
    %297 = vmatmul.mubr.bf16.gmra.mrb[0].mxu0 %v80
    %v298 = vpop.f32.mrb[0].mxu0
    %v299 = vadd.f32 0.0, %v298
    %v300 = vpop.f32.mrb[0].mxu0
    %v301 = vadd.f32 0.0, %v300
    %v302 = vpop.f32.mrb[0].mxu0
    %v303 = vadd.f32 0.0, %v302
    %v304 = vpop.f32.mrb[0].mxu0
    %v305 = vadd.f32 0.0, %v304
    %306 = vmatprep.mubr.bf16.mxu0 0
    %307 = vmatmul.mubr.bf16.gmra.mrb[0].mxu0 %v81
    %v308 = vpop.f32.mrb[0].mxu0
    %v309 = vadd.f32 0.0, %v308
    %v310 = vpop.f32.mrb[0].mxu0
    %v311 = vadd.f32 0.0, %v310
    %v312 = vpop.f32.mrb[0].mxu0
    %v313 = vadd.f32 0.0, %v312
    %v314 = vpop.f32.mrb[0].mxu0
    %v315 = vadd.f32 0.0, %v314
    %316 = vmatprep.mubr.bf16.mxu0 0
    %317 = vmatmul.mubr.bf16.gmra.mrb[0].mxu0 %v82
    %v318 = vpop.f32.mrb[0].mxu0
    %v319 = vadd.f32 0.0, %v318
    %v320 = vpop.f32.mrb[0].mxu0
    %v321 = vadd.f32 0.0, %v320
    %v322 = vpop.f32.mrb[0].mxu0
    %v323 = vadd.f32 0.0, %v322
    %v324 = vpop.f32.mrb[0].mxu0
    %v325 = vadd.f32 0.0, %v324
    %326 = vmatprep.mubr.bf16.mxu0 0
    %327 = vmatmul.mubr.bf16.gmra.mrb[0].mxu0 %v83
    %v328 = vpop.f32.mrb[0].mxu0
    %v329 = vadd.f32 0.0, %v328
    %v330 = vpop.f32.mrb[0].mxu0
    %v331 = vadd.f32 0.0, %v330
    %v332 = vpop.f32.mrb[0].mxu0
    %v333 = vadd.f32 0.0, %v332
    %v334 = vpop.f32.mrb[0].mxu0
    %v335 = vadd.f32 0.0, %v334
    %336 = vmatprep.mubr.bf16.mxu0 0
    %337 = vmatmul.mubr.bf16.gmra.mrb[0].mxu0 %v84
    %v338 = vpop.f32.mrb[0].mxu0
    %v339 = vadd.f32 0.0, %v338
    %v340 = vpop.f32.mrb[0].mxu0
    %v341 = vadd.f32 0.0, %v340
    %v342 = vpop.f32.mrb[0].mxu0
    %v343 = vadd.f32 0.0, %v342
    %v344 = vpop.f32.mrb[0].mxu0
    %v345 = vadd.f32 0.0, %v344
    %346 = vmatprep.mubr.bf16.mxu0 0
    %347 = vmatmul.mubr.bf16.gmra.mrb[0].mxu0 %v85
    %v348 = vpop.f32.mrb[0].mxu0
    %v349 = vadd.f32 0.0, %v348
    %v350 = vpop.f32.mrb[0].mxu0
    %v351 = vadd.f32 0.0, %v350
    %v352 = vpop.f32.mrb[0].mxu0
    %v353 = vadd.f32 0.0, %v352
    %v354 = vpop.f32.mrb[0].mxu0
    %v355 = vadd.f32 0.0, %v354
    %356 = vmatprep.mubr.bf16.mxu0 0
    %357 = vmatmul.mubr.bf16.gmra.mrb[0].mxu0 %v86
    %v358 = vpop.f32.mrb[0].mxu0
    %v359 = vadd.f32 0.0, %v358
    %v360 = vpop.f32.mrb[0].mxu0
    %v361 = vadd.f32 0.0, %v360
    %v362 = vpop.f32.mrb[0].mxu0
    %v363 = vadd.f32 0.0, %v362
    %v364 = vpop.f32.mrb[0].mxu0
    %v365 = vadd.f32 0.0, %v364
    %366 = vmatprep.mubr.bf16.mxu0 0
    %367 = vmatmul.mubr.bf16.gmra.mrb[0].mxu0 %v87
    %v368 = vpop.f32.mrb[0].mxu0
    %v369 = vadd.f32 0.0, %v368
    %v370 = vpop.f32.mrb[0].mxu0
    %v371 = vadd.f32 0.0, %v370
    %v372 = vpop.f32.mrb[0].mxu0
    %v373 = vadd.f32 0.0, %v372
    %v374 = vpop.f32.mrb[0].mxu0
    %v375 = vadd.f32 0.0, %v374
    %376 = vdwg.mxu0
    %377 = vst [vmem:[%s2] sm:$0xff] %v219
    %378 = vst [vmem:[%s2 + $0x8] sm:$0xff] %v221
    %379 = vst [vmem:[%s2 + $0x10] sm:$0xff] %v223
    %380 = vst [vmem:[%s2 + $0x18] sm:$0xff] %v225
    %381 = vst [vmem:[%s2 + $0x20] sm:$0xff] %v229
    %382 = vst [vmem:[%s2 + $0x28] sm:$0xff] %v231
    %383 = vst [vmem:[%s2 + $0x30] sm:$0xff] %v233
    %384 = vst [vmem:[%s2 + $0x38] sm:$0xff] %v235
    %385 = vst [vmem:[%s2 + $0x40] sm:$0xff] %v239
    %386 = vst [vmem:[%s2 + $0x48] sm:$0xff] %v241
    %387 = vst [vmem:[%s2 + $0x50] sm:$0xff] %v243
    %388 = vst [vmem:[%s2 + $0x58] sm:$0xff] %v245
    %389 = vst [vmem:[%s2 + $0x60] sm:$0xff] %v249
    %390 = vst [vmem:[%s2 + $0x68] sm:$0xff] %v251
    %391 = vst [vmem:[%s2 + $0x70] sm:$0xff] %v253
    %392 = vst [vmem:[%s2 + $0x78] sm:$0xff] %v255
    %393 = vst [vmem:[%s2 + $0x80] sm:$0xff] %v259
    %394 = vst [vmem:[%s2 + $0x88] sm:$0xff] %v261
    %395 = vst [vmem:[%s2 + $0x90] sm:$0xff] %v263
    %396 = vst [vmem:[%s2 + $0x98] sm:$0xff] %v265
    %397 = vst [vmem:[%s2 + $0xa0] sm:$0xff] %v269
    %398 = vst [vmem:[%s2 + $0xa8] sm:$0xff] %v271
    %399 = vst [vmem:[%s2 + $0xb0] sm:$0xff] %v273
    %400 = vst [vmem:[%s2 + $0xb8] sm:$0xff] %v275
    %401 = vst [vmem:[%s2 + $0xc0] sm:$0xff] %v279
    %402 = vst [vmem:[%s2 + $0xc8] sm:$0xff] %v281
    %403 = vst [vmem:[%s2 + $0xd0] sm:$0xff] %v283
    %404 = vst [vmem:[%s2 + $0xd8] sm:$0xff] %v285
    %405 = vst [vmem:[%s2 + $0xe0] sm:$0xff] %v289
    %406 = vst [vmem:[%s2 + $0xe8] sm:$0xff] %v291
    %407 = vst [vmem:[%s2 + $0xf0] sm:$0xff] %v293
    %408 = vst [vmem:[%s2 + $0xf8] sm:$0xff] %v295
    %409 = vst [vmem:[%s2 + $0x100] sm:$0xff] %v299
    %410 = vst [vmem:[%s2 + $0x108] sm:$0xff] %v301
    %411 = vst [vmem:[%s2 + $0x110] sm:$0xff] %v303
    %412 = vst [vmem:[%s2 + $0x118] sm:$0xff] %v305
    %413 = vst [vmem:[%s2 + $0x120] sm:$0xff] %v309
    %414 = vst [vmem:[%s2 + $0x128] sm:$0xff] %v311
    %415 = vst [vmem:[%s2 + $0x130] sm:$0xff] %v313
    %416 = vst [vmem:[%s2 + $0x138] sm:$0xff] %v315
    %417 = vst [vmem:[%s2 + $0x140] sm:$0xff] %v319
    %418 = vst [vmem:[%s2 + $0x148] sm:$0xff] %v321
    %419 = vst [vmem:[%s2 + $0x150] sm:$0xff] %v323
    %420 = vst [vmem:[%s2 + $0x158] sm:$0xff] %v325
    %421 = vst [vmem:[%s2 + $0x160] sm:$0xff] %v329
    %422 = vst [vmem:[%s2 + $0x168] sm:$0xff] %v331
    %423 = vst [vmem:[%s2 + $0x170] sm:$0xff] %v333
    %424 = vst [vmem:[%s2 + $0x178] sm:$0xff] %v335
    %425 = vst [vmem:[%s2 + $0x180] sm:$0xff] %v339
    %426 = vst [vmem:[%s2 + $0x188] sm:$0xff] %v341
    %427 = vst [vmem:[%s2 + $0x190] sm:$0xff] %v343
    %428 = vst [vmem:[%s2 + $0x198] sm:$0xff] %v345
    %429 = vst [vmem:[%s2 + $0x1a0] sm:$0xff] %v349
    %430 = vst [vmem:[%s2 + $0x1a8] sm:$0xff] %v351
    %431 = vst [vmem:[%s2 + $0x1b0] sm:$0xff] %v353
    %432 = vst [vmem:[%s2 + $0x1b8] sm:$0xff] %v355
    %433 = vst [vmem:[%s2 + $0x1c0] sm:$0xff] %v359
    %434 = vst [vmem:[%s2 + $0x1c8] sm:$0xff] %v361
    %435 = vst [vmem:[%s2 + $0x1d0] sm:$0xff] %v363
    %436 = vst [vmem:[%s2 + $0x1d8] sm:$0xff] %v365
    %437 = vst [vmem:[%s2 + $0x1e0] sm:$0xff] %v369
    %438 = vst [vmem:[%s2 + $0x1e8] sm:$0xff] %v371
    %439 = vst [vmem:[%s2 + $0x1f0] sm:$0xff] %v373
    %440 = vst [vmem:[%s2 + $0x1f8] sm:$0xff] %v375
    // Predicated region
    $region18: #{graphcast_processor_forward.6} parent=1 // pred_check
      _
    $region19: #{graphcast_processor_forward.6} parent=1 // pred_check_branch
      %442 = sbr.rel (0) target = $region21
    $region20: #{graphcast_processor_forward.6} parent=1 // pred_region
      _
    $region21: #{graphcast_processor_forward.6} parent=1 // pred_fallthru
      _
    // Predicated region
    $region22: #{graphcast_processor_forward.6} parent=1 // pred_check
      _
    $region23: #{graphcast_processor_forward.6} parent=1 // pred_check_branch
      %444 = sbr.rel (0) target = $region25
    $region24: #{graphcast_processor_forward.6} parent=1 // pred_region
      _
    $region25: #{graphcast_processor_forward.6} parent=1 // pred_fallthru
      _
    %445 = vsyncpa [#allocation3], 1
    %446 = vsyncpa [#allocation5], 1

// kernel: graphcast_processor_forward.7
$region0: #{graphcast_processor_forward.7}
  #allocation0 [shape = 'u32[]', space=smem, size = 0x4, offset = 0x4, fixed_abs, tag = 'smem constant byte address 0x4 - core index']
  #allocation1 [shape = 'u32[144,128]{1,0:T(1,128)}', space=vmem, size = 0x12000, scoped, tag = 'internal scratch']
  %s0 = inlined_call_operand.vmem [shape: f32[512,128], index: 0, kind: input, shape index: {}]
  %s1 = inlined_call_operand.vmem [shape: f32[512,128], index: 1, kind: input, shape index: {}]
  %s2 = inlined_call_operand.vmem [shape: f32[512,128], index: 2, kind: input, shape index: {}]
  %s3 = inlined_call_operand.vmem [shape: bf16[128,128], index: 3, kind: input, shape index: {}]
  %s4 = inlined_call_operand.vmem [shape: f32[1,128], index: 4, kind: input, shape index: {}]
  %s5 = inlined_call_operand.vmem [shape: bf16[128,128], index: 5, kind: input, shape index: {}]
  %s6 = inlined_call_operand.vmem [shape: f32[1,128], index: 6, kind: input, shape index: {}]
  %s7 = inlined_call_operand.vmem [shape: f32[1,128], index: 7, kind: input, shape index: {}]
  %s8 = inlined_call_operand.vmem [shape: f32[1,128], index: 8, kind: input, shape index: {}]
  %s9 = inlined_call_operand.vmem [shape: f32[512,128], index: 9, kind: output, shape index: {}]
  %s10 = sld [smem:[#allocation0]]
  $region69: #{graphcast_processor_forward.7} parent=0
    _
  %s12 = ssub.s32 1, %s10
  %s13 = scalar_select 0, %s12, %s10
  loop: start=0, step=1, limit=6
  $region2: #{graphcast_processor_forward.7} parent=0 // loop_pre_header
    _
  $region3: #{graphcast_processor_forward.7} parent=0 // loop_header
    %s15 = sphi 0, %s19
    %p16 = scmp.ge.s32.totalorder %s15, 6
    %s25 = sphi 0, %s27
    %s28 = sphi 0, %s25
    %s29 = sphi 0, %s28
    %s45 = sphi 0, %s29
    %s51 = sphi 0, %s53
    %s54 = sphi 0, %s51
    %s55 = sphi 0, %s54
    %s71 = sphi 0, %s55
    %s77 = sphi 0, %s79
    %s80 = sphi 0, %s77
    %s81 = sphi 0, %s80
    %s97 = sphi 0, %s81
    %s101 = sphi 0, %s101
    %s103 = sphi 0, %s101
    %s104 = sphi 0, %s103
    %s118 = sphi 0, %s104
    %s122 = sphi 0, %s122
    %s124 = sphi 0, %s122
    %s125 = sphi 0, %s124
    %s139 = sphi 0, %s125
    %s143 = sphi 0, %s143
    %s145 = sphi 0, %s143
    %s146 = sphi 0, %s145
    %s160 = sphi 0, %s146
    %s164 = sphi 0, %s164
    %s166 = sphi 0, %s164
    %s167 = sphi 0, %s166
    %s181 = sphi 0, %s167
    %s185 = sphi 0, %s185
    %s187 = sphi 0, %s185
    %s188 = sphi 0, %s187
    %s202 = sphi 0, %s188
    %s206 = sphi 0, %s206
    %s208 = sphi 0, %s206
    %s209 = sphi 0, %s208
    %s223 = sphi 0, %s209
    %s229 = sphi 0, %s231
    %s232 = sphi 0, %s229
    %s233 = sphi 0, %s232
    %s249 = sphi 0, %s233
  $region4: #{graphcast_processor_forward.7} parent=0 // loop_header_branch
    %18 = sbr.rel (%p16) target = $region8
  $region5: #{graphcast_processor_forward.7} parent=0 // loop_body
    %s20 = ssub.s32 %s15, 1
    %s21 = ssub.s32 %s15, 2
    %s22 = sadd.s32 %s15, 1
    %s23 = ssub.s32 %s15, %s22
    %p24 = scmp.eq.s32.totalorder %s23, 0
    %s26 = sadd.s32 %s25, 1
    %s27 = scalar_select %p24, %s25, %s26
    %p30 = pneg %p24
    %p31 = scmp.eq.s32.totalorder %s15, 3
    %p32 = por %p30, %p31
    %p33 = scmp.ne.s32.totalorder %s25, %s28
    %p34 = scmp.eq.s32.totalorder %s15, 0
    %p35 = por %p33, %p34
    %p36 = scmp.ne.s32.totalorder %s25, %s28
    %p37 = scmp.eq.s32.totalorder %s20, 3
    %p38 = por %p36, %p37
    %p39 = scmp.ne.s32.totalorder %s28, %s29
    %p40 = scmp.eq.s32.totalorder %s20, 0
    %p41 = por %p39, %p40
    %p42 = scmp.ne.s32.totalorder %s28, %s29
    %p43 = scmp.eq.s32.totalorder %s21, 3
    %p44 = por %p42, %p43
    %p46 = scmp.ne.s32.totalorder %s29, %s45
    %p47 = scmp.eq.s32.totalorder %s21, 0
    %p48 = por %p46, %p47
    %s49 = ssub.s32 %s15, %s22
    %p50 = scmp.eq.s32.totalorder %s49, 0
    %s52 = sadd.s32 %s51, 1
    %s53 = scalar_select %p50, %s51, %s52
    %p56 = pneg %p50
    %p57 = scmp.eq.s32.totalorder %s15, 3
    %p58 = por %p56, %p57
    %p59 = scmp.ne.s32.totalorder %s51, %s54
    %p60 = scmp.eq.s32.totalorder %s15, 0
    %p61 = por %p59, %p60
    %p62 = scmp.ne.s32.totalorder %s51, %s54
    %p63 = scmp.eq.s32.totalorder %s20, 3
    %p64 = por %p62, %p63
    %p65 = scmp.ne.s32.totalorder %s54, %s55
    %p66 = scmp.eq.s32.totalorder %s20, 0
    %p67 = por %p65, %p66
    %p68 = scmp.ne.s32.totalorder %s54, %s55
    %p69 = scmp.eq.s32.totalorder %s21, 3
    %p70 = por %p68, %p69
    %p72 = scmp.ne.s32.totalorder %s55, %s71
    %p73 = scmp.eq.s32.totalorder %s21, 0
    %p74 = por %p72, %p73
    %s75 = ssub.s32 %s15, %s22
    %p76 = scmp.eq.s32.totalorder %s75, 0
    %s78 = sadd.s32 %s77, 1
    %s79 = scalar_select %p76, %s77, %s78
    %p82 = pneg %p76
    %p83 = scmp.eq.s32.totalorder %s15, 3
    %p84 = por %p82, %p83
    %p85 = scmp.ne.s32.totalorder %s77, %s80
    %p86 = scmp.eq.s32.totalorder %s15, 0
    %p87 = por %p85, %p86
    %p88 = scmp.ne.s32.totalorder %s77, %s80
    %p89 = scmp.eq.s32.totalorder %s20, 3
    %p90 = por %p88, %p89
    %p91 = scmp.ne.s32.totalorder %s80, %s81
    %p92 = scmp.eq.s32.totalorder %s20, 0
    %p93 = por %p91, %p92
    %p94 = scmp.ne.s32.totalorder %s80, %s81
    %p95 = scmp.eq.s32.totalorder %s21, 3
    %p96 = por %p94, %p95
    %p98 = scmp.ne.s32.totalorder %s81, %s97
    %p99 = scmp.eq.s32.totalorder %s21, 0
    %p100 = por %p98, %p99
    %s102 = sadd.s32 %s101, 1
    %p105 = scmp.eq.s32.totalorder %s15, 3
    %p106 = scmp.ne.s32.totalorder %s101, %s103
    %p107 = scmp.eq.s32.totalorder %s15, 0
    %p108 = por %p106, %p107
    %p109 = scmp.ne.s32.totalorder %s101, %s103
    %p110 = scmp.eq.s32.totalorder %s20, 3
    %p111 = por %p109, %p110
    %p112 = scmp.ne.s32.totalorder %s103, %s104
    %p113 = scmp.eq.s32.totalorder %s20, 0
    %p114 = por %p112, %p113
    %p115 = scmp.ne.s32.totalorder %s103, %s104
    %p116 = scmp.eq.s32.totalorder %s21, 3
    %p117 = por %p115, %p116
    %p119 = scmp.ne.s32.totalorder %s104, %s118
    %p120 = scmp.eq.s32.totalorder %s21, 0
    %p121 = por %p119, %p120
    %s123 = sadd.s32 %s122, 1
    %p126 = scmp.eq.s32.totalorder %s15, 3
    %p127 = scmp.ne.s32.totalorder %s122, %s124
    %p128 = scmp.eq.s32.totalorder %s15, 0
    %p129 = por %p127, %p128
    %p130 = scmp.ne.s32.totalorder %s122, %s124
    %p131 = scmp.eq.s32.totalorder %s20, 3
    %p132 = por %p130, %p131
    %p133 = scmp.ne.s32.totalorder %s124, %s125
    %p134 = scmp.eq.s32.totalorder %s20, 0
    %p135 = por %p133, %p134
    %p136 = scmp.ne.s32.totalorder %s124, %s125
    %p137 = scmp.eq.s32.totalorder %s21, 3
    %p138 = por %p136, %p137
    %p140 = scmp.ne.s32.totalorder %s125, %s139
    %p141 = scmp.eq.s32.totalorder %s21, 0
    %p142 = por %p140, %p141
    %s144 = sadd.s32 %s143, 1
    %p147 = scmp.eq.s32.totalorder %s15, 3
    %p148 = scmp.ne.s32.totalorder %s143, %s145
    %p149 = scmp.eq.s32.totalorder %s15, 0
    %p150 = por %p148, %p149
    %p151 = scmp.ne.s32.totalorder %s143, %s145
    %p152 = scmp.eq.s32.totalorder %s20, 3
    %p153 = por %p151, %p152
    %p154 = scmp.ne.s32.totalorder %s145, %s146
    %p155 = scmp.eq.s32.totalorder %s20, 0
    %p156 = por %p154, %p155
    %p157 = scmp.ne.s32.totalorder %s145, %s146
    %p158 = scmp.eq.s32.totalorder %s21, 3
    %p159 = por %p157, %p158
    %p161 = scmp.ne.s32.totalorder %s146, %s160
    %p162 = scmp.eq.s32.totalorder %s21, 0
    %p163 = por %p161, %p162
    %s165 = sadd.s32 %s164, 1
    %p168 = scmp.eq.s32.totalorder %s15, 3
    %p169 = scmp.ne.s32.totalorder %s164, %s166
    %p170 = scmp.eq.s32.totalorder %s15, 0
    %p171 = por %p169, %p170
    %p172 = scmp.ne.s32.totalorder %s164, %s166
    %p173 = scmp.eq.s32.totalorder %s20, 3
    %p174 = por %p172, %p173
    %p175 = scmp.ne.s32.totalorder %s166, %s167
    %p176 = scmp.eq.s32.totalorder %s20, 0
    %p177 = por %p175, %p176
    %p178 = scmp.ne.s32.totalorder %s166, %s167
    %p179 = scmp.eq.s32.totalorder %s21, 3
    %p180 = por %p178, %p179
    %p182 = scmp.ne.s32.totalorder %s167, %s181
    %p183 = scmp.eq.s32.totalorder %s21, 0
    %p184 = por %p182, %p183
    %s186 = sadd.s32 %s185, 1
    %p189 = scmp.eq.s32.totalorder %s15, 3
    %p190 = scmp.ne.s32.totalorder %s185, %s187
    %p191 = scmp.eq.s32.totalorder %s15, 0
    %p192 = por %p190, %p191
    %p193 = scmp.ne.s32.totalorder %s185, %s187
    %p194 = scmp.eq.s32.totalorder %s20, 3
    %p195 = por %p193, %p194
    %p196 = scmp.ne.s32.totalorder %s187, %s188
    %p197 = scmp.eq.s32.totalorder %s20, 0
    %p198 = por %p196, %p197
    %p199 = scmp.ne.s32.totalorder %s187, %s188
    %p200 = scmp.eq.s32.totalorder %s21, 3
    %p201 = por %p199, %p200
    %p203 = scmp.ne.s32.totalorder %s188, %s202
    %p204 = scmp.eq.s32.totalorder %s21, 0
    %p205 = por %p203, %p204
    %s207 = sadd.s32 %s206, 1
    %p210 = scmp.eq.s32.totalorder %s15, 3
    %p211 = scmp.ne.s32.totalorder %s206, %s208
    %p212 = scmp.eq.s32.totalorder %s15, 0
    %p213 = por %p211, %p212
    %p214 = scmp.ne.s32.totalorder %s206, %s208
    %p215 = scmp.eq.s32.totalorder %s20, 3
    %p216 = por %p214, %p215
    %p217 = scmp.ne.s32.totalorder %s208, %s209
    %p218 = scmp.eq.s32.totalorder %s20, 0
    %p219 = por %p217, %p218
    %p220 = scmp.ne.s32.totalorder %s208, %s209
    %p221 = scmp.eq.s32.totalorder %s21, 3
    %p222 = por %p220, %p221
    %p224 = scmp.ne.s32.totalorder %s209, %s223
    %p225 = scmp.eq.s32.totalorder %s21, 0
    %p226 = por %p224, %p225
    %s227 = ssub.s32 %s15, %s22
    %p228 = scmp.eq.s32.totalorder %s227, 0
    %s230 = sadd.s32 %s229, 1
    %s231 = scalar_select %p228, %s229, %s230
    %p234 = pneg %p228
    %p235 = scmp.eq.s32.totalorder %s15, 3
    %p236 = por %p234, %p235
    %p237 = scmp.ne.s32.totalorder %s229, %s232
    %p238 = scmp.eq.s32.totalorder %s15, 0
    %p239 = por %p237, %p238
    %p240 = scmp.ne.s32.totalorder %s229, %s232
    %p241 = scmp.eq.s32.totalorder %s20, 3
    %p242 = por %p240, %p241
    %p243 = scmp.ne.s32.totalorder %s232, %s233
    %p244 = scmp.eq.s32.totalorder %s20, 0
    %p245 = por %p243, %p244
    %p246 = scmp.ne.s32.totalorder %s232, %s233
    %p247 = scmp.eq.s32.totalorder %s21, 3
    %p248 = por %p246, %p247
    %p250 = scmp.ne.s32.totalorder %s233, %s249
    %p251 = scmp.eq.s32.totalorder %s21, 0
    %p252 = por %p250, %p251
    %p253 = scmp.le.s32.totalorder 1, %s15
    %p254 = scmp.lt.s32.totalorder %s15, 5
    %p255 = pnand %p253, %p254
    %p256 = pneg %p255
    // Predicated region
    $region9: #{graphcast_processor_forward.7} parent=5 // pred_check
      _
    $region10: #{graphcast_processor_forward.7} parent=5 // pred_check_branch
      %258 = sbr.rel (%p255) target = $region12
    $region11: #{graphcast_processor_forward.7} parent=5 // pred_region
      %s259 = ssub.s32 %s15, 1
      // Predicated region
      $region13: #{graphcast_processor_forward.7} parent=11 // pred_check
        %p260 = pneg %p114
      $region14: #{graphcast_processor_forward.7} parent=11 // pred_check_branch
        %262 = sbr.rel (%p260) target = $region16
      $region15: #{graphcast_processor_forward.7} parent=11 // pred_region
        _
      $region16: #{graphcast_processor_forward.7} parent=11 // pred_fallthru
        _
      // Predicated region
      $region17: #{graphcast_processor_forward.7} parent=11 // pred_check
        %p263 = pneg %p135
      $region18: #{graphcast_processor_forward.7} parent=11 // pred_check_branch
        %265 = sbr.rel (%p263) target = $region20
      $region19: #{graphcast_processor_forward.7} parent=11 // pred_region
        _
      $region20: #{graphcast_processor_forward.7} parent=11 // pred_fallthru
        _
      // Predicated region
      $region21: #{graphcast_processor_forward.7} parent=11 // pred_check
        %p266 = pneg %p156
      $region22: #{graphcast_processor_forward.7} parent=11 // pred_check_branch
        %268 = sbr.rel (%p266) target = $region24
      $region23: #{graphcast_processor_forward.7} parent=11 // pred_region
        _
      $region24: #{graphcast_processor_forward.7} parent=11 // pred_fallthru
        _
      // Predicated region
      $region25: #{graphcast_processor_forward.7} parent=11 // pred_check
        %p269 = pneg %p177
      $region26: #{graphcast_processor_forward.7} parent=11 // pred_check_branch
        %271 = sbr.rel (%p269) target = $region28
      $region27: #{graphcast_processor_forward.7} parent=11 // pred_region
        _
      $region28: #{graphcast_processor_forward.7} parent=11 // pred_fallthru
        _
      // Predicated region
      $region29: #{graphcast_processor_forward.7} parent=11 // pred_check
        %p272 = pneg %p198
      $region30: #{graphcast_processor_forward.7} parent=11 // pred_check_branch
        %274 = sbr.rel (%p272) target = $region32
      $region31: #{graphcast_processor_forward.7} parent=11 // pred_region
        _
      $region32: #{graphcast_processor_forward.7} parent=11 // pred_fallthru
        _
      // Predicated region
      $region33: #{graphcast_processor_forward.7} parent=11 // pred_check
        %p275 = pneg %p219
      $region34: #{graphcast_processor_forward.7} parent=11 // pred_check_branch
        %277 = sbr.rel (%p275) target = $region36
      $region35: #{graphcast_processor_forward.7} parent=11 // pred_region
        _
      $region36: #{graphcast_processor_forward.7} parent=11 // pred_fallthru
        _
    $region12: #{graphcast_processor_forward.7} parent=5 // pred_fallthru
      _
    %p278 = scmp.lt.s32.totalorder %s15, 4
    // Predicated region
    $region37: #{graphcast_processor_forward.7} parent=5 // pred_check
      %p279 = pneg %p278
    $region38: #{graphcast_processor_forward.7} parent=5 // pred_check_branch
      %281 = sbr.rel (%p279) target = $region40
    $region39: #{graphcast_processor_forward.7} parent=5 // pred_region
      // Predicated region
      $region41: #{graphcast_processor_forward.7} parent=39 // pred_check
        %p282 = pneg %p35
      $region42: #{graphcast_processor_forward.7} parent=39 // pred_check_branch
        %284 = sbr.rel (%p282) target = $region44
      $region43: #{graphcast_processor_forward.7} parent=39 // pred_region
        %s285 = smul.u32 16, %s15
        %p286 = scmp.lt.s32.totalorder %s285, 63
        %s287 = scalar_select %p286, %s285, 63
        %s288 = smul.addr %s287, 8
        %s289 = scalar_lea.vmem %s0, %s288
        %s290 = smul.u32 16, %s15
      $region44: #{graphcast_processor_forward.7} parent=39 // pred_fallthru
        _
      // Predicated region
      $region45: #{graphcast_processor_forward.7} parent=39 // pred_check
        %p291 = pneg %p61
      $region46: #{graphcast_processor_forward.7} parent=39 // pred_check_branch
        %293 = sbr.rel (%p291) target = $region48
      $region47: #{graphcast_processor_forward.7} parent=39 // pred_region
        %s294 = smul.u32 16, %s15
        %p295 = scmp.lt.s32.totalorder %s294, 63
        %s296 = scalar_select %p295, %s294, 63
        %s297 = smul.addr %s296, 8
        %s298 = scalar_lea.vmem %s1, %s297
        %s299 = smul.u32 16, %s15
      $region48: #{graphcast_processor_forward.7} parent=39 // pred_fallthru
        _
      // Predicated region
      $region49: #{graphcast_processor_forward.7} parent=39 // pred_check
        %p300 = pneg %p87
      $region50: #{graphcast_processor_forward.7} parent=39 // pred_check_branch
        %302 = sbr.rel (%p300) target = $region52
      $region51: #{graphcast_processor_forward.7} parent=39 // pred_region
        %s303 = smul.u32 16, %s15
        %p304 = scmp.lt.s32.totalorder %s303, 63
        %s305 = scalar_select %p304, %s303, 63
        %s306 = smul.addr %s305, 8
        %s307 = scalar_lea.vmem %s2, %s306
        %s308 = smul.u32 16, %s15
      $region52: #{graphcast_processor_forward.7} parent=39 // pred_fallthru
        _
    $region40: #{graphcast_processor_forward.7} parent=5 // pred_fallthru
      _
    %p309 = scmp.le.s32.totalorder 1, %s15
    %p310 = scmp.lt.s32.totalorder %s15, 5
    %p311 = pnand %p309, %p310
    %p312 = pneg %p311
    // Predicated region
    $region53: #{graphcast_processor_forward.7} parent=5 // pred_check
      _
    $region54: #{graphcast_processor_forward.7} parent=5 // pred_check_branch
      %314 = sbr.rel (%p311) target = $region56
    $region55: #{graphcast_processor_forward.7} parent=5 // pred_region
      %s315 = ssub.s32 %s15, 1
      %s316 = smul.u32 16, %s20
      %p317 = scmp.lt.s32.totalorder %s316, 63
      %s318 = scalar_select %p317, %s316, 63
      %s319 = smul.addr %s318, 8
      %s320 = scalar_lea.vmem %s0, %s319
      %p321 = pneg %p41
      %p322 = pneg %p38
      %s323 = smul.u32 16, %s20
      %p324 = scmp.lt.s32.totalorder %s323, 63
      %s325 = scalar_select %p324, %s323, 63
      %s326 = smul.addr %s325, 8
      %s327 = scalar_lea.vmem %s1, %s326
      %p328 = pneg %p67
      %p329 = pneg %p64
      %s330 = smul.u32 16, %s20
      %p331 = scmp.lt.s32.totalorder %s330, 63
      %s332 = scalar_select %p331, %s330, 63
      %s333 = smul.addr %s332, 8
      %s334 = scalar_lea.vmem %s2, %s333
      %p335 = pneg %p93
      %p336 = pneg %p90
      %p337 = pneg %p114
      %p338 = pneg %p111
      %p339 = pneg %p135
      %p340 = pneg %p132
      %p341 = pneg %p156
      %p342 = pneg %p153
      %p343 = pneg %p177
      %p344 = pneg %p174
      %p345 = pneg %p198
      %p346 = pneg %p195
      %p347 = pneg %p219
      %p348 = pneg %p216
      %p349 = pneg %p245
      %p350 = pneg %p242
      %s351 = smul.u32 16, %s20
      %p352 = scmp.lt.s32.totalorder %s351, 63
      %s353 = scalar_select %p352, %s351, 63
      %s354 = smul.addr %s353, 8
      %s355 = scalar_lea.vmem %s9, %s354
      %s356 = smul.u32 16, %s20
      %p357 = scmp.lt.s32.totalorder %s356, 63
      %s358 = scalar_select %p357, %s356, 63
      %s359 = smul.addr %s358, 8
      %s360 = scalar_lea.vmem %s0, %s359
      %s361 = smul.u32 16, %s20
      %s362 = smul.u32 16, %s20
      %p363 = scmp.lt.s32.totalorder %s362, 63
      %s364 = scalar_select %p363, %s362, 63
      %s365 = smul.addr %s364, 8
      %s366 = scalar_lea.vmem %s1, %s365
      %s367 = smul.u32 16, %s20
      %s368 = smul.u32 16, %s20
      %p369 = scmp.lt.s32.totalorder %s368, 63
      %s370 = scalar_select %p369, %s368, 63
      %s371 = smul.addr %s370, 8
      %s372 = scalar_lea.vmem %s2, %s371
      %s373 = smul.u32 16, %s20
      %s374 = smul.u32 16, %s20
      %p375 = scmp.lt.s32.totalorder %s374, 63
      %s376 = scalar_select %p375, %s374, 63
      %s377 = smul.addr %s376, 8
      %s378 = scalar_lea.vmem %s9, %s377
      %s379 = smul.u32 16, %s20
      %v381 = vld [vmem:[%s360] sm:$0xff]
      %v382 = vld [vmem:[%s360 + $0x8] sm:$0xff]
      %v383 = vld [vmem:[%s360 + $0x10] sm:$0xff]
      %v384 = vld [vmem:[%s360 + $0x18] sm:$0xff]
      %v385 = vld [vmem:[%s360 + $0x20] sm:$0xff]
      %v386 = vld [vmem:[%s360 + $0x28] sm:$0xff]
      %v387 = vld [vmem:[%s360 + $0x30] sm:$0xff]
      %v388 = vld [vmem:[%s360 + $0x38] sm:$0xff]
      %v389 = vld [vmem:[%s360 + $0x40] sm:$0xff]
      %v390 = vld [vmem:[%s360 + $0x48] sm:$0xff]
      %v391 = vld [vmem:[%s360 + $0x50] sm:$0xff]
      %v392 = vld [vmem:[%s360 + $0x58] sm:$0xff]
      %v393 = vld [vmem:[%s360 + $0x60] sm:$0xff]
      %v394 = vld [vmem:[%s360 + $0x68] sm:$0xff]
      %v395 = vld [vmem:[%s360 + $0x70] sm:$0xff]
      %v396 = vld [vmem:[%s360 + $0x78] sm:$0xff]
      %v397 = vpack.c.bf16 %v382, %v381
      %v398 = vpack.c.bf16 %v384, %v383
      %v399 = vpack.c.bf16 %v386, %v385
      %v400 = vpack.c.bf16 %v388, %v387
      %v401 = vpack.c.bf16 %v390, %v389
      %v402 = vpack.c.bf16 %v392, %v391
      %v403 = vpack.c.bf16 %v394, %v393
      %v404 = vpack.c.bf16 %v396, %v395
      %v405 = vld [vmem:[%s3] sm:$0xf]
      %v406 = vld [vmem:[%s3 + $0x4] sm:$0xf]
      %v407 = vld [vmem:[%s3 + $0x8] sm:$0xf]
      %v408 = vld [vmem:[%s3 + $0xc] sm:$0xf]
      %v409 = vld [vmem:[%s3 + $0x10] sm:$0xf]
      %v410 = vld [vmem:[%s3 + $0x14] sm:$0xf]
      %v411 = vld [vmem:[%s3 + $0x18] sm:$0xf]
      %v412 = vld [vmem:[%s3 + $0x1c] sm:$0xf]
      %v413 = vld [vmem:[%s3 + $0x20] sm:$0xf]
      %v414 = vld [vmem:[%s3 + $0x24] sm:$0xf]
      %v415 = vld [vmem:[%s3 + $0x28] sm:$0xf]
      %v416 = vld [vmem:[%s3 + $0x2c] sm:$0xf]
      %v417 = vld [vmem:[%s3 + $0x30] sm:$0xf]
      %v418 = vld [vmem:[%s3 + $0x34] sm:$0xf]
      %v419 = vld [vmem:[%s3 + $0x38] sm:$0xf]
      %v420 = vld [vmem:[%s3 + $0x3c] sm:$0xf]
      %v421 = vld [vmem:[%s366] sm:$0xff]
      %v422 = vld [vmem:[%s366 + $0x8] sm:$0xff]
      %v423 = vld [vmem:[%s366 + $0x10] sm:$0xff]
      %v424 = vld [vmem:[%s366 + $0x18] sm:$0xff]
      %v425 = vld [vmem:[%s366 + $0x20] sm:$0xff]
      %v426 = vld [vmem:[%s366 + $0x28] sm:$0xff]
      %v427 = vld [vmem:[%s366 + $0x30] sm:$0xff]
      %v428 = vld [vmem:[%s366 + $0x38] sm:$0xff]
      %v429 = vld [vmem:[%s366 + $0x40] sm:$0xff]
      %v430 = vld [vmem:[%s366 + $0x48] sm:$0xff]
      %v431 = vld [vmem:[%s366 + $0x50] sm:$0xff]
      %v432 = vld [vmem:[%s366 + $0x58] sm:$0xff]
      %v433 = vld [vmem:[%s366 + $0x60] sm:$0xff]
      %v434 = vld [vmem:[%s366 + $0x68] sm:$0xff]
      %v435 = vld [vmem:[%s366 + $0x70] sm:$0xff]
      %v436 = vld [vmem:[%s366 + $0x78] sm:$0xff]
      %v453 = vunpack.c.l.b16 %v405
      %v454 = vunpack.c.l.b16 %v406
      %v455 = vunpack.c.l.b16 %v407
      %v456 = vunpack.c.l.b16 %v408
      %v457 = vunpack.c.l.b16 %v409
      %v458 = vunpack.c.l.b16 %v410
      %v459 = vunpack.c.l.b16 %v411
      %v460 = vunpack.c.l.b16 %v412
      %v461 = vunpack.c.l.b16 %v413
      %v462 = vunpack.c.l.b16 %v414
      %v463 = vunpack.c.l.b16 %v415
      %v464 = vunpack.c.l.b16 %v416
      %v465 = vunpack.c.l.b16 %v417
      %v466 = vunpack.c.l.b16 %v418
      %v467 = vunpack.c.l.b16 %v419
      %v468 = vunpack.c.l.b16 %v420
      %v469 = vpack.c.b16 %v454, %v453
      %v470 = vpack.c.b16 %v456, %v455
      %v471 = vpack.c.b16 %v458, %v457
      %v472 = vpack.c.b16 %v460, %v459
      %v473 = vpack.c.b16 %v462, %v461
      %v474 = vpack.c.b16 %v464, %v463
      %v475 = vpack.c.b16 %v466, %v465
      %v476 = vpack.c.b16 %v468, %v467
      %485 = vmatprep.subr.bf16.mxu0 0
      %486 = vmatpush1.bf16.msra.mxu0 %v469
      %487 = vmatprep.subr.bf16.mxu0 0
      %488 = vmatpush1.bf16.msra.mxu0 %v470
      %489 = vmatprep.subr.bf16.mxu0 0
      %490 = vmatpush1.bf16.msra.mxu0 %v471
      %491 = vmatprep.subr.bf16.mxu0 0
      %492 = vmatpush1.bf16.msra.mxu0 %v472
      %493 = vmatprep.subr.bf16.mxu0 0
      %494 = vmatpush1.bf16.msra.mxu0 %v473
      %495 = vmatprep.subr.bf16.mxu0 0
      %496 = vmatpush1.bf16.msra.mxu0 %v474
      %497 = vmatprep.subr.bf16.mxu0 0
      %498 = vmatpush1.bf16.msra.mxu0 %v475
      %499 = vmatprep.subr.bf16.mxu0 0
      %500 = vmatpush1.bf16.msra.mxu0 %v476
      %501 = vmatprep.subr.bf16.mxu0 0
      %502 = vmatpush1.bf16.msra.mxu0 0
      %503 = vmatprep.subr.bf16.mxu0 0
      %504 = vmatpush1.bf16.msra.mxu0 0
      %505 = vmatprep.subr.bf16.mxu0 0
      %506 = vmatpush1.bf16.msra.mxu0 0
      %507 = vmatprep.subr.bf16.mxu0 0
      %508 = vmatpush1.bf16.msra.mxu0 0
      %509 = vmatprep.subr.bf16.mxu0 0
      %510 = vmatpush1.bf16.msra.mxu0 0
      %511 = vmatprep.subr.bf16.mxu0 0
      %512 = vmatpush1.bf16.msra.mxu0 0
      %513 = vmatprep.subr.bf16.mxu0 0
      %514 = vmatpush1.bf16.msra.mxu0 0
      %515 = vmatprep.subr.bf16.mxu0 0
      %516 = vmatpush1.bf16.msra.mxu0 0
      %517 = vmatprep.mubr.bf16.mxu0 0
      %518 = vmatmul.mubr.bf16.gmra.mrb[0].mxu0 %v397
      %v519 = vpop.f32.mrb[0].mxu0
      %v520 = vadd.f32 %v421, %v519
      %v521 = vpop.f32.mrb[0].mxu0
      %v522 = vpop.f32.mrb[0].mxu0
      %v523 = vadd.f32 %v422, %v522
      %v524 = vpop.f32.mrb[0].mxu0
      %525 = vmatprep.mubr.bf16.mxu0 0
      %526 = vmatmul.mubr.bf16.gmra.mrb[0].mxu0 %v398
      %v527 = vpop.f32.mrb[0].mxu0
      %v528 = vadd.f32 %v423, %v527
      %v529 = vpop.f32.mrb[0].mxu0
      %v530 = vpop.f32.mrb[0].mxu0
      %v531 = vadd.f32 %v424, %v530
      %v532 = vpop.f32.mrb[0].mxu0
      %533 = vmatprep.mubr.bf16.mxu0 0
      %534 = vmatmul.mubr.bf16.gmra.mrb[0].mxu0 %v399
      %v535 = vpop.f32.mrb[0].mxu0
      %v536 = vadd.f32 %v425, %v535
      %v537 = vpop.f32.mrb[0].mxu0
      %v538 = vpop.f32.mrb[0].mxu0
      %v539 = vadd.f32 %v426, %v538
      %v540 = vpop.f32.mrb[0].mxu0
      %541 = vmatprep.mubr.bf16.mxu0 0
      %542 = vmatmul.mubr.bf16.gmra.mrb[0].mxu0 %v400
      %v543 = vpop.f32.mrb[0].mxu0
      %v544 = vadd.f32 %v427, %v543
      %v545 = vpop.f32.mrb[0].mxu0
      %v546 = vpop.f32.mrb[0].mxu0
      %v547 = vadd.f32 %v428, %v546
      %v548 = vpop.f32.mrb[0].mxu0
      %549 = vmatprep.mubr.bf16.mxu0 0
      %550 = vmatmul.mubr.bf16.gmra.mrb[0].mxu0 %v401
      %v551 = vpop.f32.mrb[0].mxu0
      %v552 = vadd.f32 %v429, %v551
      %v553 = vpop.f32.mrb[0].mxu0
      %v554 = vpop.f32.mrb[0].mxu0
      %v555 = vadd.f32 %v430, %v554
      %v556 = vpop.f32.mrb[0].mxu0
      %557 = vmatprep.mubr.bf16.mxu0 0
      %558 = vmatmul.mubr.bf16.gmra.mrb[0].mxu0 %v402
      %v559 = vpop.f32.mrb[0].mxu0
      %v560 = vadd.f32 %v431, %v559
      %v561 = vpop.f32.mrb[0].mxu0
      %v562 = vpop.f32.mrb[0].mxu0
      %v563 = vadd.f32 %v432, %v562
      %v564 = vpop.f32.mrb[0].mxu0
      %565 = vmatprep.mubr.bf16.mxu0 0
      %566 = vmatmul.mubr.bf16.gmra.mrb[0].mxu0 %v403
      %v567 = vpop.f32.mrb[0].mxu0
      %v568 = vadd.f32 %v433, %v567
      %v569 = vpop.f32.mrb[0].mxu0
      %v570 = vpop.f32.mrb[0].mxu0
      %v571 = vadd.f32 %v434, %v570
      %v572 = vpop.f32.mrb[0].mxu0
      %573 = vmatprep.mubr.bf16.mxu0 0
      %574 = vmatmul.mubr.bf16.gmra.mrb[0].mxu0 %v404
      %v575 = vpop.f32.mrb[0].mxu0
      %v576 = vadd.f32 %v435, %v575
      %v577 = vpop.f32.mrb[0].mxu0
      %v578 = vpop.f32.mrb[0].mxu0
      %v579 = vadd.f32 %v436, %v578
      %v580 = vpop.f32.mrb[0].mxu0
      %581 = vdwg.mxu0
      %v582 = vld [vmem:[%s372] sm:$0xff]
      %v583 = vld [vmem:[%s372 + $0x8] sm:$0xff]
      %v584 = vld [vmem:[%s372 + $0x10] sm:$0xff]
      %v585 = vld [vmem:[%s372 + $0x18] sm:$0xff]
      %v586 = vld [vmem:[%s372 + $0x20] sm:$0xff]
      %v587 = vld [vmem:[%s372 + $0x28] sm:$0xff]
      %v588 = vld [vmem:[%s372 + $0x30] sm:$0xff]
      %v589 = vld [vmem:[%s372 + $0x38] sm:$0xff]
      %v590 = vld [vmem:[%s372 + $0x40] sm:$0xff]
      %v591 = vld [vmem:[%s372 + $0x48] sm:$0xff]
      %v592 = vld [vmem:[%s372 + $0x50] sm:$0xff]
      %v593 = vld [vmem:[%s372 + $0x58] sm:$0xff]
      %v594 = vld [vmem:[%s372 + $0x60] sm:$0xff]
      %v595 = vld [vmem:[%s372 + $0x68] sm:$0xff]
      %v596 = vld [vmem:[%s372 + $0x70] sm:$0xff]
      %v597 = vld [vmem:[%s372 + $0x78] sm:$0xff]
      %v598 = vadd.f32 %v520, %v582
      %v599 = vadd.f32 %v523, %v583
      %v600 = vadd.f32 %v528, %v584
      %v601 = vadd.f32 %v531, %v585
      %v602 = vadd.f32 %v536, %v586
      %v603 = vadd.f32 %v539, %v587
      %v604 = vadd.f32 %v544, %v588
      %v605 = vadd.f32 %v547, %v589
      %v606 = vadd.f32 %v552, %v590
      %v607 = vadd.f32 %v555, %v591
      %v608 = vadd.f32 %v560, %v592
      %v609 = vadd.f32 %v563, %v593
      %v610 = vadd.f32 %v568, %v594
      %v611 = vadd.f32 %v571, %v595
      %v612 = vadd.f32 %v576, %v596
      %v613 = vadd.f32 %v579, %v597
      %v614 = vld [vmem:[%s4] sm:$0x1]
      %v616 = vlaneseq
      %v617 = vshrl.u32 %v616, 7
      %v618 = vsub.s32 0, %v617
      %v619 = vrot.slane %v614, %v618
      %v621 = vadd.f32 %v598, %v619
      %v622 = vadd.f32 %v599, %v619
      %v623 = vadd.f32 %v600, %v619
      %v624 = vadd.f32 %v601, %v619
      %v625 = vadd.f32 %v602, %v619
      %v626 = vadd.f32 %v603, %v619
      %v627 = vadd.f32 %v604, %v619
      %v628 = vadd.f32 %v605, %v619
      %v629 = vadd.f32 %v606, %v619
      %v630 = vadd.f32 %v607, %v619
      %v631 = vadd.f32 %v608, %v619
      %v632 = vadd.f32 %v609, %v619
      %v633 = vadd.f32 %v610, %v619
      %v634 = vadd.f32 %v611, %v619
      %v635 = vadd.f32 %v612, %v619
      %v636 = vadd.f32 %v613, %v619
      %v637 = vxor.u32 %v621, 2147483648
      %v638 = vxor.u32 %v622, 2147483648
      %v639 = vxor.u32 %v623, 2147483648
      %v640 = vxor.u32 %v624, 2147483648
      %v641 = vxor.u32 %v625, 2147483648
      %v642 = vxor.u32 %v626, 2147483648
      %v643 = vxor.u32 %v627, 2147483648
      %v644 = vxor.u32 %v628, 2147483648
      %v645 = vxor.u32 %v629, 2147483648
      %v646 = vxor.u32 %v630, 2147483648
      %v647 = vxor.u32 %v631, 2147483648
      %v648 = vxor.u32 %v632, 2147483648
      %v649 = vxor.u32 %v633, 2147483648
      %v650 = vxor.u32 %v634, 2147483648
      %v651 = vxor.u32 %v635, 2147483648
      %v652 = vxor.u32 %v636, 2147483648
      %v653 = vmul.f32 %v637, 1.442695
      %v654 = vpow.pop %v653
      %v655 = vmul.f32 %v638, 1.442695
      %v656 = vpow.pop %v655
      %v657 = vmul.f32 %v639, 1.442695
      %v658 = vpow.pop %v657
      %v659 = vmul.f32 %v640, 1.442695
      %v660 = vpow.pop %v659
      %v661 = vmul.f32 %v641, 1.442695
      %v662 = vpow.pop %v661
      %v663 = vmul.f32 %v642, 1.442695
      %v664 = vpow.pop %v663
      %v665 = vmul.f32 %v643, 1.442695
      %v666 = vpow.pop %v665
      %v667 = vmul.f32 %v644, 1.442695
      %v668 = vpow.pop %v667
      %v669 = vmul.f32 %v645, 1.442695
      %v670 = vpow.pop %v669
      %v671 = vmul.f32 %v646, 1.442695
      %v672 = vpow.pop %v671
      %v673 = vmul.f32 %v647, 1.442695
      %v674 = vpow.pop %v673
      %v675 = vmul.f32 %v648, 1.442695
      %v676 = vpow.pop %v675
      %v677 = vmul.f32 %v649, 1.442695
      %v678 = vpow.pop %v677
      %v679 = vmul.f32 %v650, 1.442695
      %v680 = vpow.pop %v679
      %v681 = vmul.f32 %v651, 1.442695
      %v682 = vpow.pop %v681
      %v683 = vmul.f32 %v652, 1.442695
      %v684 = vpow.pop %v683
      %v685 = vadd.f32 %v654, 1.0
      %v686 = vadd.f32 %v656, 1.0
      %v687 = vadd.f32 %v658, 1.0
      %v688 = vadd.f32 %v660, 1.0
      %v689 = vadd.f32 %v662, 1.0
      %v690 = vadd.f32 %v664, 1.0
      %v691 = vadd.f32 %v666, 1.0
      %v692 = vadd.f32 %v668, 1.0
      %v693 = vadd.f32 %v670, 1.0
      %v694 = vadd.f32 %v672, 1.0
      %v695 = vadd.f32 %v674, 1.0
      %v696 = vadd.f32 %v676, 1.0
      %v697 = vadd.f32 %v678, 1.0
      %v698 = vadd.f32 %v680, 1.0
      %v699 = vadd.f32 %v682, 1.0
      %v700 = vadd.f32 %v684, 1.0
      %v701 = vrcp.pop %v685
      %v702 = vmul.f32 1.0, %v701
      %v703 = vrcp.pop %v686
      %v704 = vmul.f32 1.0, %v703
      %v705 = vrcp.pop %v687
      %v706 = vmul.f32 1.0, %v705
      %v707 = vrcp.pop %v688
      %v708 = vmul.f32 1.0, %v707
      %v709 = vrcp.pop %v689
      %v710 = vmul.f32 1.0, %v709
      %v711 = vrcp.pop %v690
      %v712 = vmul.f32 1.0, %v711
      %v713 = vrcp.pop %v691
      %v714 = vmul.f32 1.0, %v713
      %v715 = vrcp.pop %v692
      %v716 = vmul.f32 1.0, %v715
      %v717 = vrcp.pop %v693
      %v718 = vmul.f32 1.0, %v717
      %v719 = vrcp.pop %v694
      %v720 = vmul.f32 1.0, %v719
      %v721 = vrcp.pop %v695
      %v722 = vmul.f32 1.0, %v721
      %v723 = vrcp.pop %v696
      %v724 = vmul.f32 1.0, %v723
      %v725 = vrcp.pop %v697
      %v726 = vmul.f32 1.0, %v725
      %v727 = vrcp.pop %v698
      %v728 = vmul.f32 1.0, %v727
      %v729 = vrcp.pop %v699
      %v730 = vmul.f32 1.0, %v729
      %v731 = vrcp.pop %v700
      %v732 = vmul.f32 1.0, %v731
      %v733 = vmul.f32 %v621, %v702
      %v734 = vmul.f32 %v622, %v704
      %v735 = vmul.f32 %v623, %v706
      %v736 = vmul.f32 %v624, %v708
      %v737 = vmul.f32 %v625, %v710
      %v738 = vmul.f32 %v626, %v712
      %v739 = vmul.f32 %v627, %v714
      %v740 = vmul.f32 %v628, %v716
      %v741 = vmul.f32 %v629, %v718
      %v742 = vmul.f32 %v630, %v720
      %v743 = vmul.f32 %v631, %v722
      %v744 = vmul.f32 %v632, %v724
      %v745 = vmul.f32 %v633, %v726
      %v746 = vmul.f32 %v634, %v728
      %v747 = vmul.f32 %v635, %v730
      %v748 = vmul.f32 %v636, %v732
      %v749 = vpack.c.bf16 %v734, %v733
      %v750 = vpack.c.bf16 %v736, %v735
      %v751 = vpack.c.bf16 %v738, %v737
      %v752 = vpack.c.bf16 %v740, %v739
      %v753 = vpack.c.bf16 %v742, %v741
      %v754 = vpack.c.bf16 %v744, %v743
      %v755 = vpack.c.bf16 %v746, %v745
      %v756 = vpack.c.bf16 %v748, %v747
      %v757 = vld [vmem:[%s5] sm:$0xf]
      %v758 = vld [vmem:[%s5 + $0x4] sm:$0xf]
      %v759 = vld [vmem:[%s5 + $0x8] sm:$0xf]
      %v760 = vld [vmem:[%s5 + $0xc] sm:$0xf]
      %v761 = vld [vmem:[%s5 + $0x10] sm:$0xf]
      %v762 = vld [vmem:[%s5 + $0x14] sm:$0xf]
      %v763 = vld [vmem:[%s5 + $0x18] sm:$0xf]
      %v764 = vld [vmem:[%s5 + $0x1c] sm:$0xf]
      %v765 = vld [vmem:[%s5 + $0x20] sm:$0xf]
      %v766 = vld [vmem:[%s5 + $0x24] sm:$0xf]
      %v767 = vld [vmem:[%s5 + $0x28] sm:$0xf]
      %v768 = vld [vmem:[%s5 + $0x2c] sm:$0xf]
      %v769 = vld [vmem:[%s5 + $0x30] sm:$0xf]
      %v770 = vld [vmem:[%s5 + $0x34] sm:$0xf]
      %v771 = vld [vmem:[%s5 + $0x38] sm:$0xf]
      %v772 = vld [vmem:[%s5 + $0x3c] sm:$0xf]
      %v773 = vld [vmem:[%s6] sm:$0x1]
      %v775 = vlaneseq
      %v776 = vshrl.u32 %v775, 7
      %v777 = vsub.s32 0, %v776
      %v778 = vrot.slane %v773, %v777
      %v796 = vunpack.c.l.b16 %v757
      %v797 = vunpack.c.l.b16 %v758
      %v798 = vunpack.c.l.b16 %v759
      %v799 = vunpack.c.l.b16 %v760
      %v800 = vunpack.c.l.b16 %v761
      %v801 = vunpack.c.l.b16 %v762
      %v802 = vunpack.c.l.b16 %v763
      %v803 = vunpack.c.l.b16 %v764
      %v804 = vunpack.c.l.b16 %v765
      %v805 = vunpack.c.l.b16 %v766
      %v806 = vunpack.c.l.b16 %v767
      %v807 = vunpack.c.l.b16 %v768
      %v808 = vunpack.c.l.b16 %v769
      %v809 = vunpack.c.l.b16 %v770
      %v810 = vunpack.c.l.b16 %v771
      %v811 = vunpack.c.l.b16 %v772
      %v812 = vpack.c.b16 %v797, %v796
      %v813 = vpack.c.b16 %v799, %v798
      %v814 = vpack.c.b16 %v801, %v800
      %v815 = vpack.c.b16 %v803, %v802
      %v816 = vpack.c.b16 %v805, %v804
      %v817 = vpack.c.b16 %v807, %v806
      %v818 = vpack.c.b16 %v809, %v808
      %v819 = vpack.c.b16 %v811, %v810
      %828 = vmatprep.subr.bf16.mxu0 0
      %829 = vmatpush1.bf16.msra.mxu0 %v812
      %830 = vmatprep.subr.bf16.mxu0 0
      %831 = vmatpush1.bf16.msra.mxu0 %v813
      %832 = vmatprep.subr.bf16.mxu0 0
      %833 = vmatpush1.bf16.msra.mxu0 %v814
      %834 = vmatprep.subr.bf16.mxu0 0
      %835 = vmatpush1.bf16.msra.mxu0 %v815
      %836 = vmatprep.subr.bf16.mxu0 0
      %837 = vmatpush1.bf16.msra.mxu0 %v816
      %838 = vmatprep.subr.bf16.mxu0 0
      %839 = vmatpush1.bf16.msra.mxu0 %v817
      %840 = vmatprep.subr.bf16.mxu0 0
      %841 = vmatpush1.bf16.msra.mxu0 %v818
      %842 = vmatprep.subr.bf16.mxu0 0
      %843 = vmatpush1.bf16.msra.mxu0 %v819
      %844 = vmatprep.subr.bf16.mxu0 0
      %845 = vmatpush1.bf16.msra.mxu0 0
      %846 = vmatprep.subr.bf16.mxu0 0
      %847 = vmatpush1.bf16.msra.mxu0 0
      %848 = vmatprep.subr.bf16.mxu0 0
      %849 = vmatpush1.bf16.msra.mxu0 0
      %850 = vmatprep.subr.bf16.mxu0 0
      %851 = vmatpush1.bf16.msra.mxu0 0
      %852 = vmatprep.subr.bf16.mxu0 0
      %853 = vmatpush1.bf16.msra.mxu0 0
      %854 = vmatprep.subr.bf16.mxu0 0
      %855 = vmatpush1.bf16.msra.mxu0 0
      %856 = vmatprep.subr.bf16.mxu0 0
      %857 = vmatpush1.bf16.msra.mxu0 0
      %858 = vmatprep.subr.bf16.mxu0 0
      %859 = vmatpush1.bf16.msra.mxu0 0
      %860 = vmatprep.mubr.bf16.mxu0 0
      %861 = vmatmul.mubr.bf16.gmra.mrb[0].mxu0 %v749
      %v862 = vpop.f32.mrb[0].mxu0
      %v863 = vadd.f32 %v778, %v862
      %v864 = vpop.f32.mrb[0].mxu0
      %v865 = vpop.f32.mrb[0].mxu0
      %v866 = vadd.f32 %v778, %v865
      %v867 = vpop.f32.mrb[0].mxu0
      %868 = vmatprep.mubr.bf16.mxu0 0
      %869 = vmatmul.mubr.bf16.gmra.mrb[0].mxu0 %v750
      %v870 = vpop.f32.mrb[0].mxu0
      %v871 = vadd.f32 %v778, %v870
      %v872 = vpop.f32.mrb[0].mxu0
      %v873 = vpop.f32.mrb[0].mxu0
      %v874 = vadd.f32 %v778, %v873
      %v875 = vpop.f32.mrb[0].mxu0
      %876 = vmatprep.mubr.bf16.mxu0 0
      %877 = vmatmul.mubr.bf16.gmra.mrb[0].mxu0 %v751
      %v878 = vpop.f32.mrb[0].mxu0
      %v879 = vadd.f32 %v778, %v878
      %v880 = vpop.f32.mrb[0].mxu0
      %v881 = vpop.f32.mrb[0].mxu0
      %v882 = vadd.f32 %v778, %v881
      %v883 = vpop.f32.mrb[0].mxu0
      %884 = vmatprep.mubr.bf16.mxu0 0
      %885 = vmatmul.mubr.bf16.gmra.mrb[0].mxu0 %v752
      %v886 = vpop.f32.mrb[0].mxu0
      %v887 = vadd.f32 %v778, %v886
      %v888 = vpop.f32.mrb[0].mxu0
      %v889 = vpop.f32.mrb[0].mxu0
      %v890 = vadd.f32 %v778, %v889
      %v891 = vpop.f32.mrb[0].mxu0
      %892 = vmatprep.mubr.bf16.mxu0 0
      %893 = vmatmul.mubr.bf16.gmra.mrb[0].mxu0 %v753
      %v894 = vpop.f32.mrb[0].mxu0
      %v895 = vadd.f32 %v778, %v894
      %v896 = vpop.f32.mrb[0].mxu0
      %v897 = vpop.f32.mrb[0].mxu0
      %v898 = vadd.f32 %v778, %v897
      %v899 = vpop.f32.mrb[0].mxu0
      %900 = vmatprep.mubr.bf16.mxu0 0
      %901 = vmatmul.mubr.bf16.gmra.mrb[0].mxu0 %v754
      %v902 = vpop.f32.mrb[0].mxu0
      %v903 = vadd.f32 %v778, %v902
      %v904 = vpop.f32.mrb[0].mxu0
      %v905 = vpop.f32.mrb[0].mxu0
      %v906 = vadd.f32 %v778, %v905
      %v907 = vpop.f32.mrb[0].mxu0
      %908 = vmatprep.mubr.bf16.mxu0 0
      %909 = vmatmul.mubr.bf16.gmra.mrb[0].mxu0 %v755
      %v910 = vpop.f32.mrb[0].mxu0
      %v911 = vadd.f32 %v778, %v910
      %v912 = vpop.f32.mrb[0].mxu0
      %v913 = vpop.f32.mrb[0].mxu0
      %v914 = vadd.f32 %v778, %v913
      %v915 = vpop.f32.mrb[0].mxu0
      %916 = vmatprep.mubr.bf16.mxu0 0
      %917 = vmatmul.mubr.bf16.gmra.mrb[0].mxu0 %v756
      %v918 = vpop.f32.mrb[0].mxu0
      %v919 = vadd.f32 %v778, %v918
      %v920 = vpop.f32.mrb[0].mxu0
      %v921 = vpop.f32.mrb[0].mxu0
      %v922 = vadd.f32 %v778, %v921
      %v923 = vpop.f32.mrb[0].mxu0
      %924 = vdwg.mxu0
      %925 = vadd.xlane.f32.xlu0 %v863
      %v926 = vpop.xlane.xlu0 %925
      %927 = vadd.xlane.f32.xlu0 %v866
      %v928 = vpop.xlane.xlu0 %927
      %929 = vadd.xlane.f32.xlu0 %v871
      %v930 = vpop.xlane.xlu0 %929
      %931 = vadd.xlane.f32.xlu0 %v874
      %v932 = vpop.xlane.xlu0 %931
      %933 = vadd.xlane.f32.xlu0 %v879
      %v934 = vpop.xlane.xlu0 %933
      %935 = vadd.xlane.f32.xlu0 %v882
      %v936 = vpop.xlane.xlu0 %935
      %937 = vadd.xlane.f32.xlu0 %v887
      %v938 = vpop.xlane.xlu0 %937
      %939 = vadd.xlane.f32.xlu0 %v890
      %v940 = vpop.xlane.xlu0 %939
      %941 = vadd.xlane.f32.xlu0 %v895
      %v942 = vpop.xlane.xlu0 %941
      %943 = vadd.xlane.f32.xlu0 %v898
      %v944 = vpop.xlane.xlu0 %943
      %945 = vadd.xlane.f32.xlu0 %v903
      %v946 = vpop.xlane.xlu0 %945
      %947 = vadd.xlane.f32.xlu0 %v906
      %v948 = vpop.xlane.xlu0 %947
      %949 = vadd.xlane.f32.xlu0 %v911
      %v950 = vpop.xlane.xlu0 %949
      %951 = vadd.xlane.f32.xlu0 %v914
      %v952 = vpop.xlane.xlu0 %951
      %953 = vadd.xlane.f32.xlu0 %v919
      %v954 = vpop.xlane.xlu0 %953
      %955 = vadd.xlane.f32.xlu0 %v922
      %v956 = vpop.xlane.xlu0 %955
      %v957 = vrcp.pop 128.0
      %v958 = vmul.f32 %v926, %v957
      %v959 = vmul.f32 %v928, %v957
      %v960 = vmul.f32 %v930, %v957
      %v961 = vmul.f32 %v932, %v957
      %v962 = vmul.f32 %v934, %v957
      %v963 = vmul.f32 %v936, %v957
      %v964 = vmul.f32 %v938, %v957
      %v965 = vmul.f32 %v940, %v957
      %v966 = vmul.f32 %v942, %v957
      %v967 = vmul.f32 %v944, %v957
      %v968 = vmul.f32 %v946, %v957
      %v969 = vmul.f32 %v948, %v957
      %v970 = vmul.f32 %v950, %v957
      %v971 = vmul.f32 %v952, %v957
      %v972 = vmul.f32 %v954, %v957
      %v973 = vmul.f32 %v956, %v957
      %v974 = vmul.f32 %v863, %v863
      %v975 = vmul.f32 %v866, %v866
      %v976 = vmul.f32 %v871, %v871
      %v977 = vmul.f32 %v874, %v874
      %v978 = vmul.f32 %v879, %v879
      %v979 = vmul.f32 %v882, %v882
      %v980 = vmul.f32 %v887, %v887
      %v981 = vmul.f32 %v890, %v890
      %v982 = vmul.f32 %v895, %v895
      %v983 = vmul.f32 %v898, %v898
      %v984 = vmul.f32 %v903, %v903
      %v985 = vmul.f32 %v906, %v906
      %v986 = vmul.f32 %v911, %v911
      %v987 = vmul.f32 %v914, %v914
      %v988 = vmul.f32 %v919, %v919
      %v989 = vmul.f32 %v922, %v922
      %990 = vadd.xlane.f32.xlu0 %v974
      %v991 = vpop.xlane.xlu0 %990
      %992 = vadd.xlane.f32.xlu0 %v975
      %v993 = vpop.xlane.xlu0 %992
      %994 = vadd.xlane.f32.xlu0 %v976
      %v995 = vpop.xlane.xlu0 %994
      %996 = vadd.xlane.f32.xlu0 %v977
      %v997 = vpop.xlane.xlu0 %996
      %998 = vadd.xlane.f32.xlu0 %v978
      %v999 = vpop.xlane.xlu0 %998
      %1000 = vadd.xlane.f32.xlu0 %v979
      %v1001 = vpop.xlane.xlu0 %1000
      %1002 = vadd.xlane.f32.xlu0 %v980
      %v1003 = vpop.xlane.xlu0 %1002
      %1004 = vadd.xlane.f32.xlu0 %v981
      %v1005 = vpop.xlane.xlu0 %1004
      %1006 = vadd.xlane.f32.xlu0 %v982
      %v1007 = vpop.xlane.xlu0 %1006
      %1008 = vadd.xlane.f32.xlu0 %v983
      %v1009 = vpop.xlane.xlu0 %1008
      %1010 = vadd.xlane.f32.xlu0 %v984
      %v1011 = vpop.xlane.xlu0 %1010
      %1012 = vadd.xlane.f32.xlu0 %v985
      %v1013 = vpop.xlane.xlu0 %1012
      %1014 = vadd.xlane.f32.xlu0 %v986
      %v1015 = vpop.xlane.xlu0 %1014
      %1016 = vadd.xlane.f32.xlu0 %v987
      %v1017 = vpop.xlane.xlu0 %1016
      %1018 = vadd.xlane.f32.xlu0 %v988
      %v1019 = vpop.xlane.xlu0 %1018
      %1020 = vadd.xlane.f32.xlu0 %v989
      %v1021 = vpop.xlane.xlu0 %1020
      %v1022 = vmul.f32 %v991, %v957
      %v1023 = vmul.f32 %v993, %v957
      %v1024 = vmul.f32 %v995, %v957
      %v1025 = vmul.f32 %v997, %v957
      %v1026 = vmul.f32 %v999, %v957
      %v1027 = vmul.f32 %v1001, %v957
      %v1028 = vmul.f32 %v1003, %v957
      %v1029 = vmul.f32 %v1005, %v957
      %v1030 = vmul.f32 %v1007, %v957
      %v1031 = vmul.f32 %v1009, %v957
      %v1032 = vmul.f32 %v1011, %v957
      %v1033 = vmul.f32 %v1013, %v957
      %v1034 = vmul.f32 %v1015, %v957
      %v1035 = vmul.f32 %v1017, %v957
      %v1036 = vmul.f32 %v1019, %v957
      %v1037 = vmul.f32 %v1021, %v957
      %v1038 = vmul.f32 %v958, %v958
      %v1039 = vmul.f32 %v959, %v959
      %v1040 = vmul.f32 %v960, %v960
      %v1041 = vmul.f32 %v961, %v961
      %v1042 = vmul.f32 %v962, %v962
      %v1043 = vmul.f32 %v963, %v963
      %v1044 = vmul.f32 %v964, %v964
      %v1045 = vmul.f32 %v965, %v965
      %v1046 = vmul.f32 %v966, %v966
      %v1047 = vmul.f32 %v967, %v967
      %v1048 = vmul.f32 %v968, %v968
      %v1049 = vmul.f32 %v969, %v969
      %v1050 = vmul.f32 %v970, %v970
      %v1051 = vmul.f32 %v971, %v971
      %v1052 = vmul.f32 %v972, %v972
      %v1053 = vmul.f32 %v973, %v973
      %v1054 = vsub.f32 %v1022, %v1038
      %v1055 = vsub.f32 %v1023, %v1039
      %v1056 = vsub.f32 %v1024, %v1040
      %v1057 = vsub.f32 %v1025, %v1041
      %v1058 = vsub.f32 %v1026, %v1042
      %v1059 = vsub.f32 %v1027, %v1043
      %v1060 = vsub.f32 %v1028, %v1044
      %v1061 = vsub.f32 %v1029, %v1045
      %v1062 = vsub.f32 %v1030, %v1046
      %v1063 = vsub.f32 %v1031, %v1047
      %v1064 = vsub.f32 %v1032, %v1048
      %v1065 = vsub.f32 %v1033, %v1049
      %v1066 = vsub.f32 %v1034, %v1050
      %v1067 = vsub.f32 %v1035, %v1051
      %v1068 = vsub.f32 %v1036, %v1052
      %v1069 = vsub.f32 %v1037, %v1053
      %v1070 = vsub.f32 %v863, %v958
      %v1071 = vsub.f32 %v866, %v959
      %v1072 = vsub.f32 %v871, %v960
      %v1073 = vsub.f32 %v874, %v961
      %v1074 = vsub.f32 %v879, %v962
      %v1075 = vsub.f32 %v882, %v963
      %v1076 = vsub.f32 %v887, %v964
      %v1077 = vsub.f32 %v890, %v965
      %v1078 = vsub.f32 %v895, %v966
      %v1079 = vsub.f32 %v898, %v967
      %v1080 = vsub.f32 %v903, %v968
      %v1081 = vsub.f32 %v906, %v969
      %v1082 = vsub.f32 %v911, %v970
      %v1083 = vsub.f32 %v914, %v971
      %v1084 = vsub.f32 %v919, %v972
      %v1085 = vsub.f32 %v922, %v973
      %v1086 = vadd.f32 %v1054, 1e-05
      %v1087 = vadd.f32 %v1055, 1e-05
      %v1088 = vadd.f32 %v1056, 1e-05
      %v1089 = vadd.f32 %v1057, 1e-05
      %v1090 = vadd.f32 %v1058, 1e-05
      %v1091 = vadd.f32 %v1059, 1e-05
      %v1092 = vadd.f32 %v1060, 1e-05
      %v1093 = vadd.f32 %v1061, 1e-05
      %v1094 = vadd.f32 %v1062, 1e-05
      %v1095 = vadd.f32 %v1063, 1e-05
      %v1096 = vadd.f32 %v1064, 1e-05
      %v1097 = vadd.f32 %v1065, 1e-05
      %v1098 = vadd.f32 %v1066, 1e-05
      %v1099 = vadd.f32 %v1067, 1e-05
      %v1100 = vadd.f32 %v1068, 1e-05
      %v1101 = vadd.f32 %v1069, 1e-05
      %v1102 = vrsqrt.pop %v1086
      %v1103 = vrsqrt.pop %v1087
      %v1104 = vrsqrt.pop %v1088
      %v1105 = vrsqrt.pop %v1089
      %v1106 = vrsqrt.pop %v1090
      %v1107 = vrsqrt.pop %v1091
      %v1108 = vrsqrt.pop %v1092
      %v1109 = vrsqrt.pop %v1093
      %v1110 = vrsqrt.pop %v1094
      %v1111 = vrsqrt.pop %v1095
      %v1112 = vrsqrt.pop %v1096
      %v1113 = vrsqrt.pop %v1097
      %v1114 = vrsqrt.pop %v1098
      %v1115 = vrsqrt.pop %v1099
      %v1116 = vrsqrt.pop %v1100
      %v1117 = vrsqrt.pop %v1101
      %v1118 = vmul.f32 %v1070, %v1102
      %v1119 = vmul.f32 %v1071, %v1103
      %v1120 = vmul.f32 %v1072, %v1104
      %v1121 = vmul.f32 %v1073, %v1105
      %v1122 = vmul.f32 %v1074, %v1106
      %v1123 = vmul.f32 %v1075, %v1107
      %v1124 = vmul.f32 %v1076, %v1108
      %v1125 = vmul.f32 %v1077, %v1109
      %v1126 = vmul.f32 %v1078, %v1110
      %v1127 = vmul.f32 %v1079, %v1111
      %v1128 = vmul.f32 %v1080, %v1112
      %v1129 = vmul.f32 %v1081, %v1113
      %v1130 = vmul.f32 %v1082, %v1114
      %v1131 = vmul.f32 %v1083, %v1115
      %v1132 = vmul.f32 %v1084, %v1116
      %v1133 = vmul.f32 %v1085, %v1117
      %v1134 = vld [vmem:[%s7] sm:$0x1]
      %v1136 = vlaneseq
      %v1137 = vshrl.u32 %v1136, 7
      %v1138 = vsub.s32 0, %v1137
      %v1139 = vrot.slane %v1134, %v1138
      %v1141 = vmul.f32 %v1118, %v1139
      %v1142 = vmul.f32 %v1119, %v1139
      %v1143 = vmul.f32 %v1120, %v1139
      %v1144 = vmul.f32 %v1121, %v1139
      %v1145 = vmul.f32 %v1122, %v1139
      %v1146 = vmul.f32 %v1123, %v1139
      %v1147 = vmul.f32 %v1124, %v1139
      %v1148 = vmul.f32 %v1125, %v1139
      %v1149 = vmul.f32 %v1126, %v1139
      %v1150 = vmul.f32 %v1127, %v1139
      %v1151 = vmul.f32 %v1128, %v1139
      %v1152 = vmul.f32 %v1129, %v1139
      %v1153 = vmul.f32 %v1130, %v1139
      %v1154 = vmul.f32 %v1131, %v1139
      %v1155 = vmul.f32 %v1132, %v1139
      %v1156 = vmul.f32 %v1133, %v1139
      %v1157 = vld [vmem:[%s8] sm:$0x1]
      %v1159 = vlaneseq
      %v1160 = vshrl.u32 %v1159, 7
      %v1161 = vsub.s32 0, %v1160
      %v1162 = vrot.slane %v1157, %v1161
      %v1164 = vadd.f32 %v1141, %v1162
      %v1165 = vadd.f32 %v1142, %v1162
      %v1166 = vadd.f32 %v1143, %v1162
      %v1167 = vadd.f32 %v1144, %v1162
      %v1168 = vadd.f32 %v1145, %v1162
      %v1169 = vadd.f32 %v1146, %v1162
      %v1170 = vadd.f32 %v1147, %v1162
      %v1171 = vadd.f32 %v1148, %v1162
      %v1172 = vadd.f32 %v1149, %v1162
      %v1173 = vadd.f32 %v1150, %v1162
      %v1174 = vadd.f32 %v1151, %v1162
      %v1175 = vadd.f32 %v1152, %v1162
      %v1176 = vadd.f32 %v1153, %v1162
      %v1177 = vadd.f32 %v1154, %v1162
      %v1178 = vadd.f32 %v1155, %v1162
      %v1179 = vadd.f32 %v1156, %v1162
      %v1180 = vadd.f32 %v1164, %v381
      %v1181 = vadd.f32 %v1165, %v382
      %v1182 = vadd.f32 %v1166, %v383
      %v1183 = vadd.f32 %v1167, %v384
      %v1184 = vadd.f32 %v1168, %v385
      %v1185 = vadd.f32 %v1169, %v386
      %v1186 = vadd.f32 %v1170, %v387
      %v1187 = vadd.f32 %v1171, %v388
      %v1188 = vadd.f32 %v1172, %v389
      %v1189 = vadd.f32 %v1173, %v390
      %v1190 = vadd.f32 %v1174, %v391
      %v1191 = vadd.f32 %v1175, %v392
      %v1192 = vadd.f32 %v1176, %v393
      %v1193 = vadd.f32 %v1177, %v394
      %v1194 = vadd.f32 %v1178, %v395
      %v1195 = vadd.f32 %v1179, %v396
      %1196 = vst [vmem:[%s378] sm:$0xff] %v1180
      %1197 = vst [vmem:[%s378 + $0x8] sm:$0xff] %v1181
      %1198 = vst [vmem:[%s378 + $0x10] sm:$0xff] %v1182
      %1199 = vst [vmem:[%s378 + $0x18] sm:$0xff] %v1183
      %1200 = vst [vmem:[%s378 + $0x20] sm:$0xff] %v1184
      %1201 = vst [vmem:[%s378 + $0x28] sm:$0xff] %v1185
      %1202 = vst [vmem:[%s378 + $0x30] sm:$0xff] %v1186
      %1203 = vst [vmem:[%s378 + $0x38] sm:$0xff] %v1187
      %1204 = vst [vmem:[%s378 + $0x40] sm:$0xff] %v1188
      %1205 = vst [vmem:[%s378 + $0x48] sm:$0xff] %v1189
      %1206 = vst [vmem:[%s378 + $0x50] sm:$0xff] %v1190
      %1207 = vst [vmem:[%s378 + $0x58] sm:$0xff] %v1191
      %1208 = vst [vmem:[%s378 + $0x60] sm:$0xff] %v1192
      %1209 = vst [vmem:[%s378 + $0x68] sm:$0xff] %v1193
      %1210 = vst [vmem:[%s378 + $0x70] sm:$0xff] %v1194
      %1211 = vst [vmem:[%s378 + $0x78] sm:$0xff] %v1195
      %s1212 = smul.u32 16, %s20
      %p1213 = scmp.lt.s32.totalorder %s1212, 63
      %s1214 = scalar_select %p1213, %s1212, 63
      %s1215 = smul.addr %s1214, 8
      %s1216 = scalar_lea.vmem %s9, %s1215
      // Predicated region
      $region57: #{graphcast_processor_forward.7} parent=55 // pred_check
        %p1217 = pneg %p242
      $region58: #{graphcast_processor_forward.7} parent=55 // pred_check_branch
        %1219 = sbr.rel (%p1217) target = $region60
      $region59: #{graphcast_processor_forward.7} parent=55 // pred_region
        %s1220 = smul.u32 16, %s20
      $region60: #{graphcast_processor_forward.7} parent=55 // pred_fallthru
        _
    $region56: #{graphcast_processor_forward.7} parent=5 // pred_fallthru
      _
    %p1221 = scmp.le.s32.totalorder 2, %s15
    // Predicated region
    $region61: #{graphcast_processor_forward.7} parent=5 // pred_check
      %p1222 = pneg %p1221
    $region62: #{graphcast_processor_forward.7} parent=5 // pred_check_branch
      %1224 = sbr.rel (%p1222) target = $region64
    $region63: #{graphcast_processor_forward.7} parent=5 // pred_region
      %s1225 = ssub.s32 %s15, 2
      // Predicated region
      $region65: #{graphcast_processor_forward.7} parent=63 // pred_check
        %p1226 = pneg %p248
      $region66: #{graphcast_processor_forward.7} parent=63 // pred_check_branch
        %1228 = sbr.rel (%p1226) target = $region68
      $region67: #{graphcast_processor_forward.7} parent=63 // pred_region
        %s1229 = smul.u32 16, %s21
        %p1230 = scmp.lt.s32.totalorder %s1229, 63
        %s1231 = scalar_select %p1230, %s1229, 63
        %s1232 = smul.addr %s1231, 8
        %s1233 = scalar_lea.vmem %s9, %s1232
      $region68: #{graphcast_processor_forward.7} parent=63 // pred_fallthru
        _
    $region64: #{graphcast_processor_forward.7} parent=5 // pred_fallthru
      _
  $region6: #{graphcast_processor_forward.7} parent=0 // loop_footer
    %s19 = sadd.s32 1, %s15
  $region7: #{graphcast_processor_forward.7} parent=0 // loop_footer_branch
    %14 = sbr.rel target = $region3
  $region8: #{graphcast_processor_forward.7} parent=0 // loop_exit
    _

// kernel: graphcast_processor_forward.9
$region0: #{graphcast_processor_forward.9}
  #allocation0 [shape = 'u32[]', space=smem, size = 0x4, offset = 0x4, fixed_abs, tag = 'smem constant byte address 0x4 - core index']
  #allocation1 [shape = 'u32[144,128]{1,0:T(1,128)}', space=vmem, size = 0x12000, scoped, tag = 'internal scratch']
  %s0 = inlined_call_operand.vmem [shape: f32[256,128], index: 0, kind: input, shape index: {}]
  %s1 = inlined_call_operand.vmem [shape: bf16[128,256], index: 1, kind: input, shape index: {}]
  %s2 = inlined_call_operand.vmem [shape: f32[256,256], index: 2, kind: output, shape index: {}]
  %s3 = sld [smem:[#allocation0]]
  $region18: #{graphcast_processor_forward.9} parent=0
    _
  %s5 = ssub.s32 1, %s3
  %s6 = scalar_select 0, %s5, %s3
  // Predicated region
  $region2: #{graphcast_processor_forward.9} parent=0 // pred_check
    _
  $region3: #{graphcast_processor_forward.9} parent=0 // pred_check_branch
    %8 = sbr.rel (0) target = $region5
  $region4: #{graphcast_processor_forward.9} parent=0 // pred_region
    _
  $region5: #{graphcast_processor_forward.9} parent=0 // pred_fallthru
    _
  // Predicated region
  $region6: #{graphcast_processor_forward.9} parent=0 // pred_check
    _
  $region7: #{graphcast_processor_forward.9} parent=0 // pred_check_branch
    %10 = sbr.rel (0) target = $region9
  $region8: #{graphcast_processor_forward.9} parent=0 // pred_region
    _
  $region9: #{graphcast_processor_forward.9} parent=0 // pred_fallthru
    _
  %v12 = vld [vmem:[%s0] sm:$0xff]
  %v13 = vld [vmem:[%s0 + $0x8] sm:$0xff]
  %v14 = vld [vmem:[%s0 + $0x10] sm:$0xff]
  %v15 = vld [vmem:[%s0 + $0x18] sm:$0xff]
  %v16 = vld [vmem:[%s0 + $0x20] sm:$0xff]
  %v17 = vld [vmem:[%s0 + $0x28] sm:$0xff]
  %v18 = vld [vmem:[%s0 + $0x30] sm:$0xff]
  %v19 = vld [vmem:[%s0 + $0x38] sm:$0xff]
  %v20 = vld [vmem:[%s0 + $0x40] sm:$0xff]
  %v21 = vld [vmem:[%s0 + $0x48] sm:$0xff]
  %v22 = vld [vmem:[%s0 + $0x50] sm:$0xff]
  %v23 = vld [vmem:[%s0 + $0x58] sm:$0xff]
  %v24 = vld [vmem:[%s0 + $0x60] sm:$0xff]
  %v25 = vld [vmem:[%s0 + $0x68] sm:$0xff]
  %v26 = vld [vmem:[%s0 + $0x70] sm:$0xff]
  %v27 = vld [vmem:[%s0 + $0x78] sm:$0xff]
  %v28 = vld [vmem:[%s0 + $0x80] sm:$0xff]
  %v29 = vld [vmem:[%s0 + $0x88] sm:$0xff]
  %v30 = vld [vmem:[%s0 + $0x90] sm:$0xff]
  %v31 = vld [vmem:[%s0 + $0x98] sm:$0xff]
  %v32 = vld [vmem:[%s0 + $0xa0] sm:$0xff]
  %v33 = vld [vmem:[%s0 + $0xa8] sm:$0xff]
  %v34 = vld [vmem:[%s0 + $0xb0] sm:$0xff]
  %v35 = vld [vmem:[%s0 + $0xb8] sm:$0xff]
  %v36 = vld [vmem:[%s0 + $0xc0] sm:$0xff]
  %v37 = vld [vmem:[%s0 + $0xc8] sm:$0xff]
  %v38 = vld [vmem:[%s0 + $0xd0] sm:$0xff]
  %v39 = vld [vmem:[%s0 + $0xd8] sm:$0xff]
  %v40 = vld [vmem:[%s0 + $0xe0] sm:$0xff]
  %v41 = vld [vmem:[%s0 + $0xe8] sm:$0xff]
  %v42 = vld [vmem:[%s0 + $0xf0] sm:$0xff]
  %v43 = vld [vmem:[%s0 + $0xf8] sm:$0xff]
  %v44 = vpack.c.bf16 %v13, %v12
  %v45 = vpack.c.bf16 %v15, %v14
  %v46 = vpack.c.bf16 %v17, %v16
  %v47 = vpack.c.bf16 %v19, %v18
  %v48 = vpack.c.bf16 %v21, %v20
  %v49 = vpack.c.bf16 %v23, %v22
  %v50 = vpack.c.bf16 %v25, %v24
  %v51 = vpack.c.bf16 %v27, %v26
  %v52 = vpack.c.bf16 %v29, %v28
  %v53 = vpack.c.bf16 %v31, %v30
  %v54 = vpack.c.bf16 %v33, %v32
  %v55 = vpack.c.bf16 %v35, %v34
  %v56 = vpack.c.bf16 %v37, %v36
  %v57 = vpack.c.bf16 %v39, %v38
  %v58 = vpack.c.bf16 %v41, %v40
  %v59 = vpack.c.bf16 %v43, %v42
  %v60 = vld [vmem:[%s1] sm:$0xff]
  %v61 = vld [vmem:[%s1 + $0x8] sm:$0xff]
  %v62 = vld [vmem:[%s1 + $0x10] sm:$0xff]
  %v63 = vld [vmem:[%s1 + $0x18] sm:$0xff]
  %v64 = vld [vmem:[%s1 + $0x20] sm:$0xff]
  %v65 = vld [vmem:[%s1 + $0x28] sm:$0xff]
  %v66 = vld [vmem:[%s1 + $0x30] sm:$0xff]
  %v67 = vld [vmem:[%s1 + $0x38] sm:$0xff]
  %v68 = vld [vmem:[%s1 + $0x40] sm:$0xff]
  %v69 = vld [vmem:[%s1 + $0x48] sm:$0xff]
  %v70 = vld [vmem:[%s1 + $0x50] sm:$0xff]
  %v71 = vld [vmem:[%s1 + $0x58] sm:$0xff]
  %v72 = vld [vmem:[%s1 + $0x60] sm:$0xff]
  %v73 = vld [vmem:[%s1 + $0x68] sm:$0xff]
  %v74 = vld [vmem:[%s1 + $0x70] sm:$0xff]
  %v75 = vld [vmem:[%s1 + $0x78] sm:$0xff]
  %v92 = vunpack.c.l.b16 %v60
  %v93 = vunpack.c.h.b16 %v60
  %v94 = vunpack.c.l.b16 %v61
  %v95 = vunpack.c.h.b16 %v61
  %v96 = vunpack.c.l.b16 %v62
  %v97 = vunpack.c.h.b16 %v62
  %v98 = vunpack.c.l.b16 %v63
  %v99 = vunpack.c.h.b16 %v63
  %v100 = vunpack.c.l.b16 %v64
  %v101 = vunpack.c.h.b16 %v64
  %v102 = vunpack.c.l.b16 %v65
  %v103 = vunpack.c.h.b16 %v65
  %v104 = vunpack.c.l.b16 %v66
  %v105 = vunpack.c.h.b16 %v66
  %v106 = vunpack.c.l.b16 %v67
  %v107 = vunpack.c.h.b16 %v67
  %v108 = vunpack.c.l.b16 %v68
  %v109 = vunpack.c.h.b16 %v68
  %v110 = vunpack.c.l.b16 %v69
  %v111 = vunpack.c.h.b16 %v69
  %v112 = vunpack.c.l.b16 %v70
  %v113 = vunpack.c.h.b16 %v70
  %v114 = vunpack.c.l.b16 %v71
  %v115 = vunpack.c.h.b16 %v71
  %v116 = vunpack.c.l.b16 %v72
  %v117 = vunpack.c.h.b16 %v72
  %v118 = vunpack.c.l.b16 %v73
  %v119 = vunpack.c.h.b16 %v73
  %v120 = vunpack.c.l.b16 %v74
  %v121 = vunpack.c.h.b16 %v74
  %v122 = vunpack.c.l.b16 %v75
  %v123 = vunpack.c.h.b16 %v75
  %v124 = vpack.c.b16 %v94, %v92
  %v125 = vpack.c.b16 %v95, %v93
  %v126 = vpack.c.b16 %v98, %v96
  %v127 = vpack.c.b16 %v99, %v97
  %v128 = vpack.c.b16 %v102, %v100
  %v129 = vpack.c.b16 %v103, %v101
  %v130 = vpack.c.b16 %v106, %v104
  %v131 = vpack.c.b16 %v107, %v105
  %v132 = vpack.c.b16 %v110, %v108
  %v133 = vpack.c.b16 %v111, %v109
  %v134 = vpack.c.b16 %v114, %v112
  %v135 = vpack.c.b16 %v115, %v113
  %v136 = vpack.c.b16 %v118, %v116
  %v137 = vpack.c.b16 %v119, %v117
  %v138 = vpack.c.b16 %v122, %v120
  %v139 = vpack.c.b16 %v123, %v121
  %156 = vmatprep.subr.bf16.mxu0 %v125
  %157 = vmatpush1.bf16.msra.mxu0 %v124
  %158 = vmatprep.subr.bf16.mxu0 %v127
  %159 = vmatpush1.bf16.msra.mxu0 %v126
  %160 = vmatprep.subr.bf16.mxu0 %v129
  %161 = vmatpush1.bf16.msra.mxu0 %v128
  %162 = vmatprep.subr.bf16.mxu0 %v131
  %163 = vmatpush1.bf16.msra.mxu0 %v130
  %164 = vmatprep.subr.bf16.mxu0 %v133
  %165 = vmatpush1.bf16.msra.mxu0 %v132
  %166 = vmatprep.subr.bf16.mxu0 %v135
  %167 = vmatpush1.bf16.msra.mxu0 %v134
  %168 = vmatprep.subr.bf16.mxu0 %v137
  %169 = vmatpush1.bf16.msra.mxu0 %v136
  %170 = vmatprep.subr.bf16.mxu0 %v139
  %171 = vmatpush1.bf16.msra.mxu0 %v138
  %172 = vmatprep.subr.bf16.mxu0 0
  %173 = vmatpush1.bf16.msra.mxu0 0
  %174 = vmatprep.subr.bf16.mxu0 0
  %175 = vmatpush1.bf16.msra.mxu0 0
  %176 = vmatprep.subr.bf16.mxu0 0
  %177 = vmatpush1.bf16.msra.mxu0 0
  %178 = vmatprep.subr.bf16.mxu0 0
  %179 = vmatpush1.bf16.msra.mxu0 0
  %180 = vmatprep.subr.bf16.mxu0 0
  %181 = vmatpush1.bf16.msra.mxu0 0
  %182 = vmatprep.subr.bf16.mxu0 0
  %183 = vmatpush1.bf16.msra.mxu0 0
  %184 = vmatprep.subr.bf16.mxu0 0
  %185 = vmatpush1.bf16.msra.mxu0 0
  %186 = vmatprep.subr.bf16.mxu0 0
  %187 = vmatpush1.bf16.msra.mxu0 0
  %188 = vmatprep.mubr.bf16.mxu0 0
  %189 = vmatmul.mubr.bf16.gmra.mrb[0].mxu0 %v44
  %v190 = vpop.f32.mrb[0].mxu0
  %v191 = vadd.f32 0.0, %v190
  %v192 = vpop.f32.mrb[0].mxu0
  %v193 = vadd.f32 0.0, %v192
  %v194 = vpop.f32.mrb[0].mxu0
  %v195 = vadd.f32 0.0, %v194
  %v196 = vpop.f32.mrb[0].mxu0
  %v197 = vadd.f32 0.0, %v196
  %198 = vmatprep.mubr.bf16.mxu0 0
  %199 = vmatmul.mubr.bf16.gmra.mrb[0].mxu0 %v45
  %v200 = vpop.f32.mrb[0].mxu0
  %v201 = vadd.f32 0.0, %v200
  %v202 = vpop.f32.mrb[0].mxu0
  %v203 = vadd.f32 0.0, %v202
  %v204 = vpop.f32.mrb[0].mxu0
  %v205 = vadd.f32 0.0, %v204
  %v206 = vpop.f32.mrb[0].mxu0
  %v207 = vadd.f32 0.0, %v206
  %208 = vmatprep.mubr.bf16.mxu0 0
  %209 = vmatmul.mubr.bf16.gmra.mrb[0].mxu0 %v46
  %v210 = vpop.f32.mrb[0].mxu0
  %v211 = vadd.f32 0.0, %v210
  %v212 = vpop.f32.mrb[0].mxu0
  %v213 = vadd.f32 0.0, %v212
  %v214 = vpop.f32.mrb[0].mxu0
  %v215 = vadd.f32 0.0, %v214
  %v216 = vpop.f32.mrb[0].mxu0
  %v217 = vadd.f32 0.0, %v216
  %218 = vmatprep.mubr.bf16.mxu0 0
  %219 = vmatmul.mubr.bf16.gmra.mrb[0].mxu0 %v47
  %v220 = vpop.f32.mrb[0].mxu0
  %v221 = vadd.f32 0.0, %v220
  %v222 = vpop.f32.mrb[0].mxu0
  %v223 = vadd.f32 0.0, %v222
  %v224 = vpop.f32.mrb[0].mxu0
  %v225 = vadd.f32 0.0, %v224
  %v226 = vpop.f32.mrb[0].mxu0
  %v227 = vadd.f32 0.0, %v226
  %228 = vmatprep.mubr.bf16.mxu0 0
  %229 = vmatmul.mubr.bf16.gmra.mrb[0].mxu0 %v48
  %v230 = vpop.f32.mrb[0].mxu0
  %v231 = vadd.f32 0.0, %v230
  %v232 = vpop.f32.mrb[0].mxu0
  %v233 = vadd.f32 0.0, %v232
  %v234 = vpop.f32.mrb[0].mxu0
  %v235 = vadd.f32 0.0, %v234
  %v236 = vpop.f32.mrb[0].mxu0
  %v237 = vadd.f32 0.0, %v236
  %238 = vmatprep.mubr.bf16.mxu0 0
  %239 = vmatmul.mubr.bf16.gmra.mrb[0].mxu0 %v49
  %v240 = vpop.f32.mrb[0].mxu0
  %v241 = vadd.f32 0.0, %v240
  %v242 = vpop.f32.mrb[0].mxu0
  %v243 = vadd.f32 0.0, %v242
  %v244 = vpop.f32.mrb[0].mxu0
  %v245 = vadd.f32 0.0, %v244
  %v246 = vpop.f32.mrb[0].mxu0
  %v247 = vadd.f32 0.0, %v246
  %248 = vmatprep.mubr.bf16.mxu0 0
  %249 = vmatmul.mubr.bf16.gmra.mrb[0].mxu0 %v50
  %v250 = vpop.f32.mrb[0].mxu0
  %v251 = vadd.f32 0.0, %v250
  %v252 = vpop.f32.mrb[0].mxu0
  %v253 = vadd.f32 0.0, %v252
  %v254 = vpop.f32.mrb[0].mxu0
  %v255 = vadd.f32 0.0, %v254
  %v256 = vpop.f32.mrb[0].mxu0
  %v257 = vadd.f32 0.0, %v256
  %258 = vmatprep.mubr.bf16.mxu0 0
  %259 = vmatmul.mubr.bf16.gmra.mrb[0].mxu0 %v51
  %v260 = vpop.f32.mrb[0].mxu0
  %v261 = vadd.f32 0.0, %v260
  %v262 = vpop.f32.mrb[0].mxu0
  %v263 = vadd.f32 0.0, %v262
  %v264 = vpop.f32.mrb[0].mxu0
  %v265 = vadd.f32 0.0, %v264
  %v266 = vpop.f32.mrb[0].mxu0
  %v267 = vadd.f32 0.0, %v266
  %268 = vmatprep.mubr.bf16.mxu0 0
  %269 = vmatmul.mubr.bf16.gmra.mrb[0].mxu0 %v52
  %v270 = vpop.f32.mrb[0].mxu0
  %v271 = vadd.f32 0.0, %v270
  %v272 = vpop.f32.mrb[0].mxu0
  %v273 = vadd.f32 0.0, %v272
  %v274 = vpop.f32.mrb[0].mxu0
  %v275 = vadd.f32 0.0, %v274
  %v276 = vpop.f32.mrb[0].mxu0
  %v277 = vadd.f32 0.0, %v276
  %278 = vmatprep.mubr.bf16.mxu0 0
  %279 = vmatmul.mubr.bf16.gmra.mrb[0].mxu0 %v53
  %v280 = vpop.f32.mrb[0].mxu0
  %v281 = vadd.f32 0.0, %v280
  %v282 = vpop.f32.mrb[0].mxu0
  %v283 = vadd.f32 0.0, %v282
  %v284 = vpop.f32.mrb[0].mxu0
  %v285 = vadd.f32 0.0, %v284
  %v286 = vpop.f32.mrb[0].mxu0
  %v287 = vadd.f32 0.0, %v286
  %288 = vmatprep.mubr.bf16.mxu0 0
  %289 = vmatmul.mubr.bf16.gmra.mrb[0].mxu0 %v54
  %v290 = vpop.f32.mrb[0].mxu0
  %v291 = vadd.f32 0.0, %v290
  %v292 = vpop.f32.mrb[0].mxu0
  %v293 = vadd.f32 0.0, %v292
  %v294 = vpop.f32.mrb[0].mxu0
  %v295 = vadd.f32 0.0, %v294
  %v296 = vpop.f32.mrb[0].mxu0
  %v297 = vadd.f32 0.0, %v296
  %298 = vmatprep.mubr.bf16.mxu0 0
  %299 = vmatmul.mubr.bf16.gmra.mrb[0].mxu0 %v55
  %v300 = vpop.f32.mrb[0].mxu0
  %v301 = vadd.f32 0.0, %v300
  %v302 = vpop.f32.mrb[0].mxu0
  %v303 = vadd.f32 0.0, %v302
  %v304 = vpop.f32.mrb[0].mxu0
  %v305 = vadd.f32 0.0, %v304
  %v306 = vpop.f32.mrb[0].mxu0
  %v307 = vadd.f32 0.0, %v306
  %308 = vmatprep.mubr.bf16.mxu0 0
  %309 = vmatmul.mubr.bf16.gmra.mrb[0].mxu0 %v56
  %v310 = vpop.f32.mrb[0].mxu0
  %v311 = vadd.f32 0.0, %v310
  %v312 = vpop.f32.mrb[0].mxu0
  %v313 = vadd.f32 0.0, %v312
  %v314 = vpop.f32.mrb[0].mxu0
  %v315 = vadd.f32 0.0, %v314
  %v316 = vpop.f32.mrb[0].mxu0
  %v317 = vadd.f32 0.0, %v316
  %318 = vmatprep.mubr.bf16.mxu0 0
  %319 = vmatmul.mubr.bf16.gmra.mrb[0].mxu0 %v57
  %v320 = vpop.f32.mrb[0].mxu0
  %v321 = vadd.f32 0.0, %v320
  %v322 = vpop.f32.mrb[0].mxu0
  %v323 = vadd.f32 0.0, %v322
  %v324 = vpop.f32.mrb[0].mxu0
  %v325 = vadd.f32 0.0, %v324
  %v326 = vpop.f32.mrb[0].mxu0
  %v327 = vadd.f32 0.0, %v326
  %328 = vmatprep.mubr.bf16.mxu0 0
  %329 = vmatmul.mubr.bf16.gmra.mrb[0].mxu0 %v58
  %v330 = vpop.f32.mrb[0].mxu0
  %v331 = vadd.f32 0.0, %v330
  %v332 = vpop.f32.mrb[0].mxu0
  %v333 = vadd.f32 0.0, %v332
  %v334 = vpop.f32.mrb[0].mxu0
  %v335 = vadd.f32 0.0, %v334
  %v336 = vpop.f32.mrb[0].mxu0
  %v337 = vadd.f32 0.0, %v336
  %338 = vmatprep.mubr.bf16.mxu0 0
  %339 = vmatmul.mubr.bf16.gmra.mrb[0].mxu0 %v59
  %v340 = vpop.f32.mrb[0].mxu0
  %v341 = vadd.f32 0.0, %v340
  %v342 = vpop.f32.mrb[0].mxu0
  %v343 = vadd.f32 0.0, %v342
  %v344 = vpop.f32.mrb[0].mxu0
  %v345 = vadd.f32 0.0, %v344
  %v346 = vpop.f32.mrb[0].mxu0
  %v347 = vadd.f32 0.0, %v346
  %348 = vdwg.mxu0
  %349 = vst [vmem:[%s2] sm:$0xff] %v191
  %350 = vst [vmem:[%s2 + $0x8] sm:$0xff] %v193
  %351 = vst [vmem:[%s2 + $0x10] sm:$0xff] %v195
  %352 = vst [vmem:[%s2 + $0x18] sm:$0xff] %v197
  %353 = vst [vmem:[%s2 + $0x20] sm:$0xff] %v201
  %354 = vst [vmem:[%s2 + $0x28] sm:$0xff] %v203
  %355 = vst [vmem:[%s2 + $0x30] sm:$0xff] %v205
  %356 = vst [vmem:[%s2 + $0x38] sm:$0xff] %v207
  %357 = vst [vmem:[%s2 + $0x40] sm:$0xff] %v211
  %358 = vst [vmem:[%s2 + $0x48] sm:$0xff] %v213
  %359 = vst [vmem:[%s2 + $0x50] sm:$0xff] %v215
  %360 = vst [vmem:[%s2 + $0x58] sm:$0xff] %v217
  %361 = vst [vmem:[%s2 + $0x60] sm:$0xff] %v221
  %362 = vst [vmem:[%s2 + $0x68] sm:$0xff] %v223
  %363 = vst [vmem:[%s2 + $0x70] sm:$0xff] %v225
  %364 = vst [vmem:[%s2 + $0x78] sm:$0xff] %v227
  %365 = vst [vmem:[%s2 + $0x80] sm:$0xff] %v231
  %366 = vst [vmem:[%s2 + $0x88] sm:$0xff] %v233
  %367 = vst [vmem:[%s2 + $0x90] sm:$0xff] %v235
  %368 = vst [vmem:[%s2 + $0x98] sm:$0xff] %v237
  %369 = vst [vmem:[%s2 + $0xa0] sm:$0xff] %v241
  %370 = vst [vmem:[%s2 + $0xa8] sm:$0xff] %v243
  %371 = vst [vmem:[%s2 + $0xb0] sm:$0xff] %v245
  %372 = vst [vmem:[%s2 + $0xb8] sm:$0xff] %v247
  %373 = vst [vmem:[%s2 + $0xc0] sm:$0xff] %v251
  %374 = vst [vmem:[%s2 + $0xc8] sm:$0xff] %v253
  %375 = vst [vmem:[%s2 + $0xd0] sm:$0xff] %v255
  %376 = vst [vmem:[%s2 + $0xd8] sm:$0xff] %v257
  %377 = vst [vmem:[%s2 + $0xe0] sm:$0xff] %v261
  %378 = vst [vmem:[%s2 + $0xe8] sm:$0xff] %v263
  %379 = vst [vmem:[%s2 + $0xf0] sm:$0xff] %v265
  %380 = vst [vmem:[%s2 + $0xf8] sm:$0xff] %v267
  %381 = vst [vmem:[%s2 + $0x100] sm:$0xff] %v271
  %382 = vst [vmem:[%s2 + $0x108] sm:$0xff] %v273
  %383 = vst [vmem:[%s2 + $0x110] sm:$0xff] %v275
  %384 = vst [vmem:[%s2 + $0x118] sm:$0xff] %v277
  %385 = vst [vmem:[%s2 + $0x120] sm:$0xff] %v281
  %386 = vst [vmem:[%s2 + $0x128] sm:$0xff] %v283
  %387 = vst [vmem:[%s2 + $0x130] sm:$0xff] %v285
  %388 = vst [vmem:[%s2 + $0x138] sm:$0xff] %v287
  %389 = vst [vmem:[%s2 + $0x140] sm:$0xff] %v291
  %390 = vst [vmem:[%s2 + $0x148] sm:$0xff] %v293
  %391 = vst [vmem:[%s2 + $0x150] sm:$0xff] %v295
  %392 = vst [vmem:[%s2 + $0x158] sm:$0xff] %v297
  %393 = vst [vmem:[%s2 + $0x160] sm:$0xff] %v301
  %394 = vst [vmem:[%s2 + $0x168] sm:$0xff] %v303
  %395 = vst [vmem:[%s2 + $0x170] sm:$0xff] %v305
  %396 = vst [vmem:[%s2 + $0x178] sm:$0xff] %v307
  %397 = vst [vmem:[%s2 + $0x180] sm:$0xff] %v311
  %398 = vst [vmem:[%s2 + $0x188] sm:$0xff] %v313
  %399 = vst [vmem:[%s2 + $0x190] sm:$0xff] %v315
  %400 = vst [vmem:[%s2 + $0x198] sm:$0xff] %v317
  %401 = vst [vmem:[%s2 + $0x1a0] sm:$0xff] %v321
  %402 = vst [vmem:[%s2 + $0x1a8] sm:$0xff] %v323
  %403 = vst [vmem:[%s2 + $0x1b0] sm:$0xff] %v325
  %404 = vst [vmem:[%s2 + $0x1b8] sm:$0xff] %v327
  %405 = vst [vmem:[%s2 + $0x1c0] sm:$0xff] %v331
  %406 = vst [vmem:[%s2 + $0x1c8] sm:$0xff] %v333
  %407 = vst [vmem:[%s2 + $0x1d0] sm:$0xff] %v335
  %408 = vst [vmem:[%s2 + $0x1d8] sm:$0xff] %v337
  %409 = vst [vmem:[%s2 + $0x1e0] sm:$0xff] %v341
  %410 = vst [vmem:[%s2 + $0x1e8] sm:$0xff] %v343
  %411 = vst [vmem:[%s2 + $0x1f0] sm:$0xff] %v345
  %412 = vst [vmem:[%s2 + $0x1f8] sm:$0xff] %v347
  // Predicated region
  $region10: #{graphcast_processor_forward.9} parent=0 // pred_check
    _
  $region11: #{graphcast_processor_forward.9} parent=0 // pred_check_branch
    %414 = sbr.rel (0) target = $region13
  $region12: #{graphcast_processor_forward.9} parent=0 // pred_region
    _
  $region13: #{graphcast_processor_forward.9} parent=0 // pred_fallthru
    _
  // Predicated region
  $region14: #{graphcast_processor_forward.9} parent=0 // pred_check
    _
  $region15: #{graphcast_processor_forward.9} parent=0 // pred_check_branch
    %416 = sbr.rel (0) target = $region17
  $region16: #{graphcast_processor_forward.9} parent=0 // pred_region
    _
  $region17: #{graphcast_processor_forward.9} parent=0 // pred_fallthru
    _

// kernel: graphcast_processor_forward.8
$region0: #{graphcast_processor_forward.8}
  #allocation0 [shape = 'u32[]', space=smem, size = 0x4, offset = 0x4, fixed_abs, tag = 'smem constant byte address 0x4 - core index']
  #allocation1 [shape = 'u32[144,128]{1,0:T(1,128)}', space=vmem, size = 0x12000, scoped, tag = 'internal scratch']
  %s0 = inlined_call_operand.vmem [shape: f32[256,128], index: 0, kind: input, shape index: {}]
  %s1 = inlined_call_operand.vmem [shape: f32[256,128], index: 1, kind: input, shape index: {}]
  %s2 = inlined_call_operand.vmem [shape: bf16[128,128], index: 2, kind: input, shape index: {}]
  %s3 = inlined_call_operand.vmem [shape: bf16[128,128], index: 3, kind: input, shape index: {}]
  %s4 = inlined_call_operand.vmem [shape: f32[1,128], index: 4, kind: input, shape index: {}]
  %s5 = inlined_call_operand.vmem [shape: bf16[128,128], index: 5, kind: input, shape index: {}]
  %s6 = inlined_call_operand.vmem [shape: f32[1,128], index: 6, kind: input, shape index: {}]
  %s7 = inlined_call_operand.vmem [shape: f32[1,128], index: 7, kind: input, shape index: {}]
  %s8 = inlined_call_operand.vmem [shape: f32[1,128], index: 8, kind: input, shape index: {}]
  %s9 = inlined_call_operand.vmem [shape: f32[256,128], index: 9, kind: output, shape index: {}]
  %s10 = sld [smem:[#allocation0]]
  $region46: #{graphcast_processor_forward.8} parent=0
    _
  %s12 = ssub.s32 1, %s10
  %s13 = scalar_select 0, %s12, %s10
  // Predicated region
  $region2: #{graphcast_processor_forward.8} parent=0 // pred_check
    _
  $region3: #{graphcast_processor_forward.8} parent=0 // pred_check_branch
    %15 = sbr.rel (0) target = $region5
  $region4: #{graphcast_processor_forward.8} parent=0 // pred_region
    _
  $region5: #{graphcast_processor_forward.8} parent=0 // pred_fallthru
    _
  // Predicated region
  $region6: #{graphcast_processor_forward.8} parent=0 // pred_check
    _
  $region7: #{graphcast_processor_forward.8} parent=0 // pred_check_branch
    %17 = sbr.rel (0) target = $region9
  $region8: #{graphcast_processor_forward.8} parent=0 // pred_region
    _
  $region9: #{graphcast_processor_forward.8} parent=0 // pred_fallthru
    _
  // Predicated region
  $region10: #{graphcast_processor_forward.8} parent=0 // pred_check
    _
  $region11: #{graphcast_processor_forward.8} parent=0 // pred_check_branch
    %19 = sbr.rel (0) target = $region13
  $region12: #{graphcast_processor_forward.8} parent=0 // pred_region
    _
  $region13: #{graphcast_processor_forward.8} parent=0 // pred_fallthru
    _
  // Predicated region
  $region14: #{graphcast_processor_forward.8} parent=0 // pred_check
    _
  $region15: #{graphcast_processor_forward.8} parent=0 // pred_check_branch
    %21 = sbr.rel (0) target = $region17
  $region16: #{graphcast_processor_forward.8} parent=0 // pred_region
    _
  $region17: #{graphcast_processor_forward.8} parent=0 // pred_fallthru
    _
  // Predicated region
  $region18: #{graphcast_processor_forward.8} parent=0 // pred_check
    _
  $region19: #{graphcast_processor_forward.8} parent=0 // pred_check_branch
    %23 = sbr.rel (0) target = $region21
  $region20: #{graphcast_processor_forward.8} parent=0 // pred_region
    _
  $region21: #{graphcast_processor_forward.8} parent=0 // pred_fallthru
    _
  // Predicated region
  $region22: #{graphcast_processor_forward.8} parent=0 // pred_check
    _
  $region23: #{graphcast_processor_forward.8} parent=0 // pred_check_branch
    %25 = sbr.rel (0) target = $region25
  $region24: #{graphcast_processor_forward.8} parent=0 // pred_region
    _
  $region25: #{graphcast_processor_forward.8} parent=0 // pred_fallthru
    _
  // Predicated region
  $region26: #{graphcast_processor_forward.8} parent=0 // pred_check
    _
  $region27: #{graphcast_processor_forward.8} parent=0 // pred_check_branch
    %27 = sbr.rel (0) target = $region29
  $region28: #{graphcast_processor_forward.8} parent=0 // pred_region
    _
  $region29: #{graphcast_processor_forward.8} parent=0 // pred_fallthru
    _
  // Predicated region
  $region30: #{graphcast_processor_forward.8} parent=0 // pred_check
    _
  $region31: #{graphcast_processor_forward.8} parent=0 // pred_check_branch
    %29 = sbr.rel (0) target = $region33
  $region32: #{graphcast_processor_forward.8} parent=0 // pred_region
    _
  $region33: #{graphcast_processor_forward.8} parent=0 // pred_fallthru
    _
  // Predicated region
  $region34: #{graphcast_processor_forward.8} parent=0 // pred_check
    _
  $region35: #{graphcast_processor_forward.8} parent=0 // pred_check_branch
    %31 = sbr.rel (0) target = $region37
  $region36: #{graphcast_processor_forward.8} parent=0 // pred_region
    _
  $region37: #{graphcast_processor_forward.8} parent=0 // pred_fallthru
    _
  %v33 = vld [vmem:[%s0] sm:$0xff]
  %v34 = vld [vmem:[%s0 + $0x8] sm:$0xff]
  %v35 = vld [vmem:[%s0 + $0x10] sm:$0xff]
  %v36 = vld [vmem:[%s0 + $0x18] sm:$0xff]
  %v37 = vld [vmem:[%s0 + $0x20] sm:$0xff]
  %v38 = vld [vmem:[%s0 + $0x28] sm:$0xff]
  %v39 = vld [vmem:[%s0 + $0x30] sm:$0xff]
  %v40 = vld [vmem:[%s0 + $0x38] sm:$0xff]
  %v41 = vld [vmem:[%s0 + $0x40] sm:$0xff]
  %v42 = vld [vmem:[%s0 + $0x48] sm:$0xff]
  %v43 = vld [vmem:[%s0 + $0x50] sm:$0xff]
  %v44 = vld [vmem:[%s0 + $0x58] sm:$0xff]
  %v45 = vld [vmem:[%s0 + $0x60] sm:$0xff]
  %v46 = vld [vmem:[%s0 + $0x68] sm:$0xff]
  %v47 = vld [vmem:[%s0 + $0x70] sm:$0xff]
  %v48 = vld [vmem:[%s0 + $0x78] sm:$0xff]
  %v49 = vld [vmem:[%s0 + $0x80] sm:$0xff]
  %v50 = vld [vmem:[%s0 + $0x88] sm:$0xff]
  %v51 = vld [vmem:[%s0 + $0x90] sm:$0xff]
  %v52 = vld [vmem:[%s0 + $0x98] sm:$0xff]
  %v53 = vld [vmem:[%s0 + $0xa0] sm:$0xff]
  %v54 = vld [vmem:[%s0 + $0xa8] sm:$0xff]
  %v55 = vld [vmem:[%s0 + $0xb0] sm:$0xff]
  %v56 = vld [vmem:[%s0 + $0xb8] sm:$0xff]
  %v57 = vld [vmem:[%s0 + $0xc0] sm:$0xff]
  %v58 = vld [vmem:[%s0 + $0xc8] sm:$0xff]
  %v59 = vld [vmem:[%s0 + $0xd0] sm:$0xff]
  %v60 = vld [vmem:[%s0 + $0xd8] sm:$0xff]
  %v61 = vld [vmem:[%s0 + $0xe0] sm:$0xff]
  %v62 = vld [vmem:[%s0 + $0xe8] sm:$0xff]
  %v63 = vld [vmem:[%s0 + $0xf0] sm:$0xff]
  %v64 = vld [vmem:[%s0 + $0xf8] sm:$0xff]
  %v65 = vpack.c.bf16 %v34, %v33
  %v66 = vpack.c.bf16 %v36, %v35
  %v67 = vpack.c.bf16 %v38, %v37
  %v68 = vpack.c.bf16 %v40, %v39
  %v69 = vpack.c.bf16 %v42, %v41
  %v70 = vpack.c.bf16 %v44, %v43
  %v71 = vpack.c.bf16 %v46, %v45
  %v72 = vpack.c.bf16 %v48, %v47
  %v73 = vpack.c.bf16 %v50, %v49
  %v74 = vpack.c.bf16 %v52, %v51
  %v75 = vpack.c.bf16 %v54, %v53
  %v76 = vpack.c.bf16 %v56, %v55
  %v77 = vpack.c.bf16 %v58, %v57
  %v78 = vpack.c.bf16 %v60, %v59
  %v79 = vpack.c.bf16 %v62, %v61
  %v80 = vpack.c.bf16 %v64, %v63
  %v81 = vld [vmem:[%s2] sm:$0xf]
  %v82 = vld [vmem:[%s2 + $0x4] sm:$0xf]
  %v83 = vld [vmem:[%s2 + $0x8] sm:$0xf]
  %v84 = vld [vmem:[%s2 + $0xc] sm:$0xf]
  %v85 = vld [vmem:[%s2 + $0x10] sm:$0xf]
  %v86 = vld [vmem:[%s2 + $0x14] sm:$0xf]
  %v87 = vld [vmem:[%s2 + $0x18] sm:$0xf]
  %v88 = vld [vmem:[%s2 + $0x1c] sm:$0xf]
  %v89 = vld [vmem:[%s2 + $0x20] sm:$0xf]
  %v90 = vld [vmem:[%s2 + $0x24] sm:$0xf]
  %v91 = vld [vmem:[%s2 + $0x28] sm:$0xf]
  %v92 = vld [vmem:[%s2 + $0x2c] sm:$0xf]
  %v93 = vld [vmem:[%s2 + $0x30] sm:$0xf]
  %v94 = vld [vmem:[%s2 + $0x34] sm:$0xf]
  %v95 = vld [vmem:[%s2 + $0x38] sm:$0xf]
  %v96 = vld [vmem:[%s2 + $0x3c] sm:$0xf]
  %v97 = vld [vmem:[%s1] sm:$0xff]
  %v98 = vld [vmem:[%s1 + $0x8] sm:$0xff]
  %v99 = vld [vmem:[%s1 + $0x10] sm:$0xff]
  %v100 = vld [vmem:[%s1 + $0x18] sm:$0xff]
  %v101 = vld [vmem:[%s1 + $0x20] sm:$0xff]
  %v102 = vld [vmem:[%s1 + $0x28] sm:$0xff]
  %v103 = vld [vmem:[%s1 + $0x30] sm:$0xff]
  %v104 = vld [vmem:[%s1 + $0x38] sm:$0xff]
  %v105 = vld [vmem:[%s1 + $0x40] sm:$0xff]
  %v106 = vld [vmem:[%s1 + $0x48] sm:$0xff]
  %v107 = vld [vmem:[%s1 + $0x50] sm:$0xff]
  %v108 = vld [vmem:[%s1 + $0x58] sm:$0xff]
  %v109 = vld [vmem:[%s1 + $0x60] sm:$0xff]
  %v110 = vld [vmem:[%s1 + $0x68] sm:$0xff]
  %v111 = vld [vmem:[%s1 + $0x70] sm:$0xff]
  %v112 = vld [vmem:[%s1 + $0x78] sm:$0xff]
  %v113 = vld [vmem:[%s1 + $0x80] sm:$0xff]
  %v114 = vld [vmem:[%s1 + $0x88] sm:$0xff]
  %v115 = vld [vmem:[%s1 + $0x90] sm:$0xff]
  %v116 = vld [vmem:[%s1 + $0x98] sm:$0xff]
  %v117 = vld [vmem:[%s1 + $0xa0] sm:$0xff]
  %v118 = vld [vmem:[%s1 + $0xa8] sm:$0xff]
  %v119 = vld [vmem:[%s1 + $0xb0] sm:$0xff]
  %v120 = vld [vmem:[%s1 + $0xb8] sm:$0xff]
  %v121 = vld [vmem:[%s1 + $0xc0] sm:$0xff]
  %v122 = vld [vmem:[%s1 + $0xc8] sm:$0xff]
  %v123 = vld [vmem:[%s1 + $0xd0] sm:$0xff]
  %v124 = vld [vmem:[%s1 + $0xd8] sm:$0xff]
  %v125 = vld [vmem:[%s1 + $0xe0] sm:$0xff]
  %v126 = vld [vmem:[%s1 + $0xe8] sm:$0xff]
  %v127 = vld [vmem:[%s1 + $0xf0] sm:$0xff]
  %v128 = vld [vmem:[%s1 + $0xf8] sm:$0xff]
  %v129 = vpack.c.bf16 %v98, %v97
  %v130 = vpack.c.bf16 %v100, %v99
  %v131 = vpack.c.bf16 %v102, %v101
  %v132 = vpack.c.bf16 %v104, %v103
  %v133 = vpack.c.bf16 %v106, %v105
  %v134 = vpack.c.bf16 %v108, %v107
  %v135 = vpack.c.bf16 %v110, %v109
  %v136 = vpack.c.bf16 %v112, %v111
  %v137 = vpack.c.bf16 %v114, %v113
  %v138 = vpack.c.bf16 %v116, %v115
  %v139 = vpack.c.bf16 %v118, %v117
  %v140 = vpack.c.bf16 %v120, %v119
  %v141 = vpack.c.bf16 %v122, %v121
  %v142 = vpack.c.bf16 %v124, %v123
  %v143 = vpack.c.bf16 %v126, %v125
  %v144 = vpack.c.bf16 %v128, %v127
  %v145 = vld [vmem:[%s3] sm:$0xf]
  %v146 = vld [vmem:[%s3 + $0x4] sm:$0xf]
  %v147 = vld [vmem:[%s3 + $0x8] sm:$0xf]
  %v148 = vld [vmem:[%s3 + $0xc] sm:$0xf]
  %v149 = vld [vmem:[%s3 + $0x10] sm:$0xf]
  %v150 = vld [vmem:[%s3 + $0x14] sm:$0xf]
  %v151 = vld [vmem:[%s3 + $0x18] sm:$0xf]
  %v152 = vld [vmem:[%s3 + $0x1c] sm:$0xf]
  %v153 = vld [vmem:[%s3 + $0x20] sm:$0xf]
  %v154 = vld [vmem:[%s3 + $0x24] sm:$0xf]
  %v155 = vld [vmem:[%s3 + $0x28] sm:$0xf]
  %v156 = vld [vmem:[%s3 + $0x2c] sm:$0xf]
  %v157 = vld [vmem:[%s3 + $0x30] sm:$0xf]
  %v158 = vld [vmem:[%s3 + $0x34] sm:$0xf]
  %v159 = vld [vmem:[%s3 + $0x38] sm:$0xf]
  %v160 = vld [vmem:[%s3 + $0x3c] sm:$0xf]
  %v177 = vunpack.c.l.b16 %v145
  %v178 = vunpack.c.l.b16 %v146
  %v179 = vunpack.c.l.b16 %v147
  %v180 = vunpack.c.l.b16 %v148
  %v181 = vunpack.c.l.b16 %v149
  %v182 = vunpack.c.l.b16 %v150
  %v183 = vunpack.c.l.b16 %v151
  %v184 = vunpack.c.l.b16 %v152
  %v185 = vunpack.c.l.b16 %v153
  %v186 = vunpack.c.l.b16 %v154
  %v187 = vunpack.c.l.b16 %v155
  %v188 = vunpack.c.l.b16 %v156
  %v189 = vunpack.c.l.b16 %v157
  %v190 = vunpack.c.l.b16 %v158
  %v191 = vunpack.c.l.b16 %v159
  %v192 = vunpack.c.l.b16 %v160
  %v193 = vpack.c.b16 %v178, %v177
  %v194 = vpack.c.b16 %v180, %v179
  %v195 = vpack.c.b16 %v182, %v181
  %v196 = vpack.c.b16 %v184, %v183
  %v197 = vpack.c.b16 %v186, %v185
  %v198 = vpack.c.b16 %v188, %v187
  %v199 = vpack.c.b16 %v190, %v189
  %v200 = vpack.c.b16 %v192, %v191
  %209 = vmatprep.subr.bf16.mxu0 0
  %210 = vmatpush1.bf16.msra.mxu0 %v193
  %211 = vmatprep.subr.bf16.mxu0 0
  %212 = vmatpush1.bf16.msra.mxu0 %v194
  %213 = vmatprep.subr.bf16.mxu0 0
  %214 = vmatpush1.bf16.msra.mxu0 %v195
  %215 = vmatprep.subr.bf16.mxu0 0
  %216 = vmatpush1.bf16.msra.mxu0 %v196
  %217 = vmatprep.subr.bf16.mxu0 0
  %218 = vmatpush1.bf16.msra.mxu0 %v197
  %219 = vmatprep.subr.bf16.mxu0 0
  %220 = vmatpush1.bf16.msra.mxu0 %v198
  %221 = vmatprep.subr.bf16.mxu0 0
  %222 = vmatpush1.bf16.msra.mxu0 %v199
  %223 = vmatprep.subr.bf16.mxu0 0
  %224 = vmatpush1.bf16.msra.mxu0 %v200
  %225 = vmatprep.subr.bf16.mxu0 0
  %226 = vmatpush1.bf16.msra.mxu0 0
  %227 = vmatprep.subr.bf16.mxu0 0
  %228 = vmatpush1.bf16.msra.mxu0 0
  %229 = vmatprep.subr.bf16.mxu0 0
  %230 = vmatpush1.bf16.msra.mxu0 0
  %231 = vmatprep.subr.bf16.mxu0 0
  %232 = vmatpush1.bf16.msra.mxu0 0
  %233 = vmatprep.subr.bf16.mxu0 0
  %234 = vmatpush1.bf16.msra.mxu0 0
  %235 = vmatprep.subr.bf16.mxu0 0
  %236 = vmatpush1.bf16.msra.mxu0 0
  %237 = vmatprep.subr.bf16.mxu0 0
  %238 = vmatpush1.bf16.msra.mxu0 0
  %239 = vmatprep.subr.bf16.mxu0 0
  %240 = vmatpush1.bf16.msra.mxu0 0
  %241 = vmatprep.mubr.bf16.mxu0 0
  %242 = vmatmul.mubr.bf16.gmra.mrb[0].mxu0 %v129
  %v243 = vpop.f32.mrb[0].mxu0
  %v244 = vadd.f32 0.0, %v243
  %v245 = vpop.f32.mrb[0].mxu0
  %v246 = vpop.f32.mrb[0].mxu0
  %v247 = vadd.f32 0.0, %v246
  %v248 = vpop.f32.mrb[0].mxu0
  %249 = vmatprep.mubr.bf16.mxu0 0
  %250 = vmatmul.mubr.bf16.gmra.mrb[0].mxu0 %v130
  %v251 = vpop.f32.mrb[0].mxu0
  %v252 = vadd.f32 0.0, %v251
  %v253 = vpop.f32.mrb[0].mxu0
  %v254 = vpop.f32.mrb[0].mxu0
  %v255 = vadd.f32 0.0, %v254
  %v256 = vpop.f32.mrb[0].mxu0
  %257 = vmatprep.mubr.bf16.mxu0 0
  %258 = vmatmul.mubr.bf16.gmra.mrb[0].mxu0 %v131
  %v259 = vpop.f32.mrb[0].mxu0
  %v260 = vadd.f32 0.0, %v259
  %v261 = vpop.f32.mrb[0].mxu0
  %v262 = vpop.f32.mrb[0].mxu0
  %v263 = vadd.f32 0.0, %v262
  %v264 = vpop.f32.mrb[0].mxu0
  %265 = vmatprep.mubr.bf16.mxu0 0
  %266 = vmatmul.mubr.bf16.gmra.mrb[0].mxu0 %v132
  %v267 = vpop.f32.mrb[0].mxu0
  %v268 = vadd.f32 0.0, %v267
  %v269 = vpop.f32.mrb[0].mxu0
  %v270 = vpop.f32.mrb[0].mxu0
  %v271 = vadd.f32 0.0, %v270
  %v272 = vpop.f32.mrb[0].mxu0
  %273 = vmatprep.mubr.bf16.mxu0 0
  %274 = vmatmul.mubr.bf16.gmra.mrb[0].mxu0 %v133
  %v275 = vpop.f32.mrb[0].mxu0
  %v276 = vadd.f32 0.0, %v275
  %v277 = vpop.f32.mrb[0].mxu0
  %v278 = vpop.f32.mrb[0].mxu0
  %v279 = vadd.f32 0.0, %v278
  %v280 = vpop.f32.mrb[0].mxu0
  %281 = vmatprep.mubr.bf16.mxu0 0
  %282 = vmatmul.mubr.bf16.gmra.mrb[0].mxu0 %v134
  %v283 = vpop.f32.mrb[0].mxu0
  %v284 = vadd.f32 0.0, %v283
  %v285 = vpop.f32.mrb[0].mxu0
  %v286 = vpop.f32.mrb[0].mxu0
  %v287 = vadd.f32 0.0, %v286
  %v288 = vpop.f32.mrb[0].mxu0
  %289 = vmatprep.mubr.bf16.mxu0 0
  %290 = vmatmul.mubr.bf16.gmra.mrb[0].mxu0 %v135
  %v291 = vpop.f32.mrb[0].mxu0
  %v292 = vadd.f32 0.0, %v291
  %v293 = vpop.f32.mrb[0].mxu0
  %v294 = vpop.f32.mrb[0].mxu0
  %v295 = vadd.f32 0.0, %v294
  %v296 = vpop.f32.mrb[0].mxu0
  %297 = vmatprep.mubr.bf16.mxu0 0
  %298 = vmatmul.mubr.bf16.gmra.mrb[0].mxu0 %v136
  %v299 = vpop.f32.mrb[0].mxu0
  %v300 = vadd.f32 0.0, %v299
  %v301 = vpop.f32.mrb[0].mxu0
  %v302 = vpop.f32.mrb[0].mxu0
  %v303 = vadd.f32 0.0, %v302
  %v304 = vpop.f32.mrb[0].mxu0
  %305 = vmatprep.mubr.bf16.mxu0 0
  %306 = vmatmul.mubr.bf16.gmra.mrb[0].mxu0 %v137
  %v307 = vpop.f32.mrb[0].mxu0
  %v308 = vadd.f32 0.0, %v307
  %v309 = vpop.f32.mrb[0].mxu0
  %v310 = vpop.f32.mrb[0].mxu0
  %v311 = vadd.f32 0.0, %v310
  %v312 = vpop.f32.mrb[0].mxu0
  %313 = vmatprep.mubr.bf16.mxu0 0
  %314 = vmatmul.mubr.bf16.gmra.mrb[0].mxu0 %v138
  %v315 = vpop.f32.mrb[0].mxu0
  %v316 = vadd.f32 0.0, %v315
  %v317 = vpop.f32.mrb[0].mxu0
  %v318 = vpop.f32.mrb[0].mxu0
  %v319 = vadd.f32 0.0, %v318
  %v320 = vpop.f32.mrb[0].mxu0
  %321 = vmatprep.mubr.bf16.mxu0 0
  %322 = vmatmul.mubr.bf16.gmra.mrb[0].mxu0 %v139
  %v323 = vpop.f32.mrb[0].mxu0
  %v324 = vadd.f32 0.0, %v323
  %v325 = vpop.f32.mrb[0].mxu0
  %v326 = vpop.f32.mrb[0].mxu0
  %v327 = vadd.f32 0.0, %v326
  %v328 = vpop.f32.mrb[0].mxu0
  %329 = vmatprep.mubr.bf16.mxu0 0
  %330 = vmatmul.mubr.bf16.gmra.mrb[0].mxu0 %v140
  %v331 = vpop.f32.mrb[0].mxu0
  %v332 = vadd.f32 0.0, %v331
  %v333 = vpop.f32.mrb[0].mxu0
  %v334 = vpop.f32.mrb[0].mxu0
  %v335 = vadd.f32 0.0, %v334
  %v336 = vpop.f32.mrb[0].mxu0
  %337 = vmatprep.mubr.bf16.mxu0 0
  %338 = vmatmul.mubr.bf16.gmra.mrb[0].mxu0 %v141
  %v339 = vpop.f32.mrb[0].mxu0
  %v340 = vadd.f32 0.0, %v339
  %v341 = vpop.f32.mrb[0].mxu0
  %v342 = vpop.f32.mrb[0].mxu0
  %v343 = vadd.f32 0.0, %v342
  %v344 = vpop.f32.mrb[0].mxu0
  %345 = vmatprep.mubr.bf16.mxu0 0
  %346 = vmatmul.mubr.bf16.gmra.mrb[0].mxu0 %v142
  %v347 = vpop.f32.mrb[0].mxu0
  %v348 = vadd.f32 0.0, %v347
  %v349 = vpop.f32.mrb[0].mxu0
  %v350 = vpop.f32.mrb[0].mxu0
  %v351 = vadd.f32 0.0, %v350
  %v352 = vpop.f32.mrb[0].mxu0
  %353 = vmatprep.mubr.bf16.mxu0 0
  %354 = vmatmul.mubr.bf16.gmra.mrb[0].mxu0 %v143
  %v355 = vpop.f32.mrb[0].mxu0
  %v356 = vadd.f32 0.0, %v355
  %v357 = vpop.f32.mrb[0].mxu0
  %v358 = vpop.f32.mrb[0].mxu0
  %v359 = vadd.f32 0.0, %v358
  %v360 = vpop.f32.mrb[0].mxu0
  %361 = vmatprep.mubr.bf16.mxu0 0
  %362 = vmatmul.mubr.bf16.gmra.mrb[0].mxu0 %v144
  %v363 = vpop.f32.mrb[0].mxu0
  %v364 = vadd.f32 0.0, %v363
  %v365 = vpop.f32.mrb[0].mxu0
  %v366 = vpop.f32.mrb[0].mxu0
  %v367 = vadd.f32 0.0, %v366
  %v368 = vpop.f32.mrb[0].mxu0
  %369 = vdwg.mxu0
  %v386 = vunpack.c.l.b16 %v81
  %v387 = vunpack.c.l.b16 %v82
  %v388 = vunpack.c.l.b16 %v83
  %v389 = vunpack.c.l.b16 %v84
  %v390 = vunpack.c.l.b16 %v85
  %v391 = vunpack.c.l.b16 %v86
  %v392 = vunpack.c.l.b16 %v87
  %v393 = vunpack.c.l.b16 %v88
  %v394 = vunpack.c.l.b16 %v89
  %v395 = vunpack.c.l.b16 %v90
  %v396 = vunpack.c.l.b16 %v91
  %v397 = vunpack.c.l.b16 %v92
  %v398 = vunpack.c.l.b16 %v93
  %v399 = vunpack.c.l.b16 %v94
  %v400 = vunpack.c.l.b16 %v95
  %v401 = vunpack.c.l.b16 %v96
  %v402 = vpack.c.b16 %v387, %v386
  %v403 = vpack.c.b16 %v389, %v388
  %v404 = vpack.c.b16 %v391, %v390
  %v405 = vpack.c.b16 %v393, %v392
  %v406 = vpack.c.b16 %v395, %v394
  %v407 = vpack.c.b16 %v397, %v396
  %v408 = vpack.c.b16 %v399, %v398
  %v409 = vpack.c.b16 %v401, %v400
  %418 = vmatprep.subr.bf16.mxu0 0
  %419 = vmatpush1.bf16.msra.mxu0 %v402
  %420 = vmatprep.subr.bf16.mxu0 0
  %421 = vmatpush1.bf16.msra.mxu0 %v403
  %422 = vmatprep.subr.bf16.mxu0 0
  %423 = vmatpush1.bf16.msra.mxu0 %v404
  %424 = vmatprep.subr.bf16.mxu0 0
  %425 = vmatpush1.bf16.msra.mxu0 %v405
  %426 = vmatprep.subr.bf16.mxu0 0
  %427 = vmatpush1.bf16.msra.mxu0 %v406
  %428 = vmatprep.subr.bf16.mxu0 0
  %429 = vmatpush1.bf16.msra.mxu0 %v407
  %430 = vmatprep.subr.bf16.mxu0 0
  %431 = vmatpush1.bf16.msra.mxu0 %v408
  %432 = vmatprep.subr.bf16.mxu0 0
  %433 = vmatpush1.bf16.msra.mxu0 %v409
  %434 = vmatprep.subr.bf16.mxu0 0
  %435 = vmatpush1.bf16.msra.mxu0 0
  %436 = vmatprep.subr.bf16.mxu0 0
  %437 = vmatpush1.bf16.msra.mxu0 0
  %438 = vmatprep.subr.bf16.mxu0 0
  %439 = vmatpush1.bf16.msra.mxu0 0
  %440 = vmatprep.subr.bf16.mxu0 0
  %441 = vmatpush1.bf16.msra.mxu0 0
  %442 = vmatprep.subr.bf16.mxu0 0
  %443 = vmatpush1.bf16.msra.mxu0 0
  %444 = vmatprep.subr.bf16.mxu0 0
  %445 = vmatpush1.bf16.msra.mxu0 0
  %446 = vmatprep.subr.bf16.mxu0 0
  %447 = vmatpush1.bf16.msra.mxu0 0
  %448 = vmatprep.subr.bf16.mxu0 0
  %449 = vmatpush1.bf16.msra.mxu0 0
  %450 = vmatprep.mubr.bf16.mxu0 0
  %451 = vmatmul.mubr.bf16.gmra.mrb[0].mxu0 %v65
  %v452 = vpop.f32.mrb[0].mxu0
  %v453 = vadd.f32 %v244, %v452
  %v454 = vpop.f32.mrb[0].mxu0
  %v455 = vpop.f32.mrb[0].mxu0
  %v456 = vadd.f32 %v247, %v455
  %v457 = vpop.f32.mrb[0].mxu0
  %458 = vmatprep.mubr.bf16.mxu0 0
  %459 = vmatmul.mubr.bf16.gmra.mrb[0].mxu0 %v66
  %v460 = vpop.f32.mrb[0].mxu0
  %v461 = vadd.f32 %v252, %v460
  %v462 = vpop.f32.mrb[0].mxu0
  %v463 = vpop.f32.mrb[0].mxu0
  %v464 = vadd.f32 %v255, %v463
  %v465 = vpop.f32.mrb[0].mxu0
  %466 = vmatprep.mubr.bf16.mxu0 0
  %467 = vmatmul.mubr.bf16.gmra.mrb[0].mxu0 %v67
  %v468 = vpop.f32.mrb[0].mxu0
  %v469 = vadd.f32 %v260, %v468
  %v470 = vpop.f32.mrb[0].mxu0
  %v471 = vpop.f32.mrb[0].mxu0
  %v472 = vadd.f32 %v263, %v471
  %v473 = vpop.f32.mrb[0].mxu0
  %474 = vmatprep.mubr.bf16.mxu0 0
  %475 = vmatmul.mubr.bf16.gmra.mrb[0].mxu0 %v68
  %v476 = vpop.f32.mrb[0].mxu0
  %v477 = vadd.f32 %v268, %v476
  %v478 = vpop.f32.mrb[0].mxu0
  %v479 = vpop.f32.mrb[0].mxu0
  %v480 = vadd.f32 %v271, %v479
  %v481 = vpop.f32.mrb[0].mxu0
  %482 = vmatprep.mubr.bf16.mxu0 0
  %483 = vmatmul.mubr.bf16.gmra.mrb[0].mxu0 %v69
  %v484 = vpop.f32.mrb[0].mxu0
  %v485 = vadd.f32 %v276, %v484
  %v486 = vpop.f32.mrb[0].mxu0
  %v487 = vpop.f32.mrb[0].mxu0
  %v488 = vadd.f32 %v279, %v487
  %v489 = vpop.f32.mrb[0].mxu0
  %490 = vmatprep.mubr.bf16.mxu0 0
  %491 = vmatmul.mubr.bf16.gmra.mrb[0].mxu0 %v70
  %v492 = vpop.f32.mrb[0].mxu0
  %v493 = vadd.f32 %v284, %v492
  %v494 = vpop.f32.mrb[0].mxu0
  %v495 = vpop.f32.mrb[0].mxu0
  %v496 = vadd.f32 %v287, %v495
  %v497 = vpop.f32.mrb[0].mxu0
  %498 = vmatprep.mubr.bf16.mxu0 0
  %499 = vmatmul.mubr.bf16.gmra.mrb[0].mxu0 %v71
  %v500 = vpop.f32.mrb[0].mxu0
  %v501 = vadd.f32 %v292, %v500
  %v502 = vpop.f32.mrb[0].mxu0
  %v503 = vpop.f32.mrb[0].mxu0
  %v504 = vadd.f32 %v295, %v503
  %v505 = vpop.f32.mrb[0].mxu0
  %506 = vmatprep.mubr.bf16.mxu0 0
  %507 = vmatmul.mubr.bf16.gmra.mrb[0].mxu0 %v72
  %v508 = vpop.f32.mrb[0].mxu0
  %v509 = vadd.f32 %v300, %v508
  %v510 = vpop.f32.mrb[0].mxu0
  %v511 = vpop.f32.mrb[0].mxu0
  %v512 = vadd.f32 %v303, %v511
  %v513 = vpop.f32.mrb[0].mxu0
  %514 = vmatprep.mubr.bf16.mxu0 0
  %515 = vmatmul.mubr.bf16.gmra.mrb[0].mxu0 %v73
  %v516 = vpop.f32.mrb[0].mxu0
  %v517 = vadd.f32 %v308, %v516
  %v518 = vpop.f32.mrb[0].mxu0
  %v519 = vpop.f32.mrb[0].mxu0
  %v520 = vadd.f32 %v311, %v519
  %v521 = vpop.f32.mrb[0].mxu0
  %522 = vmatprep.mubr.bf16.mxu0 0
  %523 = vmatmul.mubr.bf16.gmra.mrb[0].mxu0 %v74
  %v524 = vpop.f32.mrb[0].mxu0
  %v525 = vadd.f32 %v316, %v524
  %v526 = vpop.f32.mrb[0].mxu0
  %v527 = vpop.f32.mrb[0].mxu0
  %v528 = vadd.f32 %v319, %v527
  %v529 = vpop.f32.mrb[0].mxu0
  %530 = vmatprep.mubr.bf16.mxu0 0
  %531 = vmatmul.mubr.bf16.gmra.mrb[0].mxu0 %v75
  %v532 = vpop.f32.mrb[0].mxu0
  %v533 = vadd.f32 %v324, %v532
  %v534 = vpop.f32.mrb[0].mxu0
  %v535 = vpop.f32.mrb[0].mxu0
  %v536 = vadd.f32 %v327, %v535
  %v537 = vpop.f32.mrb[0].mxu0
  %538 = vmatprep.mubr.bf16.mxu0 0
  %539 = vmatmul.mubr.bf16.gmra.mrb[0].mxu0 %v76
  %v540 = vpop.f32.mrb[0].mxu0
  %v541 = vadd.f32 %v332, %v540
  %v542 = vpop.f32.mrb[0].mxu0
  %v543 = vpop.f32.mrb[0].mxu0
  %v544 = vadd.f32 %v335, %v543
  %v545 = vpop.f32.mrb[0].mxu0
  %546 = vmatprep.mubr.bf16.mxu0 0
  %547 = vmatmul.mubr.bf16.gmra.mrb[0].mxu0 %v77
  %v548 = vpop.f32.mrb[0].mxu0
  %v549 = vadd.f32 %v340, %v548
  %v550 = vpop.f32.mrb[0].mxu0
  %v551 = vpop.f32.mrb[0].mxu0
  %v552 = vadd.f32 %v343, %v551
  %v553 = vpop.f32.mrb[0].mxu0
  %554 = vmatprep.mubr.bf16.mxu0 0
  %555 = vmatmul.mubr.bf16.gmra.mrb[0].mxu0 %v78
  %v556 = vpop.f32.mrb[0].mxu0
  %v557 = vadd.f32 %v348, %v556
  %v558 = vpop.f32.mrb[0].mxu0
  %v559 = vpop.f32.mrb[0].mxu0
  %v560 = vadd.f32 %v351, %v559
  %v561 = vpop.f32.mrb[0].mxu0
  %562 = vmatprep.mubr.bf16.mxu0 0
  %563 = vmatmul.mubr.bf16.gmra.mrb[0].mxu0 %v79
  %v564 = vpop.f32.mrb[0].mxu0
  %v565 = vadd.f32 %v356, %v564
  %v566 = vpop.f32.mrb[0].mxu0
  %v567 = vpop.f32.mrb[0].mxu0
  %v568 = vadd.f32 %v359, %v567
  %v569 = vpop.f32.mrb[0].mxu0
  %570 = vmatprep.mubr.bf16.mxu0 0
  %571 = vmatmul.mubr.bf16.gmra.mrb[0].mxu0 %v80
  %v572 = vpop.f32.mrb[0].mxu0
  %v573 = vadd.f32 %v364, %v572
  %v574 = vpop.f32.mrb[0].mxu0
  %v575 = vpop.f32.mrb[0].mxu0
  %v576 = vadd.f32 %v367, %v575
  %v577 = vpop.f32.mrb[0].mxu0
  %578 = vdwg.mxu0
  %v579 = vld [vmem:[%s4] sm:$0x1]
  %v581 = vlaneseq
  %v582 = vshrl.u32 %v581, 7
  %v583 = vsub.s32 0, %v582
  %v584 = vrot.slane %v579, %v583
  %v586 = vadd.f32 %v453, %v584
  %v587 = vadd.f32 %v456, %v584
  %v588 = vadd.f32 %v461, %v584
  %v589 = vadd.f32 %v464, %v584
  %v590 = vadd.f32 %v469, %v584
  %v591 = vadd.f32 %v472, %v584
  %v592 = vadd.f32 %v477, %v584
  %v593 = vadd.f32 %v480, %v584
  %v594 = vadd.f32 %v485, %v584
  %v595 = vadd.f32 %v488, %v584
  %v596 = vadd.f32 %v493, %v584
  %v597 = vadd.f32 %v496, %v584
  %v598 = vadd.f32 %v501, %v584
  %v599 = vadd.f32 %v504, %v584
  %v600 = vadd.f32 %v509, %v584
  %v601 = vadd.f32 %v512, %v584
  %v602 = vadd.f32 %v517, %v584
  %v603 = vadd.f32 %v520, %v584
  %v604 = vadd.f32 %v525, %v584
  %v605 = vadd.f32 %v528, %v584
  %v606 = vadd.f32 %v533, %v584
  %v607 = vadd.f32 %v536, %v584
  %v608 = vadd.f32 %v541, %v584
  %v609 = vadd.f32 %v544, %v584
  %v610 = vadd.f32 %v549, %v584
  %v611 = vadd.f32 %v552, %v584
  %v612 = vadd.f32 %v557, %v584
  %v613 = vadd.f32 %v560, %v584
  %v614 = vadd.f32 %v565, %v584
  %v615 = vadd.f32 %v568, %v584
  %v616 = vadd.f32 %v573, %v584
  %v617 = vadd.f32 %v576, %v584
  %v618 = vxor.u32 %v586, 2147483648
  %v619 = vxor.u32 %v587, 2147483648
  %v620 = vxor.u32 %v588, 2147483648
  %v621 = vxor.u32 %v589, 2147483648
  %v622 = vxor.u32 %v590, 2147483648
  %v623 = vxor.u32 %v591, 2147483648
  %v624 = vxor.u32 %v592, 2147483648
  %v625 = vxor.u32 %v593, 2147483648
  %v626 = vxor.u32 %v594, 2147483648
  %v627 = vxor.u32 %v595, 2147483648
  %v628 = vxor.u32 %v596, 2147483648
  %v629 = vxor.u32 %v597, 2147483648
  %v630 = vxor.u32 %v598, 2147483648
  %v631 = vxor.u32 %v599, 2147483648
  %v632 = vxor.u32 %v600, 2147483648
  %v633 = vxor.u32 %v601, 2147483648
  %v634 = vxor.u32 %v602, 2147483648
  %v635 = vxor.u32 %v603, 2147483648
  %v636 = vxor.u32 %v604, 2147483648
  %v637 = vxor.u32 %v605, 2147483648
  %v638 = vxor.u32 %v606, 2147483648
  %v639 = vxor.u32 %v607, 2147483648
  %v640 = vxor.u32 %v608, 2147483648
  %v641 = vxor.u32 %v609, 2147483648
  %v642 = vxor.u32 %v610, 2147483648
  %v643 = vxor.u32 %v611, 2147483648
  %v644 = vxor.u32 %v612, 2147483648
  %v645 = vxor.u32 %v613, 2147483648
  %v646 = vxor.u32 %v614, 2147483648
  %v647 = vxor.u32 %v615, 2147483648
  %v648 = vxor.u32 %v616, 2147483648
  %v649 = vxor.u32 %v617, 2147483648
  %v650 = vmul.f32 %v618, 1.442695
  %v651 = vpow.pop %v650
  %v652 = vmul.f32 %v619, 1.442695
  %v653 = vpow.pop %v652
  %v654 = vmul.f32 %v620, 1.442695
  %v655 = vpow.pop %v654
  %v656 = vmul.f32 %v621, 1.442695
  %v657 = vpow.pop %v656
  %v658 = vmul.f32 %v622, 1.442695
  %v659 = vpow.pop %v658
  %v660 = vmul.f32 %v623, 1.442695
  %v661 = vpow.pop %v660
  %v662 = vmul.f32 %v624, 1.442695
  %v663 = vpow.pop %v662
  %v664 = vmul.f32 %v625, 1.442695
  %v665 = vpow.pop %v664
  %v666 = vmul.f32 %v626, 1.442695
  %v667 = vpow.pop %v666
  %v668 = vmul.f32 %v627, 1.442695
  %v669 = vpow.pop %v668
  %v670 = vmul.f32 %v628, 1.442695
  %v671 = vpow.pop %v670
  %v672 = vmul.f32 %v629, 1.442695
  %v673 = vpow.pop %v672
  %v674 = vmul.f32 %v630, 1.442695
  %v675 = vpow.pop %v674
  %v676 = vmul.f32 %v631, 1.442695
  %v677 = vpow.pop %v676
  %v678 = vmul.f32 %v632, 1.442695
  %v679 = vpow.pop %v678
  %v680 = vmul.f32 %v633, 1.442695
  %v681 = vpow.pop %v680
  %v682 = vmul.f32 %v634, 1.442695
  %v683 = vpow.pop %v682
  %v684 = vmul.f32 %v635, 1.442695
  %v685 = vpow.pop %v684
  %v686 = vmul.f32 %v636, 1.442695
  %v687 = vpow.pop %v686
  %v688 = vmul.f32 %v637, 1.442695
  %v689 = vpow.pop %v688
  %v690 = vmul.f32 %v638, 1.442695
  %v691 = vpow.pop %v690
  %v692 = vmul.f32 %v639, 1.442695
  %v693 = vpow.pop %v692
  %v694 = vmul.f32 %v640, 1.442695
  %v695 = vpow.pop %v694
  %v696 = vmul.f32 %v641, 1.442695
  %v697 = vpow.pop %v696
  %v698 = vmul.f32 %v642, 1.442695
  %v699 = vpow.pop %v698
  %v700 = vmul.f32 %v643, 1.442695
  %v701 = vpow.pop %v700
  %v702 = vmul.f32 %v644, 1.442695
  %v703 = vpow.pop %v702
  %v704 = vmul.f32 %v645, 1.442695
  %v705 = vpow.pop %v704
  %v706 = vmul.f32 %v646, 1.442695
  %v707 = vpow.pop %v706
  %v708 = vmul.f32 %v647, 1.442695
  %v709 = vpow.pop %v708
  %v710 = vmul.f32 %v648, 1.442695
  %v711 = vpow.pop %v710
  %v712 = vmul.f32 %v649, 1.442695
  %v713 = vpow.pop %v712
  %v714 = vadd.f32 %v651, 1.0
  %v715 = vadd.f32 %v653, 1.0
  %v716 = vadd.f32 %v655, 1.0
  %v717 = vadd.f32 %v657, 1.0
  %v718 = vadd.f32 %v659, 1.0
  %v719 = vadd.f32 %v661, 1.0
  %v720 = vadd.f32 %v663, 1.0
  %v721 = vadd.f32 %v665, 1.0
  %v722 = vadd.f32 %v667, 1.0
  %v723 = vadd.f32 %v669, 1.0
  %v724 = vadd.f32 %v671, 1.0
  %v725 = vadd.f32 %v673, 1.0
  %v726 = vadd.f32 %v675, 1.0
  %v727 = vadd.f32 %v677, 1.0
  %v728 = vadd.f32 %v679, 1.0
  %v729 = vadd.f32 %v681, 1.0
  %v730 = vadd.f32 %v683, 1.0
  %v731 = vadd.f32 %v685, 1.0
  %v732 = vadd.f32 %v687, 1.0
  %v733 = vadd.f32 %v689, 1.0
  %v734 = vadd.f32 %v691, 1.0
  %v735 = vadd.f32 %v693, 1.0
  %v736 = vadd.f32 %v695, 1.0
  %v737 = vadd.f32 %v697, 1.0
  %v738 = vadd.f32 %v699, 1.0
  %v739 = vadd.f32 %v701, 1.0
  %v740 = vadd.f32 %v703, 1.0
  %v741 = vadd.f32 %v705, 1.0
  %v742 = vadd.f32 %v707, 1.0
  %v743 = vadd.f32 %v709, 1.0
  %v744 = vadd.f32 %v711, 1.0
  %v745 = vadd.f32 %v713, 1.0
  %v746 = vrcp.pop %v714
  %v747 = vmul.f32 1.0, %v746
  %v748 = vrcp.pop %v715
  %v749 = vmul.f32 1.0, %v748
  %v750 = vrcp.pop %v716
  %v751 = vmul.f32 1.0, %v750
  %v752 = vrcp.pop %v717
  %v753 = vmul.f32 1.0, %v752
  %v754 = vrcp.pop %v718
  %v755 = vmul.f32 1.0, %v754
  %v756 = vrcp.pop %v719
  %v757 = vmul.f32 1.0, %v756
  %v758 = vrcp.pop %v720
  %v759 = vmul.f32 1.0, %v758
  %v760 = vrcp.pop %v721
  %v761 = vmul.f32 1.0, %v760
  %v762 = vrcp.pop %v722
  %v763 = vmul.f32 1.0, %v762
  %v764 = vrcp.pop %v723
  %v765 = vmul.f32 1.0, %v764
  %v766 = vrcp.pop %v724
  %v767 = vmul.f32 1.0, %v766
  %v768 = vrcp.pop %v725
  %v769 = vmul.f32 1.0, %v768
  %v770 = vrcp.pop %v726
  %v771 = vmul.f32 1.0, %v770
  %v772 = vrcp.pop %v727
  %v773 = vmul.f32 1.0, %v772
  %v774 = vrcp.pop %v728
  %v775 = vmul.f32 1.0, %v774
  %v776 = vrcp.pop %v729
  %v777 = vmul.f32 1.0, %v776
  %v778 = vrcp.pop %v730
  %v779 = vmul.f32 1.0, %v778
  %v780 = vrcp.pop %v731
  %v781 = vmul.f32 1.0, %v780
  %v782 = vrcp.pop %v732
  %v783 = vmul.f32 1.0, %v782
  %v784 = vrcp.pop %v733
  %v785 = vmul.f32 1.0, %v784
  %v786 = vrcp.pop %v734
  %v787 = vmul.f32 1.0, %v786
  %v788 = vrcp.pop %v735
  %v789 = vmul.f32 1.0, %v788
  %v790 = vrcp.pop %v736
  %v791 = vmul.f32 1.0, %v790
  %v792 = vrcp.pop %v737
  %v793 = vmul.f32 1.0, %v792
  %v794 = vrcp.pop %v738
  %v795 = vmul.f32 1.0, %v794
  %v796 = vrcp.pop %v739
  %v797 = vmul.f32 1.0, %v796
  %v798 = vrcp.pop %v740
  %v799 = vmul.f32 1.0, %v798
  %v800 = vrcp.pop %v741
  %v801 = vmul.f32 1.0, %v800
  %v802 = vrcp.pop %v742
  %v803 = vmul.f32 1.0, %v802
  %v804 = vrcp.pop %v743
  %v805 = vmul.f32 1.0, %v804
  %v806 = vrcp.pop %v744
  %v807 = vmul.f32 1.0, %v806
  %v808 = vrcp.pop %v745
  %v809 = vmul.f32 1.0, %v808
  %v810 = vmul.f32 %v586, %v747
  %v811 = vmul.f32 %v587, %v749
  %v812 = vmul.f32 %v588, %v751
  %v813 = vmul.f32 %v589, %v753
  %v814 = vmul.f32 %v590, %v755
  %v815 = vmul.f32 %v591, %v757
  %v816 = vmul.f32 %v592, %v759
  %v817 = vmul.f32 %v593, %v761
  %v818 = vmul.f32 %v594, %v763
  %v819 = vmul.f32 %v595, %v765
  %v820 = vmul.f32 %v596, %v767
  %v821 = vmul.f32 %v597, %v769
  %v822 = vmul.f32 %v598, %v771
  %v823 = vmul.f32 %v599, %v773
  %v824 = vmul.f32 %v600, %v775
  %v825 = vmul.f32 %v601, %v777
  %v826 = vmul.f32 %v602, %v779
  %v827 = vmul.f32 %v603, %v781
  %v828 = vmul.f32 %v604, %v783
  %v829 = vmul.f32 %v605, %v785
  %v830 = vmul.f32 %v606, %v787
  %v831 = vmul.f32 %v607, %v789
  %v832 = vmul.f32 %v608, %v791
  %v833 = vmul.f32 %v609, %v793
  %v834 = vmul.f32 %v610, %v795
  %v835 = vmul.f32 %v611, %v797
  %v836 = vmul.f32 %v612, %v799
  %v837 = vmul.f32 %v613, %v801
  %v838 = vmul.f32 %v614, %v803
  %v839 = vmul.f32 %v615, %v805
  %v840 = vmul.f32 %v616, %v807
  %v841 = vmul.f32 %v617, %v809
  %v842 = vpack.c.bf16 %v811, %v810
  %v843 = vpack.c.bf16 %v813, %v812
  %v844 = vpack.c.bf16 %v815, %v814
  %v845 = vpack.c.bf16 %v817, %v816
  %v846 = vpack.c.bf16 %v819, %v818
  %v847 = vpack.c.bf16 %v821, %v820
  %v848 = vpack.c.bf16 %v823, %v822
  %v849 = vpack.c.bf16 %v825, %v824
  %v850 = vpack.c.bf16 %v827, %v826
  %v851 = vpack.c.bf16 %v829, %v828
  %v852 = vpack.c.bf16 %v831, %v830
  %v853 = vpack.c.bf16 %v833, %v832
  %v854 = vpack.c.bf16 %v835, %v834
  %v855 = vpack.c.bf16 %v837, %v836
  %v856 = vpack.c.bf16 %v839, %v838
  %v857 = vpack.c.bf16 %v841, %v840
  %v858 = vld [vmem:[%s5] sm:$0xf]
  %v859 = vld [vmem:[%s5 + $0x4] sm:$0xf]
  %v860 = vld [vmem:[%s5 + $0x8] sm:$0xf]
  %v861 = vld [vmem:[%s5 + $0xc] sm:$0xf]
  %v862 = vld [vmem:[%s5 + $0x10] sm:$0xf]
  %v863 = vld [vmem:[%s5 + $0x14] sm:$0xf]
  %v864 = vld [vmem:[%s5 + $0x18] sm:$0xf]
  %v865 = vld [vmem:[%s5 + $0x1c] sm:$0xf]
  %v866 = vld [vmem:[%s5 + $0x20] sm:$0xf]
  %v867 = vld [vmem:[%s5 + $0x24] sm:$0xf]
  %v868 = vld [vmem:[%s5 + $0x28] sm:$0xf]
  %v869 = vld [vmem:[%s5 + $0x2c] sm:$0xf]
  %v870 = vld [vmem:[%s5 + $0x30] sm:$0xf]
  %v871 = vld [vmem:[%s5 + $0x34] sm:$0xf]
  %v872 = vld [vmem:[%s5 + $0x38] sm:$0xf]
  %v873 = vld [vmem:[%s5 + $0x3c] sm:$0xf]
  %v874 = vld [vmem:[%s6] sm:$0x1]
  %v876 = vlaneseq
  %v877 = vshrl.u32 %v876, 7
  %v878 = vsub.s32 0, %v877
  %v879 = vrot.slane %v874, %v878
  %v897 = vunpack.c.l.b16 %v858
  %v898 = vunpack.c.l.b16 %v859
  %v899 = vunpack.c.l.b16 %v860
  %v900 = vunpack.c.l.b16 %v861
  %v901 = vunpack.c.l.b16 %v862
  %v902 = vunpack.c.l.b16 %v863
  %v903 = vunpack.c.l.b16 %v864
  %v904 = vunpack.c.l.b16 %v865
  %v905 = vunpack.c.l.b16 %v866
  %v906 = vunpack.c.l.b16 %v867
  %v907 = vunpack.c.l.b16 %v868
  %v908 = vunpack.c.l.b16 %v869
  %v909 = vunpack.c.l.b16 %v870
  %v910 = vunpack.c.l.b16 %v871
  %v911 = vunpack.c.l.b16 %v872
  %v912 = vunpack.c.l.b16 %v873
  %v913 = vpack.c.b16 %v898, %v897
  %v914 = vpack.c.b16 %v900, %v899
  %v915 = vpack.c.b16 %v902, %v901
  %v916 = vpack.c.b16 %v904, %v903
  %v917 = vpack.c.b16 %v906, %v905
  %v918 = vpack.c.b16 %v908, %v907
  %v919 = vpack.c.b16 %v910, %v909
  %v920 = vpack.c.b16 %v912, %v911
  %929 = vmatprep.subr.bf16.mxu0 0
  %930 = vmatpush1.bf16.msra.mxu0 %v913
  %931 = vmatprep.subr.bf16.mxu0 0
  %932 = vmatpush1.bf16.msra.mxu0 %v914
  %933 = vmatprep.subr.bf16.mxu0 0
  %934 = vmatpush1.bf16.msra.mxu0 %v915
  %935 = vmatprep.subr.bf16.mxu0 0
  %936 = vmatpush1.bf16.msra.mxu0 %v916
  %937 = vmatprep.subr.bf16.mxu0 0
  %938 = vmatpush1.bf16.msra.mxu0 %v917
  %939 = vmatprep.subr.bf16.mxu0 0
  %940 = vmatpush1.bf16.msra.mxu0 %v918
  %941 = vmatprep.subr.bf16.mxu0 0
  %942 = vmatpush1.bf16.msra.mxu0 %v919
  %943 = vmatprep.subr.bf16.mxu0 0
  %944 = vmatpush1.bf16.msra.mxu0 %v920
  %945 = vmatprep.subr.bf16.mxu0 0
  %946 = vmatpush1.bf16.msra.mxu0 0
  %947 = vmatprep.subr.bf16.mxu0 0
  %948 = vmatpush1.bf16.msra.mxu0 0
  %949 = vmatprep.subr.bf16.mxu0 0
  %950 = vmatpush1.bf16.msra.mxu0 0
  %951 = vmatprep.subr.bf16.mxu0 0
  %952 = vmatpush1.bf16.msra.mxu0 0
  %953 = vmatprep.subr.bf16.mxu0 0
  %954 = vmatpush1.bf16.msra.mxu0 0
  %955 = vmatprep.subr.bf16.mxu0 0
  %956 = vmatpush1.bf16.msra.mxu0 0
  %957 = vmatprep.subr.bf16.mxu0 0
  %958 = vmatpush1.bf16.msra.mxu0 0
  %959 = vmatprep.subr.bf16.mxu0 0
  %960 = vmatpush1.bf16.msra.mxu0 0
  %961 = vmatprep.mubr.bf16.mxu0 0
  %962 = vmatmul.mubr.bf16.gmra.mrb[0].mxu0 %v842
  %v963 = vpop.f32.mrb[0].mxu0
  %v964 = vadd.f32 %v879, %v963
  %v965 = vpop.f32.mrb[0].mxu0
  %v966 = vpop.f32.mrb[0].mxu0
  %v967 = vadd.f32 %v879, %v966
  %v968 = vpop.f32.mrb[0].mxu0
  %969 = vmatprep.mubr.bf16.mxu0 0
  %970 = vmatmul.mubr.bf16.gmra.mrb[0].mxu0 %v843
  %v971 = vpop.f32.mrb[0].mxu0
  %v972 = vadd.f32 %v879, %v971
  %v973 = vpop.f32.mrb[0].mxu0
  %v974 = vpop.f32.mrb[0].mxu0
  %v975 = vadd.f32 %v879, %v974
  %v976 = vpop.f32.mrb[0].mxu0
  %977 = vmatprep.mubr.bf16.mxu0 0
  %978 = vmatmul.mubr.bf16.gmra.mrb[0].mxu0 %v844
  %v979 = vpop.f32.mrb[0].mxu0
  %v980 = vadd.f32 %v879, %v979
  %v981 = vpop.f32.mrb[0].mxu0
  %v982 = vpop.f32.mrb[0].mxu0
  %v983 = vadd.f32 %v879, %v982
  %v984 = vpop.f32.mrb[0].mxu0
  %985 = vmatprep.mubr.bf16.mxu0 0
  %986 = vmatmul.mubr.bf16.gmra.mrb[0].mxu0 %v845
  %v987 = vpop.f32.mrb[0].mxu0
  %v988 = vadd.f32 %v879, %v987
  %v989 = vpop.f32.mrb[0].mxu0
  %v990 = vpop.f32.mrb[0].mxu0
  %v991 = vadd.f32 %v879, %v990
  %v992 = vpop.f32.mrb[0].mxu0
  %993 = vmatprep.mubr.bf16.mxu0 0
  %994 = vmatmul.mubr.bf16.gmra.mrb[0].mxu0 %v846
  %v995 = vpop.f32.mrb[0].mxu0
  %v996 = vadd.f32 %v879, %v995
  %v997 = vpop.f32.mrb[0].mxu0
  %v998 = vpop.f32.mrb[0].mxu0
  %v999 = vadd.f32 %v879, %v998
  %v1000 = vpop.f32.mrb[0].mxu0
  %1001 = vmatprep.mubr.bf16.mxu0 0
  %1002 = vmatmul.mubr.bf16.gmra.mrb[0].mxu0 %v847
  %v1003 = vpop.f32.mrb[0].mxu0
  %v1004 = vadd.f32 %v879, %v1003
  %v1005 = vpop.f32.mrb[0].mxu0
  %v1006 = vpop.f32.mrb[0].mxu0
  %v1007 = vadd.f32 %v879, %v1006
  %v1008 = vpop.f32.mrb[0].mxu0
  %1009 = vmatprep.mubr.bf16.mxu0 0
  %1010 = vmatmul.mubr.bf16.gmra.mrb[0].mxu0 %v848
  %v1011 = vpop.f32.mrb[0].mxu0
  %v1012 = vadd.f32 %v879, %v1011
  %v1013 = vpop.f32.mrb[0].mxu0
  %v1014 = vpop.f32.mrb[0].mxu0
  %v1015 = vadd.f32 %v879, %v1014
  %v1016 = vpop.f32.mrb[0].mxu0
  %1017 = vmatprep.mubr.bf16.mxu0 0
  %1018 = vmatmul.mubr.bf16.gmra.mrb[0].mxu0 %v849
  %v1019 = vpop.f32.mrb[0].mxu0
  %v1020 = vadd.f32 %v879, %v1019
  %v1021 = vpop.f32.mrb[0].mxu0
  %v1022 = vpop.f32.mrb[0].mxu0
  %v1023 = vadd.f32 %v879, %v1022
  %v1024 = vpop.f32.mrb[0].mxu0
  %1025 = vmatprep.mubr.bf16.mxu0 0
  %1026 = vmatmul.mubr.bf16.gmra.mrb[0].mxu0 %v850
  %v1027 = vpop.f32.mrb[0].mxu0
  %v1028 = vadd.f32 %v879, %v1027
  %v1029 = vpop.f32.mrb[0].mxu0
  %v1030 = vpop.f32.mrb[0].mxu0
  %v1031 = vadd.f32 %v879, %v1030
  %v1032 = vpop.f32.mrb[0].mxu0
  %1033 = vmatprep.mubr.bf16.mxu0 0
  %1034 = vmatmul.mubr.bf16.gmra.mrb[0].mxu0 %v851
  %v1035 = vpop.f32.mrb[0].mxu0
  %v1036 = vadd.f32 %v879, %v1035
  %v1037 = vpop.f32.mrb[0].mxu0
  %v1038 = vpop.f32.mrb[0].mxu0
  %v1039 = vadd.f32 %v879, %v1038
  %v1040 = vpop.f32.mrb[0].mxu0
  %1041 = vmatprep.mubr.bf16.mxu0 0
  %1042 = vmatmul.mubr.bf16.gmra.mrb[0].mxu0 %v852
  %v1043 = vpop.f32.mrb[0].mxu0
  %v1044 = vadd.f32 %v879, %v1043
  %v1045 = vpop.f32.mrb[0].mxu0
  %v1046 = vpop.f32.mrb[0].mxu0
  %v1047 = vadd.f32 %v879, %v1046
  %v1048 = vpop.f32.mrb[0].mxu0
  %1049 = vmatprep.mubr.bf16.mxu0 0
  %1050 = vmatmul.mubr.bf16.gmra.mrb[0].mxu0 %v853
  %v1051 = vpop.f32.mrb[0].mxu0
  %v1052 = vadd.f32 %v879, %v1051
  %v1053 = vpop.f32.mrb[0].mxu0
  %v1054 = vpop.f32.mrb[0].mxu0
  %v1055 = vadd.f32 %v879, %v1054
  %v1056 = vpop.f32.mrb[0].mxu0
  %1057 = vmatprep.mubr.bf16.mxu0 0
  %1058 = vmatmul.mubr.bf16.gmra.mrb[0].mxu0 %v854
  %v1059 = vpop.f32.mrb[0].mxu0
  %v1060 = vadd.f32 %v879, %v1059
  %v1061 = vpop.f32.mrb[0].mxu0
  %v1062 = vpop.f32.mrb[0].mxu0
  %v1063 = vadd.f32 %v879, %v1062
  %v1064 = vpop.f32.mrb[0].mxu0
  %1065 = vmatprep.mubr.bf16.mxu0 0
  %1066 = vmatmul.mubr.bf16.gmra.mrb[0].mxu0 %v855
  %v1067 = vpop.f32.mrb[0].mxu0
  %v1068 = vadd.f32 %v879, %v1067
  %v1069 = vpop.f32.mrb[0].mxu0
  %v1070 = vpop.f32.mrb[0].mxu0
  %v1071 = vadd.f32 %v879, %v1070
  %v1072 = vpop.f32.mrb[0].mxu0
  %1073 = vmatprep.mubr.bf16.mxu0 0
  %1074 = vmatmul.mubr.bf16.gmra.mrb[0].mxu0 %v856
  %v1075 = vpop.f32.mrb[0].mxu0
  %v1076 = vadd.f32 %v879, %v1075
  %v1077 = vpop.f32.mrb[0].mxu0
  %v1078 = vpop.f32.mrb[0].mxu0
  %v1079 = vadd.f32 %v879, %v1078
  %v1080 = vpop.f32.mrb[0].mxu0
  %1081 = vmatprep.mubr.bf16.mxu0 0
  %1082 = vmatmul.mubr.bf16.gmra.mrb[0].mxu0 %v857
  %v1083 = vpop.f32.mrb[0].mxu0
  %v1084 = vadd.f32 %v879, %v1083
  %v1085 = vpop.f32.mrb[0].mxu0
  %v1086 = vpop.f32.mrb[0].mxu0
  %v1087 = vadd.f32 %v879, %v1086
  %v1088 = vpop.f32.mrb[0].mxu0
  %1089 = vdwg.mxu0
  %1090 = vadd.xlane.f32.xlu0 %v964
  %v1091 = vpop.xlane.xlu0 %1090
  %1092 = vadd.xlane.f32.xlu0 %v967
  %v1093 = vpop.xlane.xlu0 %1092
  %1094 = vadd.xlane.f32.xlu0 %v972
  %v1095 = vpop.xlane.xlu0 %1094
  %1096 = vadd.xlane.f32.xlu0 %v975
  %v1097 = vpop.xlane.xlu0 %1096
  %1098 = vadd.xlane.f32.xlu0 %v980
  %v1099 = vpop.xlane.xlu0 %1098
  %1100 = vadd.xlane.f32.xlu0 %v983
  %v1101 = vpop.xlane.xlu0 %1100
  %1102 = vadd.xlane.f32.xlu0 %v988
  %v1103 = vpop.xlane.xlu0 %1102
  %1104 = vadd.xlane.f32.xlu0 %v991
  %v1105 = vpop.xlane.xlu0 %1104
  %1106 = vadd.xlane.f32.xlu0 %v996
  %v1107 = vpop.xlane.xlu0 %1106
  %1108 = vadd.xlane.f32.xlu0 %v999
  %v1109 = vpop.xlane.xlu0 %1108
  %1110 = vadd.xlane.f32.xlu0 %v1004
  %v1111 = vpop.xlane.xlu0 %1110
  %1112 = vadd.xlane.f32.xlu0 %v1007
  %v1113 = vpop.xlane.xlu0 %1112
  %1114 = vadd.xlane.f32.xlu0 %v1012
  %v1115 = vpop.xlane.xlu0 %1114
  %1116 = vadd.xlane.f32.xlu0 %v1015
  %v1117 = vpop.xlane.xlu0 %1116
  %1118 = vadd.xlane.f32.xlu0 %v1020
  %v1119 = vpop.xlane.xlu0 %1118
  %1120 = vadd.xlane.f32.xlu0 %v1023
  %v1121 = vpop.xlane.xlu0 %1120
  %1122 = vadd.xlane.f32.xlu0 %v1028
  %v1123 = vpop.xlane.xlu0 %1122
  %1124 = vadd.xlane.f32.xlu0 %v1031
  %v1125 = vpop.xlane.xlu0 %1124
  %1126 = vadd.xlane.f32.xlu0 %v1036
  %v1127 = vpop.xlane.xlu0 %1126
  %1128 = vadd.xlane.f32.xlu0 %v1039
  %v1129 = vpop.xlane.xlu0 %1128
  %1130 = vadd.xlane.f32.xlu0 %v1044
  %v1131 = vpop.xlane.xlu0 %1130
  %1132 = vadd.xlane.f32.xlu0 %v1047
  %v1133 = vpop.xlane.xlu0 %1132
  %1134 = vadd.xlane.f32.xlu0 %v1052
  %v1135 = vpop.xlane.xlu0 %1134
  %1136 = vadd.xlane.f32.xlu0 %v1055
  %v1137 = vpop.xlane.xlu0 %1136
  %1138 = vadd.xlane.f32.xlu0 %v1060
  %v1139 = vpop.xlane.xlu0 %1138
  %1140 = vadd.xlane.f32.xlu0 %v1063
  %v1141 = vpop.xlane.xlu0 %1140
  %1142 = vadd.xlane.f32.xlu0 %v1068
  %v1143 = vpop.xlane.xlu0 %1142
  %1144 = vadd.xlane.f32.xlu0 %v1071
  %v1145 = vpop.xlane.xlu0 %1144
  %1146 = vadd.xlane.f32.xlu0 %v1076
  %v1147 = vpop.xlane.xlu0 %1146
  %1148 = vadd.xlane.f32.xlu0 %v1079
  %v1149 = vpop.xlane.xlu0 %1148
  %1150 = vadd.xlane.f32.xlu0 %v1084
  %v1151 = vpop.xlane.xlu0 %1150
  %1152 = vadd.xlane.f32.xlu0 %v1087
  %v1153 = vpop.xlane.xlu0 %1152
  %v1154 = vrcp.pop 128.0
  %v1155 = vmul.f32 %v1091, %v1154
  %v1156 = vmul.f32 %v1093, %v1154
  %v1157 = vmul.f32 %v1095, %v1154
  %v1158 = vmul.f32 %v1097, %v1154
  %v1159 = vmul.f32 %v1099, %v1154
  %v1160 = vmul.f32 %v1101, %v1154
  %v1161 = vmul.f32 %v1103, %v1154
  %v1162 = vmul.f32 %v1105, %v1154
  %v1163 = vmul.f32 %v1107, %v1154
  %v1164 = vmul.f32 %v1109, %v1154
  %v1165 = vmul.f32 %v1111, %v1154
  %v1166 = vmul.f32 %v1113, %v1154
  %v1167 = vmul.f32 %v1115, %v1154
  %v1168 = vmul.f32 %v1117, %v1154
  %v1169 = vmul.f32 %v1119, %v1154
  %v1170 = vmul.f32 %v1121, %v1154
  %v1171 = vmul.f32 %v1123, %v1154
  %v1172 = vmul.f32 %v1125, %v1154
  %v1173 = vmul.f32 %v1127, %v1154
  %v1174 = vmul.f32 %v1129, %v1154
  %v1175 = vmul.f32 %v1131, %v1154
  %v1176 = vmul.f32 %v1133, %v1154
  %v1177 = vmul.f32 %v1135, %v1154
  %v1178 = vmul.f32 %v1137, %v1154
  %v1179 = vmul.f32 %v1139, %v1154
  %v1180 = vmul.f32 %v1141, %v1154
  %v1181 = vmul.f32 %v1143, %v1154
  %v1182 = vmul.f32 %v1145, %v1154
  %v1183 = vmul.f32 %v1147, %v1154
  %v1184 = vmul.f32 %v1149, %v1154
  %v1185 = vmul.f32 %v1151, %v1154
  %v1186 = vmul.f32 %v1153, %v1154
  %v1187 = vmul.f32 %v964, %v964
  %v1188 = vmul.f32 %v967, %v967
  %v1189 = vmul.f32 %v972, %v972
  %v1190 = vmul.f32 %v975, %v975
  %v1191 = vmul.f32 %v980, %v980
  %v1192 = vmul.f32 %v983, %v983
  %v1193 = vmul.f32 %v988, %v988
  %v1194 = vmul.f32 %v991, %v991
  %v1195 = vmul.f32 %v996, %v996
  %v1196 = vmul.f32 %v999, %v999
  %v1197 = vmul.f32 %v1004, %v1004
  %v1198 = vmul.f32 %v1007, %v1007
  %v1199 = vmul.f32 %v1012, %v1012
  %v1200 = vmul.f32 %v1015, %v1015
  %v1201 = vmul.f32 %v1020, %v1020
  %v1202 = vmul.f32 %v1023, %v1023
  %v1203 = vmul.f32 %v1028, %v1028
  %v1204 = vmul.f32 %v1031, %v1031
  %v1205 = vmul.f32 %v1036, %v1036
  %v1206 = vmul.f32 %v1039, %v1039
  %v1207 = vmul.f32 %v1044, %v1044
  %v1208 = vmul.f32 %v1047, %v1047
  %v1209 = vmul.f32 %v1052, %v1052
  %v1210 = vmul.f32 %v1055, %v1055
  %v1211 = vmul.f32 %v1060, %v1060
  %v1212 = vmul.f32 %v1063, %v1063
  %v1213 = vmul.f32 %v1068, %v1068
  %v1214 = vmul.f32 %v1071, %v1071
  %v1215 = vmul.f32 %v1076, %v1076
  %v1216 = vmul.f32 %v1079, %v1079
  %v1217 = vmul.f32 %v1084, %v1084
  %v1218 = vmul.f32 %v1087, %v1087
  %1219 = vadd.xlane.f32.xlu0 %v1187
  %v1220 = vpop.xlane.xlu0 %1219
  %1221 = vadd.xlane.f32.xlu0 %v1188
  %v1222 = vpop.xlane.xlu0 %1221
  %1223 = vadd.xlane.f32.xlu0 %v1189
  %v1224 = vpop.xlane.xlu0 %1223
  %1225 = vadd.xlane.f32.xlu0 %v1190
  %v1226 = vpop.xlane.xlu0 %1225
  %1227 = vadd.xlane.f32.xlu0 %v1191
  %v1228 = vpop.xlane.xlu0 %1227
  %1229 = vadd.xlane.f32.xlu0 %v1192
  %v1230 = vpop.xlane.xlu0 %1229
  %1231 = vadd.xlane.f32.xlu0 %v1193
  %v1232 = vpop.xlane.xlu0 %1231
  %1233 = vadd.xlane.f32.xlu0 %v1194
  %v1234 = vpop.xlane.xlu0 %1233
  %1235 = vadd.xlane.f32.xlu0 %v1195
  %v1236 = vpop.xlane.xlu0 %1235
  %1237 = vadd.xlane.f32.xlu0 %v1196
  %v1238 = vpop.xlane.xlu0 %1237
  %1239 = vadd.xlane.f32.xlu0 %v1197
  %v1240 = vpop.xlane.xlu0 %1239
  %1241 = vadd.xlane.f32.xlu0 %v1198
  %v1242 = vpop.xlane.xlu0 %1241
  %1243 = vadd.xlane.f32.xlu0 %v1199
  %v1244 = vpop.xlane.xlu0 %1243
  %1245 = vadd.xlane.f32.xlu0 %v1200
  %v1246 = vpop.xlane.xlu0 %1245
  %1247 = vadd.xlane.f32.xlu0 %v1201
  %v1248 = vpop.xlane.xlu0 %1247
  %1249 = vadd.xlane.f32.xlu0 %v1202
  %v1250 = vpop.xlane.xlu0 %1249
  %1251 = vadd.xlane.f32.xlu0 %v1203
  %v1252 = vpop.xlane.xlu0 %1251
  %1253 = vadd.xlane.f32.xlu0 %v1204
  %v1254 = vpop.xlane.xlu0 %1253
  %1255 = vadd.xlane.f32.xlu0 %v1205
  %v1256 = vpop.xlane.xlu0 %1255
  %1257 = vadd.xlane.f32.xlu0 %v1206
  %v1258 = vpop.xlane.xlu0 %1257
  %1259 = vadd.xlane.f32.xlu0 %v1207
  %v1260 = vpop.xlane.xlu0 %1259
  %1261 = vadd.xlane.f32.xlu0 %v1208
  %v1262 = vpop.xlane.xlu0 %1261
  %1263 = vadd.xlane.f32.xlu0 %v1209
  %v1264 = vpop.xlane.xlu0 %1263
  %1265 = vadd.xlane.f32.xlu0 %v1210
  %v1266 = vpop.xlane.xlu0 %1265
  %1267 = vadd.xlane.f32.xlu0 %v1211
  %v1268 = vpop.xlane.xlu0 %1267
  %1269 = vadd.xlane.f32.xlu0 %v1212
  %v1270 = vpop.xlane.xlu0 %1269
  %1271 = vadd.xlane.f32.xlu0 %v1213
  %v1272 = vpop.xlane.xlu0 %1271
  %1273 = vadd.xlane.f32.xlu0 %v1214
  %v1274 = vpop.xlane.xlu0 %1273
  %1275 = vadd.xlane.f32.xlu0 %v1215
  %v1276 = vpop.xlane.xlu0 %1275
  %1277 = vadd.xlane.f32.xlu0 %v1216
  %v1278 = vpop.xlane.xlu0 %1277
  %1279 = vadd.xlane.f32.xlu0 %v1217
  %v1280 = vpop.xlane.xlu0 %1279
  %1281 = vadd.xlane.f32.xlu0 %v1218
  %v1282 = vpop.xlane.xlu0 %1281
  %v1283 = vmul.f32 %v1220, %v1154
  %v1284 = vmul.f32 %v1222, %v1154
  %v1285 = vmul.f32 %v1224, %v1154
  %v1286 = vmul.f32 %v1226, %v1154
  %v1287 = vmul.f32 %v1228, %v1154
  %v1288 = vmul.f32 %v1230, %v1154
  %v1289 = vmul.f32 %v1232, %v1154
  %v1290 = vmul.f32 %v1234, %v1154
  %v1291 = vmul.f32 %v1236, %v1154
  %v1292 = vmul.f32 %v1238, %v1154
  %v1293 = vmul.f32 %v1240, %v1154
  %v1294 = vmul.f32 %v1242, %v1154
  %v1295 = vmul.f32 %v1244, %v1154
  %v1296 = vmul.f32 %v1246, %v1154
  %v1297 = vmul.f32 %v1248, %v1154
  %v1298 = vmul.f32 %v1250, %v1154
  %v1299 = vmul.f32 %v1252, %v1154
  %v1300 = vmul.f32 %v1254, %v1154
  %v1301 = vmul.f32 %v1256, %v1154
  %v1302 = vmul.f32 %v1258, %v1154
  %v1303 = vmul.f32 %v1260, %v1154
  %v1304 = vmul.f32 %v1262, %v1154
  %v1305 = vmul.f32 %v1264, %v1154
  %v1306 = vmul.f32 %v1266, %v1154
  %v1307 = vmul.f32 %v1268, %v1154
  %v1308 = vmul.f32 %v1270, %v1154
  %v1309 = vmul.f32 %v1272, %v1154
  %v1310 = vmul.f32 %v1274, %v1154
  %v1311 = vmul.f32 %v1276, %v1154
  %v1312 = vmul.f32 %v1278, %v1154
  %v1313 = vmul.f32 %v1280, %v1154
  %v1314 = vmul.f32 %v1282, %v1154
  %v1315 = vmul.f32 %v1155, %v1155
  %v1316 = vmul.f32 %v1156, %v1156
  %v1317 = vmul.f32 %v1157, %v1157
  %v1318 = vmul.f32 %v1158, %v1158
  %v1319 = vmul.f32 %v1159, %v1159
  %v1320 = vmul.f32 %v1160, %v1160
  %v1321 = vmul.f32 %v1161, %v1161
  %v1322 = vmul.f32 %v1162, %v1162
  %v1323 = vmul.f32 %v1163, %v1163
  %v1324 = vmul.f32 %v1164, %v1164
  %v1325 = vmul.f32 %v1165, %v1165
  %v1326 = vmul.f32 %v1166, %v1166
  %v1327 = vmul.f32 %v1167, %v1167
  %v1328 = vmul.f32 %v1168, %v1168
  %v1329 = vmul.f32 %v1169, %v1169
  %v1330 = vmul.f32 %v1170, %v1170
  %v1331 = vmul.f32 %v1171, %v1171
  %v1332 = vmul.f32 %v1172, %v1172
  %v1333 = vmul.f32 %v1173, %v1173
  %v1334 = vmul.f32 %v1174, %v1174
  %v1335 = vmul.f32 %v1175, %v1175
  %v1336 = vmul.f32 %v1176, %v1176
  %v1337 = vmul.f32 %v1177, %v1177
  %v1338 = vmul.f32 %v1178, %v1178
  %v1339 = vmul.f32 %v1179, %v1179
  %v1340 = vmul.f32 %v1180, %v1180
  %v1341 = vmul.f32 %v1181, %v1181
  %v1342 = vmul.f32 %v1182, %v1182
  %v1343 = vmul.f32 %v1183, %v1183
  %v1344 = vmul.f32 %v1184, %v1184
  %v1345 = vmul.f32 %v1185, %v1185
  %v1346 = vmul.f32 %v1186, %v1186
  %v1347 = vsub.f32 %v1283, %v1315
  %v1348 = vsub.f32 %v1284, %v1316
  %v1349 = vsub.f32 %v1285, %v1317
  %v1350 = vsub.f32 %v1286, %v1318
  %v1351 = vsub.f32 %v1287, %v1319
  %v1352 = vsub.f32 %v1288, %v1320
  %v1353 = vsub.f32 %v1289, %v1321
  %v1354 = vsub.f32 %v1290, %v1322
  %v1355 = vsub.f32 %v1291, %v1323
  %v1356 = vsub.f32 %v1292, %v1324
  %v1357 = vsub.f32 %v1293, %v1325
  %v1358 = vsub.f32 %v1294, %v1326
  %v1359 = vsub.f32 %v1295, %v1327
  %v1360 = vsub.f32 %v1296, %v1328
  %v1361 = vsub.f32 %v1297, %v1329
  %v1362 = vsub.f32 %v1298, %v1330
  %v1363 = vsub.f32 %v1299, %v1331
  %v1364 = vsub.f32 %v1300, %v1332
  %v1365 = vsub.f32 %v1301, %v1333
  %v1366 = vsub.f32 %v1302, %v1334
  %v1367 = vsub.f32 %v1303, %v1335
  %v1368 = vsub.f32 %v1304, %v1336
  %v1369 = vsub.f32 %v1305, %v1337
  %v1370 = vsub.f32 %v1306, %v1338
  %v1371 = vsub.f32 %v1307, %v1339
  %v1372 = vsub.f32 %v1308, %v1340
  %v1373 = vsub.f32 %v1309, %v1341
  %v1374 = vsub.f32 %v1310, %v1342
  %v1375 = vsub.f32 %v1311, %v1343
  %v1376 = vsub.f32 %v1312, %v1344
  %v1377 = vsub.f32 %v1313, %v1345
  %v1378 = vsub.f32 %v1314, %v1346
  %v1379 = vsub.f32 %v964, %v1155
  %v1380 = vsub.f32 %v967, %v1156
  %v1381 = vsub.f32 %v972, %v1157
  %v1382 = vsub.f32 %v975, %v1158
  %v1383 = vsub.f32 %v980, %v1159
  %v1384 = vsub.f32 %v983, %v1160
  %v1385 = vsub.f32 %v988, %v1161
  %v1386 = vsub.f32 %v991, %v1162
  %v1387 = vsub.f32 %v996, %v1163
  %v1388 = vsub.f32 %v999, %v1164
  %v1389 = vsub.f32 %v1004, %v1165
  %v1390 = vsub.f32 %v1007, %v1166
  %v1391 = vsub.f32 %v1012, %v1167
  %v1392 = vsub.f32 %v1015, %v1168
  %v1393 = vsub.f32 %v1020, %v1169
  %v1394 = vsub.f32 %v1023, %v1170
  %v1395 = vsub.f32 %v1028, %v1171
  %v1396 = vsub.f32 %v1031, %v1172
  %v1397 = vsub.f32 %v1036, %v1173
  %v1398 = vsub.f32 %v1039, %v1174
  %v1399 = vsub.f32 %v1044, %v1175
  %v1400 = vsub.f32 %v1047, %v1176
  %v1401 = vsub.f32 %v1052, %v1177
  %v1402 = vsub.f32 %v1055, %v1178
  %v1403 = vsub.f32 %v1060, %v1179
  %v1404 = vsub.f32 %v1063, %v1180
  %v1405 = vsub.f32 %v1068, %v1181
  %v1406 = vsub.f32 %v1071, %v1182
  %v1407 = vsub.f32 %v1076, %v1183
  %v1408 = vsub.f32 %v1079, %v1184
  %v1409 = vsub.f32 %v1084, %v1185
  %v1410 = vsub.f32 %v1087, %v1186
  %v1411 = vadd.f32 %v1347, 1e-05
  %v1412 = vadd.f32 %v1348, 1e-05
  %v1413 = vadd.f32 %v1349, 1e-05
  %v1414 = vadd.f32 %v1350, 1e-05
  %v1415 = vadd.f32 %v1351, 1e-05
  %v1416 = vadd.f32 %v1352, 1e-05
  %v1417 = vadd.f32 %v1353, 1e-05
  %v1418 = vadd.f32 %v1354, 1e-05
  %v1419 = vadd.f32 %v1355, 1e-05
  %v1420 = vadd.f32 %v1356, 1e-05
  %v1421 = vadd.f32 %v1357, 1e-05
  %v1422 = vadd.f32 %v1358, 1e-05
  %v1423 = vadd.f32 %v1359, 1e-05
  %v1424 = vadd.f32 %v1360, 1e-05
  %v1425 = vadd.f32 %v1361, 1e-05
  %v1426 = vadd.f32 %v1362, 1e-05
  %v1427 = vadd.f32 %v1363, 1e-05
  %v1428 = vadd.f32 %v1364, 1e-05
  %v1429 = vadd.f32 %v1365, 1e-05
  %v1430 = vadd.f32 %v1366, 1e-05
  %v1431 = vadd.f32 %v1367, 1e-05
  %v1432 = vadd.f32 %v1368, 1e-05
  %v1433 = vadd.f32 %v1369, 1e-05
  %v1434 = vadd.f32 %v1370, 1e-05
  %v1435 = vadd.f32 %v1371, 1e-05
  %v1436 = vadd.f32 %v1372, 1e-05
  %v1437 = vadd.f32 %v1373, 1e-05
  %v1438 = vadd.f32 %v1374, 1e-05
  %v1439 = vadd.f32 %v1375, 1e-05
  %v1440 = vadd.f32 %v1376, 1e-05
  %v1441 = vadd.f32 %v1377, 1e-05
  %v1442 = vadd.f32 %v1378, 1e-05
  %v1443 = vrsqrt.pop %v1411
  %v1444 = vrsqrt.pop %v1412
  %v1445 = vrsqrt.pop %v1413
  %v1446 = vrsqrt.pop %v1414
  %v1447 = vrsqrt.pop %v1415
  %v1448 = vrsqrt.pop %v1416
  %v1449 = vrsqrt.pop %v1417
  %v1450 = vrsqrt.pop %v1418
  %v1451 = vrsqrt.pop %v1419
  %v1452 = vrsqrt.pop %v1420
  %v1453 = vrsqrt.pop %v1421
  %v1454 = vrsqrt.pop %v1422
  %v1455 = vrsqrt.pop %v1423
  %v1456 = vrsqrt.pop %v1424
  %v1457 = vrsqrt.pop %v1425
  %v1458 = vrsqrt.pop %v1426
  %v1459 = vrsqrt.pop %v1427
  %v1460 = vrsqrt.pop %v1428
  %v1461 = vrsqrt.pop %v1429
  %v1462 = vrsqrt.pop %v1430
  %v1463 = vrsqrt.pop %v1431
  %v1464 = vrsqrt.pop %v1432
  %v1465 = vrsqrt.pop %v1433
  %v1466 = vrsqrt.pop %v1434
  %v1467 = vrsqrt.pop %v1435
  %v1468 = vrsqrt.pop %v1436
  %v1469 = vrsqrt.pop %v1437
  %v1470 = vrsqrt.pop %v1438
  %v1471 = vrsqrt.pop %v1439
  %v1472 = vrsqrt.pop %v1440
  %v1473 = vrsqrt.pop %v1441
  %v1474 = vrsqrt.pop %v1442
  %v1475 = vmul.f32 %v1379, %v1443
  %v1476 = vmul.f32 %v1380, %v1444
  %v1477 = vmul.f32 %v1381, %v1445
  %v1478 = vmul.f32 %v1382, %v1446
  %v1479 = vmul.f32 %v1383, %v1447
  %v1480 = vmul.f32 %v1384, %v1448
  %v1481 = vmul.f32 %v1385, %v1449
  %v1482 = vmul.f32 %v1386, %v1450
  %v1483 = vmul.f32 %v1387, %v1451
  %v1484 = vmul.f32 %v1388, %v1452
  %v1485 = vmul.f32 %v1389, %v1453
  %v1486 = vmul.f32 %v1390, %v1454
  %v1487 = vmul.f32 %v1391, %v1455
  %v1488 = vmul.f32 %v1392, %v1456
  %v1489 = vmul.f32 %v1393, %v1457
  %v1490 = vmul.f32 %v1394, %v1458
  %v1491 = vmul.f32 %v1395, %v1459
  %v1492 = vmul.f32 %v1396, %v1460
  %v1493 = vmul.f32 %v1397, %v1461
  %v1494 = vmul.f32 %v1398, %v1462
  %v1495 = vmul.f32 %v1399, %v1463
  %v1496 = vmul.f32 %v1400, %v1464
  %v1497 = vmul.f32 %v1401, %v1465
  %v1498 = vmul.f32 %v1402, %v1466
  %v1499 = vmul.f32 %v1403, %v1467
  %v1500 = vmul.f32 %v1404, %v1468
  %v1501 = vmul.f32 %v1405, %v1469
  %v1502 = vmul.f32 %v1406, %v1470
  %v1503 = vmul.f32 %v1407, %v1471
  %v1504 = vmul.f32 %v1408, %v1472
  %v1505 = vmul.f32 %v1409, %v1473
  %v1506 = vmul.f32 %v1410, %v1474
  %v1507 = vld [vmem:[%s7] sm:$0x1]
  %v1509 = vlaneseq
  %v1510 = vshrl.u32 %v1509, 7
  %v1511 = vsub.s32 0, %v1510
  %v1512 = vrot.slane %v1507, %v1511
  %v1514 = vmul.f32 %v1475, %v1512
  %v1515 = vmul.f32 %v1476, %v1512
  %v1516 = vmul.f32 %v1477, %v1512
  %v1517 = vmul.f32 %v1478, %v1512
  %v1518 = vmul.f32 %v1479, %v1512
  %v1519 = vmul.f32 %v1480, %v1512
  %v1520 = vmul.f32 %v1481, %v1512
  %v1521 = vmul.f32 %v1482, %v1512
  %v1522 = vmul.f32 %v1483, %v1512
  %v1523 = vmul.f32 %v1484, %v1512
  %v1524 = vmul.f32 %v1485, %v1512
  %v1525 = vmul.f32 %v1486, %v1512
  %v1526 = vmul.f32 %v1487, %v1512
  %v1527 = vmul.f32 %v1488, %v1512
  %v1528 = vmul.f32 %v1489, %v1512
  %v1529 = vmul.f32 %v1490, %v1512
  %v1530 = vmul.f32 %v1491, %v1512
  %v1531 = vmul.f32 %v1492, %v1512
  %v1532 = vmul.f32 %v1493, %v1512
  %v1533 = vmul.f32 %v1494, %v1512
  %v1534 = vmul.f32 %v1495, %v1512
  %v1535 = vmul.f32 %v1496, %v1512
  %v1536 = vmul.f32 %v1497, %v1512
  %v1537 = vmul.f32 %v1498, %v1512
  %v1538 = vmul.f32 %v1499, %v1512
  %v1539 = vmul.f32 %v1500, %v1512
  %v1540 = vmul.f32 %v1501, %v1512
  %v1541 = vmul.f32 %v1502, %v1512
  %v1542 = vmul.f32 %v1503, %v1512
  %v1543 = vmul.f32 %v1504, %v1512
  %v1544 = vmul.f32 %v1505, %v1512
  %v1545 = vmul.f32 %v1506, %v1512
  %v1546 = vld [vmem:[%s8] sm:$0x1]
  %v1548 = vlaneseq
  %v1549 = vshrl.u32 %v1548, 7
  %v1550 = vsub.s32 0, %v1549
  %v1551 = vrot.slane %v1546, %v1550
  %v1553 = vadd.f32 %v1514, %v1551
  %v1554 = vadd.f32 %v1515, %v1551
  %v1555 = vadd.f32 %v1516, %v1551
  %v1556 = vadd.f32 %v1517, %v1551
  %v1557 = vadd.f32 %v1518, %v1551
  %v1558 = vadd.f32 %v1519, %v1551
  %v1559 = vadd.f32 %v1520, %v1551
  %v1560 = vadd.f32 %v1521, %v1551
  %v1561 = vadd.f32 %v1522, %v1551
  %v1562 = vadd.f32 %v1523, %v1551
  %v1563 = vadd.f32 %v1524, %v1551
  %v1564 = vadd.f32 %v1525, %v1551
  %v1565 = vadd.f32 %v1526, %v1551
  %v1566 = vadd.f32 %v1527, %v1551
  %v1567 = vadd.f32 %v1528, %v1551
  %v1568 = vadd.f32 %v1529, %v1551
  %v1569 = vadd.f32 %v1530, %v1551
  %v1570 = vadd.f32 %v1531, %v1551
  %v1571 = vadd.f32 %v1532, %v1551
  %v1572 = vadd.f32 %v1533, %v1551
  %v1573 = vadd.f32 %v1534, %v1551
  %v1574 = vadd.f32 %v1535, %v1551
  %v1575 = vadd.f32 %v1536, %v1551
  %v1576 = vadd.f32 %v1537, %v1551
  %v1577 = vadd.f32 %v1538, %v1551
  %v1578 = vadd.f32 %v1539, %v1551
  %v1579 = vadd.f32 %v1540, %v1551
  %v1580 = vadd.f32 %v1541, %v1551
  %v1581 = vadd.f32 %v1542, %v1551
  %v1582 = vadd.f32 %v1543, %v1551
  %v1583 = vadd.f32 %v1544, %v1551
  %v1584 = vadd.f32 %v1545, %v1551
  %v1585 = vadd.f32 %v1553, %v33
  %v1586 = vadd.f32 %v1554, %v34
  %v1587 = vadd.f32 %v1555, %v35
  %v1588 = vadd.f32 %v1556, %v36
  %v1589 = vadd.f32 %v1557, %v37
  %v1590 = vadd.f32 %v1558, %v38
  %v1591 = vadd.f32 %v1559, %v39
  %v1592 = vadd.f32 %v1560, %v40
  %v1593 = vadd.f32 %v1561, %v41
  %v1594 = vadd.f32 %v1562, %v42
  %v1595 = vadd.f32 %v1563, %v43
  %v1596 = vadd.f32 %v1564, %v44
  %v1597 = vadd.f32 %v1565, %v45
  %v1598 = vadd.f32 %v1566, %v46
  %v1599 = vadd.f32 %v1567, %v47
  %v1600 = vadd.f32 %v1568, %v48
  %v1601 = vadd.f32 %v1569, %v49
  %v1602 = vadd.f32 %v1570, %v50
  %v1603 = vadd.f32 %v1571, %v51
  %v1604 = vadd.f32 %v1572, %v52
  %v1605 = vadd.f32 %v1573, %v53
  %v1606 = vadd.f32 %v1574, %v54
  %v1607 = vadd.f32 %v1575, %v55
  %v1608 = vadd.f32 %v1576, %v56
  %v1609 = vadd.f32 %v1577, %v57
  %v1610 = vadd.f32 %v1578, %v58
  %v1611 = vadd.f32 %v1579, %v59
  %v1612 = vadd.f32 %v1580, %v60
  %v1613 = vadd.f32 %v1581, %v61
  %v1614 = vadd.f32 %v1582, %v62
  %v1615 = vadd.f32 %v1583, %v63
  %v1616 = vadd.f32 %v1584, %v64
  %1617 = vst [vmem:[%s9] sm:$0xff] %v1585
  %1618 = vst [vmem:[%s9 + $0x8] sm:$0xff] %v1586
  %1619 = vst [vmem:[%s9 + $0x10] sm:$0xff] %v1587
  %1620 = vst [vmem:[%s9 + $0x18] sm:$0xff] %v1588
  %1621 = vst [vmem:[%s9 + $0x20] sm:$0xff] %v1589
  %1622 = vst [vmem:[%s9 + $0x28] sm:$0xff] %v1590
  %1623 = vst [vmem:[%s9 + $0x30] sm:$0xff] %v1591
  %1624 = vst [vmem:[%s9 + $0x38] sm:$0xff] %v1592
  %1625 = vst [vmem:[%s9 + $0x40] sm:$0xff] %v1593
  %1626 = vst [vmem:[%s9 + $0x48] sm:$0xff] %v1594
  %1627 = vst [vmem:[%s9 + $0x50] sm:$0xff] %v1595
  %1628 = vst [vmem:[%s9 + $0x58] sm:$0xff] %v1596
  %1629 = vst [vmem:[%s9 + $0x60] sm:$0xff] %v1597
  %1630 = vst [vmem:[%s9 + $0x68] sm:$0xff] %v1598
  %1631 = vst [vmem:[%s9 + $0x70] sm:$0xff] %v1599
  %1632 = vst [vmem:[%s9 + $0x78] sm:$0xff] %v1600
  %1633 = vst [vmem:[%s9 + $0x80] sm:$0xff] %v1601
  %1634 = vst [vmem:[%s9 + $0x88] sm:$0xff] %v1602
  %1635 = vst [vmem:[%s9 + $0x90] sm:$0xff] %v1603
  %1636 = vst [vmem:[%s9 + $0x98] sm:$0xff] %v1604
  %1637 = vst [vmem:[%s9 + $0xa0] sm:$0xff] %v1605
  %1638 = vst [vmem:[%s9 + $0xa8] sm:$0xff] %v1606
  %1639 = vst [vmem:[%s9 + $0xb0] sm:$0xff] %v1607
  %1640 = vst [vmem:[%s9 + $0xb8] sm:$0xff] %v1608
  %1641 = vst [vmem:[%s9 + $0xc0] sm:$0xff] %v1609
  %1642 = vst [vmem:[%s9 + $0xc8] sm:$0xff] %v1610
  %1643 = vst [vmem:[%s9 + $0xd0] sm:$0xff] %v1611
  %1644 = vst [vmem:[%s9 + $0xd8] sm:$0xff] %v1612
  %1645 = vst [vmem:[%s9 + $0xe0] sm:$0xff] %v1613
  %1646 = vst [vmem:[%s9 + $0xe8] sm:$0xff] %v1614
  %1647 = vst [vmem:[%s9 + $0xf0] sm:$0xff] %v1615
  %1648 = vst [vmem:[%s9 + $0xf8] sm:$0xff] %v1616
  // Predicated region
  $region38: #{graphcast_processor_forward.8} parent=0 // pred_check
    _
  $region39: #{graphcast_processor_forward.8} parent=0 // pred_check_branch
    %1650 = sbr.rel (0) target = $region41
  $region40: #{graphcast_processor_forward.8} parent=0 // pred_region
    _
  $region41: #{graphcast_processor_forward.8} parent=0 // pred_fallthru
    _
  // Predicated region
  $region42: #{graphcast_processor_forward.8} parent=0 // pred_check
    _
  $region43: #{graphcast_processor_forward.8} parent=0 // pred_check_branch
    %1652 = sbr.rel (0) target = $region45
  $region44: #{graphcast_processor_forward.8} parent=0 // pred_region
    _
  $region45: #{graphcast_processor_forward.8} parent=0 // pred_fallthru
    _

// kernel: graphcast_processor_forward.11
$region0: #{graphcast_processor_forward.11}
  #allocation0 [shape = 'u32[]', space=smem, size = 0x4, offset = 0x4, fixed_abs, tag = 'smem constant byte address 0x4 - core index']
  #allocation1 [shape = 'u32[144,128]{1,0:T(1,128)}', space=vmem, size = 0x12000, scoped, tag = 'internal scratch']
  %s0 = inlined_call_operand.vmem [shape: f32[256,128], index: 0, kind: input, shape index: {}]
  %s1 = inlined_call_operand.vmem [shape: f32[256,128], index: 1, kind: input, shape index: {}]
  %s2 = inlined_call_operand.vmem [shape: bf16[128,128], index: 2, kind: input, shape index: {}]
  %s3 = inlined_call_operand.vmem [shape: bf16[128,128], index: 3, kind: input, shape index: {}]
  %s4 = inlined_call_operand.vmem [shape: f32[1,128], index: 4, kind: input, shape index: {}]
  %s5 = inlined_call_operand.vmem [shape: bf16[128,128], index: 5, kind: input, shape index: {}]
  %s6 = inlined_call_operand.vmem [shape: f32[1,128], index: 6, kind: input, shape index: {}]
  %s7 = inlined_call_operand.vmem [shape: f32[1,128], index: 7, kind: input, shape index: {}]
  %s8 = inlined_call_operand.vmem [shape: f32[1,128], index: 8, kind: input, shape index: {}]
  %s9 = inlined_call_operand.hbm [shape: f32[256,128], index: 9, kind: output, shape index: {}]
  %s10 = sld [smem:[#allocation0]]
  $region46: #{graphcast_processor_forward.11} parent=0
    _
  %s12 = ssub.s32 1, %s10
  %s13 = scalar_select 0, %s12, %s10
  $region1: #{graphcast_processor_forward.11} parent=0
    #allocation2 [shape = 'u8[131072]{0}', space=vmem, size = 0x20000, scoped, tag = 'output window, operand 0, single buffered']
    #allocation3 [shape = 's32[1]{0}', space=sflag, size = 0x4, scoped, tag = 'scoped memory for graphcast_processor_forward.11']
    %14 = vsyncpa [#allocation3], 0
    // Predicated region
    $region2: #{graphcast_processor_forward.11} parent=1 // pred_check
      _
    $region3: #{graphcast_processor_forward.11} parent=1 // pred_check_branch
      %16 = sbr.rel (0) target = $region5
    $region4: #{graphcast_processor_forward.11} parent=1 // pred_region
      _
    $region5: #{graphcast_processor_forward.11} parent=1 // pred_fallthru
      _
    // Predicated region
    $region6: #{graphcast_processor_forward.11} parent=1 // pred_check
      _
    $region7: #{graphcast_processor_forward.11} parent=1 // pred_check_branch
      %18 = sbr.rel (0) target = $region9
    $region8: #{graphcast_processor_forward.11} parent=1 // pred_region
      _
    $region9: #{graphcast_processor_forward.11} parent=1 // pred_fallthru
      _
    // Predicated region
    $region10: #{graphcast_processor_forward.11} parent=1 // pred_check
      _
    $region11: #{graphcast_processor_forward.11} parent=1 // pred_check_branch
      %20 = sbr.rel (0) target = $region13
    $region12: #{graphcast_processor_forward.11} parent=1 // pred_region
      _
    $region13: #{graphcast_processor_forward.11} parent=1 // pred_fallthru
      _
    // Predicated region
    $region14: #{graphcast_processor_forward.11} parent=1 // pred_check
      _
    $region15: #{graphcast_processor_forward.11} parent=1 // pred_check_branch
      %22 = sbr.rel (0) target = $region17
    $region16: #{graphcast_processor_forward.11} parent=1 // pred_region
      _
    $region17: #{graphcast_processor_forward.11} parent=1 // pred_fallthru
      _
    // Predicated region
    $region18: #{graphcast_processor_forward.11} parent=1 // pred_check
      _
    $region19: #{graphcast_processor_forward.11} parent=1 // pred_check_branch
      %24 = sbr.rel (0) target = $region21
    $region20: #{graphcast_processor_forward.11} parent=1 // pred_region
      _
    $region21: #{graphcast_processor_forward.11} parent=1 // pred_fallthru
      _
    // Predicated region
    $region22: #{graphcast_processor_forward.11} parent=1 // pred_check
      _
    $region23: #{graphcast_processor_forward.11} parent=1 // pred_check_branch
      %26 = sbr.rel (0) target = $region25
    $region24: #{graphcast_processor_forward.11} parent=1 // pred_region
      _
    $region25: #{graphcast_processor_forward.11} parent=1 // pred_fallthru
      _
    // Predicated region
    $region26: #{graphcast_processor_forward.11} parent=1 // pred_check
      _
    $region27: #{graphcast_processor_forward.11} parent=1 // pred_check_branch
      %28 = sbr.rel (0) target = $region29
    $region28: #{graphcast_processor_forward.11} parent=1 // pred_region
      _
    $region29: #{graphcast_processor_forward.11} parent=1 // pred_fallthru
      _
    // Predicated region
    $region30: #{graphcast_processor_forward.11} parent=1 // pred_check
      _
    $region31: #{graphcast_processor_forward.11} parent=1 // pred_check_branch
      %30 = sbr.rel (0) target = $region33
    $region32: #{graphcast_processor_forward.11} parent=1 // pred_region
      _
    $region33: #{graphcast_processor_forward.11} parent=1 // pred_fallthru
      _
    // Predicated region
    $region34: #{graphcast_processor_forward.11} parent=1 // pred_check
      _
    $region35: #{graphcast_processor_forward.11} parent=1 // pred_check_branch
      %32 = sbr.rel (0) target = $region37
    $region36: #{graphcast_processor_forward.11} parent=1 // pred_region
      _
    $region37: #{graphcast_processor_forward.11} parent=1 // pred_fallthru
      _
    %v34 = vld [vmem:[%s0] sm:$0xff]
    %v35 = vld [vmem:[%s0 + $0x8] sm:$0xff]
    %v36 = vld [vmem:[%s0 + $0x10] sm:$0xff]
    %v37 = vld [vmem:[%s0 + $0x18] sm:$0xff]
    %v38 = vld [vmem:[%s0 + $0x20] sm:$0xff]
    %v39 = vld [vmem:[%s0 + $0x28] sm:$0xff]
    %v40 = vld [vmem:[%s0 + $0x30] sm:$0xff]
    %v41 = vld [vmem:[%s0 + $0x38] sm:$0xff]
    %v42 = vld [vmem:[%s0 + $0x40] sm:$0xff]
    %v43 = vld [vmem:[%s0 + $0x48] sm:$0xff]
    %v44 = vld [vmem:[%s0 + $0x50] sm:$0xff]
    %v45 = vld [vmem:[%s0 + $0x58] sm:$0xff]
    %v46 = vld [vmem:[%s0 + $0x60] sm:$0xff]
    %v47 = vld [vmem:[%s0 + $0x68] sm:$0xff]
    %v48 = vld [vmem:[%s0 + $0x70] sm:$0xff]
    %v49 = vld [vmem:[%s0 + $0x78] sm:$0xff]
    %v50 = vld [vmem:[%s0 + $0x80] sm:$0xff]
    %v51 = vld [vmem:[%s0 + $0x88] sm:$0xff]
    %v52 = vld [vmem:[%s0 + $0x90] sm:$0xff]
    %v53 = vld [vmem:[%s0 + $0x98] sm:$0xff]
    %v54 = vld [vmem:[%s0 + $0xa0] sm:$0xff]
    %v55 = vld [vmem:[%s0 + $0xa8] sm:$0xff]
    %v56 = vld [vmem:[%s0 + $0xb0] sm:$0xff]
    %v57 = vld [vmem:[%s0 + $0xb8] sm:$0xff]
    %v58 = vld [vmem:[%s0 + $0xc0] sm:$0xff]
    %v59 = vld [vmem:[%s0 + $0xc8] sm:$0xff]
    %v60 = vld [vmem:[%s0 + $0xd0] sm:$0xff]
    %v61 = vld [vmem:[%s0 + $0xd8] sm:$0xff]
    %v62 = vld [vmem:[%s0 + $0xe0] sm:$0xff]
    %v63 = vld [vmem:[%s0 + $0xe8] sm:$0xff]
    %v64 = vld [vmem:[%s0 + $0xf0] sm:$0xff]
    %v65 = vld [vmem:[%s0 + $0xf8] sm:$0xff]
    %v66 = vpack.c.bf16 %v35, %v34
    %v67 = vpack.c.bf16 %v37, %v36
    %v68 = vpack.c.bf16 %v39, %v38
    %v69 = vpack.c.bf16 %v41, %v40
    %v70 = vpack.c.bf16 %v43, %v42
    %v71 = vpack.c.bf16 %v45, %v44
    %v72 = vpack.c.bf16 %v47, %v46
    %v73 = vpack.c.bf16 %v49, %v48
    %v74 = vpack.c.bf16 %v51, %v50
    %v75 = vpack.c.bf16 %v53, %v52
    %v76 = vpack.c.bf16 %v55, %v54
    %v77 = vpack.c.bf16 %v57, %v56
    %v78 = vpack.c.bf16 %v59, %v58
    %v79 = vpack.c.bf16 %v61, %v60
    %v80 = vpack.c.bf16 %v63, %v62
    %v81 = vpack.c.bf16 %v65, %v64
    %v82 = vld [vmem:[%s2] sm:$0xf]
    %v83 = vld [vmem:[%s2 + $0x4] sm:$0xf]
    %v84 = vld [vmem:[%s2 + $0x8] sm:$0xf]
    %v85 = vld [vmem:[%s2 + $0xc] sm:$0xf]
    %v86 = vld [vmem:[%s2 + $0x10] sm:$0xf]
    %v87 = vld [vmem:[%s2 + $0x14] sm:$0xf]
    %v88 = vld [vmem:[%s2 + $0x18] sm:$0xf]
    %v89 = vld [vmem:[%s2 + $0x1c] sm:$0xf]
    %v90 = vld [vmem:[%s2 + $0x20] sm:$0xf]
    %v91 = vld [vmem:[%s2 + $0x24] sm:$0xf]
    %v92 = vld [vmem:[%s2 + $0x28] sm:$0xf]
    %v93 = vld [vmem:[%s2 + $0x2c] sm:$0xf]
    %v94 = vld [vmem:[%s2 + $0x30] sm:$0xf]
    %v95 = vld [vmem:[%s2 + $0x34] sm:$0xf]
    %v96 = vld [vmem:[%s2 + $0x38] sm:$0xf]
    %v97 = vld [vmem:[%s2 + $0x3c] sm:$0xf]
    %v98 = vld [vmem:[%s1] sm:$0xff]
    %v99 = vld [vmem:[%s1 + $0x8] sm:$0xff]
    %v100 = vld [vmem:[%s1 + $0x10] sm:$0xff]
    %v101 = vld [vmem:[%s1 + $0x18] sm:$0xff]
    %v102 = vld [vmem:[%s1 + $0x20] sm:$0xff]
    %v103 = vld [vmem:[%s1 + $0x28] sm:$0xff]
    %v104 = vld [vmem:[%s1 + $0x30] sm:$0xff]
    %v105 = vld [vmem:[%s1 + $0x38] sm:$0xff]
    %v106 = vld [vmem:[%s1 + $0x40] sm:$0xff]
    %v107 = vld [vmem:[%s1 + $0x48] sm:$0xff]
    %v108 = vld [vmem:[%s1 + $0x50] sm:$0xff]
    %v109 = vld [vmem:[%s1 + $0x58] sm:$0xff]
    %v110 = vld [vmem:[%s1 + $0x60] sm:$0xff]
    %v111 = vld [vmem:[%s1 + $0x68] sm:$0xff]
    %v112 = vld [vmem:[%s1 + $0x70] sm:$0xff]
    %v113 = vld [vmem:[%s1 + $0x78] sm:$0xff]
    %v114 = vld [vmem:[%s1 + $0x80] sm:$0xff]
    %v115 = vld [vmem:[%s1 + $0x88] sm:$0xff]
    %v116 = vld [vmem:[%s1 + $0x90] sm:$0xff]
    %v117 = vld [vmem:[%s1 + $0x98] sm:$0xff]
    %v118 = vld [vmem:[%s1 + $0xa0] sm:$0xff]
    %v119 = vld [vmem:[%s1 + $0xa8] sm:$0xff]
    %v120 = vld [vmem:[%s1 + $0xb0] sm:$0xff]
    %v121 = vld [vmem:[%s1 + $0xb8] sm:$0xff]
    %v122 = vld [vmem:[%s1 + $0xc0] sm:$0xff]
    %v123 = vld [vmem:[%s1 + $0xc8] sm:$0xff]
    %v124 = vld [vmem:[%s1 + $0xd0] sm:$0xff]
    %v125 = vld [vmem:[%s1 + $0xd8] sm:$0xff]
    %v126 = vld [vmem:[%s1 + $0xe0] sm:$0xff]
    %v127 = vld [vmem:[%s1 + $0xe8] sm:$0xff]
    %v128 = vld [vmem:[%s1 + $0xf0] sm:$0xff]
    %v129 = vld [vmem:[%s1 + $0xf8] sm:$0xff]
    %v130 = vpack.c.bf16 %v99, %v98
    %v131 = vpack.c.bf16 %v101, %v100
    %v132 = vpack.c.bf16 %v103, %v102
    %v133 = vpack.c.bf16 %v105, %v104
    %v134 = vpack.c.bf16 %v107, %v106
    %v135 = vpack.c.bf16 %v109, %v108
    %v136 = vpack.c.bf16 %v111, %v110
    %v137 = vpack.c.bf16 %v113, %v112
    %v138 = vpack.c.bf16 %v115, %v114
    %v139 = vpack.c.bf16 %v117, %v116
    %v140 = vpack.c.bf16 %v119, %v118
    %v141 = vpack.c.bf16 %v121, %v120
    %v142 = vpack.c.bf16 %v123, %v122
    %v143 = vpack.c.bf16 %v125, %v124
    %v144 = vpack.c.bf16 %v127, %v126
    %v145 = vpack.c.bf16 %v129, %v128
    %v146 = vld [vmem:[%s3] sm:$0xf]
    %v147 = vld [vmem:[%s3 + $0x4] sm:$0xf]
    %v148 = vld [vmem:[%s3 + $0x8] sm:$0xf]
    %v149 = vld [vmem:[%s3 + $0xc] sm:$0xf]
    %v150 = vld [vmem:[%s3 + $0x10] sm:$0xf]
    %v151 = vld [vmem:[%s3 + $0x14] sm:$0xf]
    %v152 = vld [vmem:[%s3 + $0x18] sm:$0xf]
    %v153 = vld [vmem:[%s3 + $0x1c] sm:$0xf]
    %v154 = vld [vmem:[%s3 + $0x20] sm:$0xf]
    %v155 = vld [vmem:[%s3 + $0x24] sm:$0xf]
    %v156 = vld [vmem:[%s3 + $0x28] sm:$0xf]
    %v157 = vld [vmem:[%s3 + $0x2c] sm:$0xf]
    %v158 = vld [vmem:[%s3 + $0x30] sm:$0xf]
    %v159 = vld [vmem:[%s3 + $0x34] sm:$0xf]
    %v160 = vld [vmem:[%s3 + $0x38] sm:$0xf]
    %v161 = vld [vmem:[%s3 + $0x3c] sm:$0xf]
    %v178 = vunpack.c.l.b16 %v146
    %v179 = vunpack.c.l.b16 %v147
    %v180 = vunpack.c.l.b16 %v148
    %v181 = vunpack.c.l.b16 %v149
    %v182 = vunpack.c.l.b16 %v150
    %v183 = vunpack.c.l.b16 %v151
    %v184 = vunpack.c.l.b16 %v152
    %v185 = vunpack.c.l.b16 %v153
    %v186 = vunpack.c.l.b16 %v154
    %v187 = vunpack.c.l.b16 %v155
    %v188 = vunpack.c.l.b16 %v156
    %v189 = vunpack.c.l.b16 %v157
    %v190 = vunpack.c.l.b16 %v158
    %v191 = vunpack.c.l.b16 %v159
    %v192 = vunpack.c.l.b16 %v160
    %v193 = vunpack.c.l.b16 %v161
    %v194 = vpack.c.b16 %v179, %v178
    %v195 = vpack.c.b16 %v181, %v180
    %v196 = vpack.c.b16 %v183, %v182
    %v197 = vpack.c.b16 %v185, %v184
    %v198 = vpack.c.b16 %v187, %v186
    %v199 = vpack.c.b16 %v189, %v188
    %v200 = vpack.c.b16 %v191, %v190
    %v201 = vpack.c.b16 %v193, %v192
    %210 = vmatprep.subr.bf16.mxu0 0
    %211 = vmatpush1.bf16.msra.mxu0 %v194
    %212 = vmatprep.subr.bf16.mxu0 0
    %213 = vmatpush1.bf16.msra.mxu0 %v195
    %214 = vmatprep.subr.bf16.mxu0 0
    %215 = vmatpush1.bf16.msra.mxu0 %v196
    %216 = vmatprep.subr.bf16.mxu0 0
    %217 = vmatpush1.bf16.msra.mxu0 %v197
    %218 = vmatprep.subr.bf16.mxu0 0
    %219 = vmatpush1.bf16.msra.mxu0 %v198
    %220 = vmatprep.subr.bf16.mxu0 0
    %221 = vmatpush1.bf16.msra.mxu0 %v199
    %222 = vmatprep.subr.bf16.mxu0 0
    %223 = vmatpush1.bf16.msra.mxu0 %v200
    %224 = vmatprep.subr.bf16.mxu0 0
    %225 = vmatpush1.bf16.msra.mxu0 %v201
    %226 = vmatprep.subr.bf16.mxu0 0
    %227 = vmatpush1.bf16.msra.mxu0 0
    %228 = vmatprep.subr.bf16.mxu0 0
    %229 = vmatpush1.bf16.msra.mxu0 0
    %230 = vmatprep.subr.bf16.mxu0 0
    %231 = vmatpush1.bf16.msra.mxu0 0
    %232 = vmatprep.subr.bf16.mxu0 0
    %233 = vmatpush1.bf16.msra.mxu0 0
    %234 = vmatprep.subr.bf16.mxu0 0
    %235 = vmatpush1.bf16.msra.mxu0 0
    %236 = vmatprep.subr.bf16.mxu0 0
    %237 = vmatpush1.bf16.msra.mxu0 0
    %238 = vmatprep.subr.bf16.mxu0 0
    %239 = vmatpush1.bf16.msra.mxu0 0
    %240 = vmatprep.subr.bf16.mxu0 0
    %241 = vmatpush1.bf16.msra.mxu0 0
    %242 = vmatprep.mubr.bf16.mxu0 0
    %243 = vmatmul.mubr.bf16.gmra.mrb[0].mxu0 %v130
    %v244 = vpop.f32.mrb[0].mxu0
    %v245 = vadd.f32 0.0, %v244
    %v246 = vpop.f32.mrb[0].mxu0
    %v247 = vpop.f32.mrb[0].mxu0
    %v248 = vadd.f32 0.0, %v247
    %v249 = vpop.f32.mrb[0].mxu0
    %250 = vmatprep.mubr.bf16.mxu0 0
    %251 = vmatmul.mubr.bf16.gmra.mrb[0].mxu0 %v131
    %v252 = vpop.f32.mrb[0].mxu0
    %v253 = vadd.f32 0.0, %v252
    %v254 = vpop.f32.mrb[0].mxu0
    %v255 = vpop.f32.mrb[0].mxu0
    %v256 = vadd.f32 0.0, %v255
    %v257 = vpop.f32.mrb[0].mxu0
    %258 = vmatprep.mubr.bf16.mxu0 0
    %259 = vmatmul.mubr.bf16.gmra.mrb[0].mxu0 %v132
    %v260 = vpop.f32.mrb[0].mxu0
    %v261 = vadd.f32 0.0, %v260
    %v262 = vpop.f32.mrb[0].mxu0
    %v263 = vpop.f32.mrb[0].mxu0
    %v264 = vadd.f32 0.0, %v263
    %v265 = vpop.f32.mrb[0].mxu0
    %266 = vmatprep.mubr.bf16.mxu0 0
    %267 = vmatmul.mubr.bf16.gmra.mrb[0].mxu0 %v133
    %v268 = vpop.f32.mrb[0].mxu0
    %v269 = vadd.f32 0.0, %v268
    %v270 = vpop.f32.mrb[0].mxu0
    %v271 = vpop.f32.mrb[0].mxu0
    %v272 = vadd.f32 0.0, %v271
    %v273 = vpop.f32.mrb[0].mxu0
    %274 = vmatprep.mubr.bf16.mxu0 0
    %275 = vmatmul.mubr.bf16.gmra.mrb[0].mxu0 %v134
    %v276 = vpop.f32.mrb[0].mxu0
    %v277 = vadd.f32 0.0, %v276
    %v278 = vpop.f32.mrb[0].mxu0
    %v279 = vpop.f32.mrb[0].mxu0
    %v280 = vadd.f32 0.0, %v279
    %v281 = vpop.f32.mrb[0].mxu0
    %282 = vmatprep.mubr.bf16.mxu0 0
    %283 = vmatmul.mubr.bf16.gmra.mrb[0].mxu0 %v135
    %v284 = vpop.f32.mrb[0].mxu0
    %v285 = vadd.f32 0.0, %v284
    %v286 = vpop.f32.mrb[0].mxu0
    %v287 = vpop.f32.mrb[0].mxu0
    %v288 = vadd.f32 0.0, %v287
    %v289 = vpop.f32.mrb[0].mxu0
    %290 = vmatprep.mubr.bf16.mxu0 0
    %291 = vmatmul.mubr.bf16.gmra.mrb[0].mxu0 %v136
    %v292 = vpop.f32.mrb[0].mxu0
    %v293 = vadd.f32 0.0, %v292
    %v294 = vpop.f32.mrb[0].mxu0
    %v295 = vpop.f32.mrb[0].mxu0
    %v296 = vadd.f32 0.0, %v295
    %v297 = vpop.f32.mrb[0].mxu0
    %298 = vmatprep.mubr.bf16.mxu0 0
    %299 = vmatmul.mubr.bf16.gmra.mrb[0].mxu0 %v137
    %v300 = vpop.f32.mrb[0].mxu0
    %v301 = vadd.f32 0.0, %v300
    %v302 = vpop.f32.mrb[0].mxu0
    %v303 = vpop.f32.mrb[0].mxu0
    %v304 = vadd.f32 0.0, %v303
    %v305 = vpop.f32.mrb[0].mxu0
    %306 = vmatprep.mubr.bf16.mxu0 0
    %307 = vmatmul.mubr.bf16.gmra.mrb[0].mxu0 %v138
    %v308 = vpop.f32.mrb[0].mxu0
    %v309 = vadd.f32 0.0, %v308
    %v310 = vpop.f32.mrb[0].mxu0
    %v311 = vpop.f32.mrb[0].mxu0
    %v312 = vadd.f32 0.0, %v311
    %v313 = vpop.f32.mrb[0].mxu0
    %314 = vmatprep.mubr.bf16.mxu0 0
    %315 = vmatmul.mubr.bf16.gmra.mrb[0].mxu0 %v139
    %v316 = vpop.f32.mrb[0].mxu0
    %v317 = vadd.f32 0.0, %v316
    %v318 = vpop.f32.mrb[0].mxu0
    %v319 = vpop.f32.mrb[0].mxu0
    %v320 = vadd.f32 0.0, %v319
    %v321 = vpop.f32.mrb[0].mxu0
    %322 = vmatprep.mubr.bf16.mxu0 0
    %323 = vmatmul.mubr.bf16.gmra.mrb[0].mxu0 %v140
    %v324 = vpop.f32.mrb[0].mxu0
    %v325 = vadd.f32 0.0, %v324
    %v326 = vpop.f32.mrb[0].mxu0
    %v327 = vpop.f32.mrb[0].mxu0
    %v328 = vadd.f32 0.0, %v327
    %v329 = vpop.f32.mrb[0].mxu0
    %330 = vmatprep.mubr.bf16.mxu0 0
    %331 = vmatmul.mubr.bf16.gmra.mrb[0].mxu0 %v141
    %v332 = vpop.f32.mrb[0].mxu0
    %v333 = vadd.f32 0.0, %v332
    %v334 = vpop.f32.mrb[0].mxu0
    %v335 = vpop.f32.mrb[0].mxu0
    %v336 = vadd.f32 0.0, %v335
    %v337 = vpop.f32.mrb[0].mxu0
    %338 = vmatprep.mubr.bf16.mxu0 0
    %339 = vmatmul.mubr.bf16.gmra.mrb[0].mxu0 %v142
    %v340 = vpop.f32.mrb[0].mxu0
    %v341 = vadd.f32 0.0, %v340
    %v342 = vpop.f32.mrb[0].mxu0
    %v343 = vpop.f32.mrb[0].mxu0
    %v344 = vadd.f32 0.0, %v343
    %v345 = vpop.f32.mrb[0].mxu0
    %346 = vmatprep.mubr.bf16.mxu0 0
    %347 = vmatmul.mubr.bf16.gmra.mrb[0].mxu0 %v143
    %v348 = vpop.f32.mrb[0].mxu0
    %v349 = vadd.f32 0.0, %v348
    %v350 = vpop.f32.mrb[0].mxu0
    %v351 = vpop.f32.mrb[0].mxu0
    %v352 = vadd.f32 0.0, %v351
    %v353 = vpop.f32.mrb[0].mxu0
    %354 = vmatprep.mubr.bf16.mxu0 0
    %355 = vmatmul.mubr.bf16.gmra.mrb[0].mxu0 %v144
    %v356 = vpop.f32.mrb[0].mxu0
    %v357 = vadd.f32 0.0, %v356
    %v358 = vpop.f32.mrb[0].mxu0
    %v359 = vpop.f32.mrb[0].mxu0
    %v360 = vadd.f32 0.0, %v359
    %v361 = vpop.f32.mrb[0].mxu0
    %362 = vmatprep.mubr.bf16.mxu0 0
    %363 = vmatmul.mubr.bf16.gmra.mrb[0].mxu0 %v145
    %v364 = vpop.f32.mrb[0].mxu0
    %v365 = vadd.f32 0.0, %v364
    %v366 = vpop.f32.mrb[0].mxu0
    %v367 = vpop.f32.mrb[0].mxu0
    %v368 = vadd.f32 0.0, %v367
    %v369 = vpop.f32.mrb[0].mxu0
    %370 = vdwg.mxu0
    %v387 = vunpack.c.l.b16 %v82
    %v388 = vunpack.c.l.b16 %v83
    %v389 = vunpack.c.l.b16 %v84
    %v390 = vunpack.c.l.b16 %v85
    %v391 = vunpack.c.l.b16 %v86
    %v392 = vunpack.c.l.b16 %v87
    %v393 = vunpack.c.l.b16 %v88
    %v394 = vunpack.c.l.b16 %v89
    %v395 = vunpack.c.l.b16 %v90
    %v396 = vunpack.c.l.b16 %v91
    %v397 = vunpack.c.l.b16 %v92
    %v398 = vunpack.c.l.b16 %v93
    %v399 = vunpack.c.l.b16 %v94
    %v400 = vunpack.c.l.b16 %v95
    %v401 = vunpack.c.l.b16 %v96
    %v402 = vunpack.c.l.b16 %v97
    %v403 = vpack.c.b16 %v388, %v387
    %v404 = vpack.c.b16 %v390, %v389
    %v405 = vpack.c.b16 %v392, %v391
    %v406 = vpack.c.b16 %v394, %v393
    %v407 = vpack.c.b16 %v396, %v395
    %v408 = vpack.c.b16 %v398, %v397
    %v409 = vpack.c.b16 %v400, %v399
    %v410 = vpack.c.b16 %v402, %v401
    %419 = vmatprep.subr.bf16.mxu0 0
    %420 = vmatpush1.bf16.msra.mxu0 %v403
    %421 = vmatprep.subr.bf16.mxu0 0
    %422 = vmatpush1.bf16.msra.mxu0 %v404
    %423 = vmatprep.subr.bf16.mxu0 0
    %424 = vmatpush1.bf16.msra.mxu0 %v405
    %425 = vmatprep.subr.bf16.mxu0 0
    %426 = vmatpush1.bf16.msra.mxu0 %v406
    %427 = vmatprep.subr.bf16.mxu0 0
    %428 = vmatpush1.bf16.msra.mxu0 %v407
    %429 = vmatprep.subr.bf16.mxu0 0
    %430 = vmatpush1.bf16.msra.mxu0 %v408
    %431 = vmatprep.subr.bf16.mxu0 0
    %432 = vmatpush1.bf16.msra.mxu0 %v409
    %433 = vmatprep.subr.bf16.mxu0 0
    %434 = vmatpush1.bf16.msra.mxu0 %v410
    %435 = vmatprep.subr.bf16.mxu0 0
    %436 = vmatpush1.bf16.msra.mxu0 0
    %437 = vmatprep.subr.bf16.mxu0 0
    %438 = vmatpush1.bf16.msra.mxu0 0
    %439 = vmatprep.subr.bf16.mxu0 0
    %440 = vmatpush1.bf16.msra.mxu0 0
    %441 = vmatprep.subr.bf16.mxu0 0
    %442 = vmatpush1.bf16.msra.mxu0 0
    %443 = vmatprep.subr.bf16.mxu0 0
    %444 = vmatpush1.bf16.msra.mxu0 0
    %445 = vmatprep.subr.bf16.mxu0 0
    %446 = vmatpush1.bf16.msra.mxu0 0
    %447 = vmatprep.subr.bf16.mxu0 0
    %448 = vmatpush1.bf16.msra.mxu0 0
    %449 = vmatprep.subr.bf16.mxu0 0
    %450 = vmatpush1.bf16.msra.mxu0 0
    %451 = vmatprep.mubr.bf16.mxu0 0
    %452 = vmatmul.mubr.bf16.gmra.mrb[0].mxu0 %v66
    %v453 = vpop.f32.mrb[0].mxu0
    %v454 = vadd.f32 %v245, %v453
    %v455 = vpop.f32.mrb[0].mxu0
    %v456 = vpop.f32.mrb[0].mxu0
    %v457 = vadd.f32 %v248, %v456
    %v458 = vpop.f32.mrb[0].mxu0
    %459 = vmatprep.mubr.bf16.mxu0 0
    %460 = vmatmul.mubr.bf16.gmra.mrb[0].mxu0 %v67
    %v461 = vpop.f32.mrb[0].mxu0
    %v462 = vadd.f32 %v253, %v461
    %v463 = vpop.f32.mrb[0].mxu0
    %v464 = vpop.f32.mrb[0].mxu0
    %v465 = vadd.f32 %v256, %v464
    %v466 = vpop.f32.mrb[0].mxu0
    %467 = vmatprep.mubr.bf16.mxu0 0
    %468 = vmatmul.mubr.bf16.gmra.mrb[0].mxu0 %v68
    %v469 = vpop.f32.mrb[0].mxu0
    %v470 = vadd.f32 %v261, %v469
    %v471 = vpop.f32.mrb[0].mxu0
    %v472 = vpop.f32.mrb[0].mxu0
    %v473 = vadd.f32 %v264, %v472
    %v474 = vpop.f32.mrb[0].mxu0
    %475 = vmatprep.mubr.bf16.mxu0 0
    %476 = vmatmul.mubr.bf16.gmra.mrb[0].mxu0 %v69
    %v477 = vpop.f32.mrb[0].mxu0
    %v478 = vadd.f32 %v269, %v477
    %v479 = vpop.f32.mrb[0].mxu0
    %v480 = vpop.f32.mrb[0].mxu0
    %v481 = vadd.f32 %v272, %v480
    %v482 = vpop.f32.mrb[0].mxu0
    %483 = vmatprep.mubr.bf16.mxu0 0
    %484 = vmatmul.mubr.bf16.gmra.mrb[0].mxu0 %v70
    %v485 = vpop.f32.mrb[0].mxu0
    %v486 = vadd.f32 %v277, %v485
    %v487 = vpop.f32.mrb[0].mxu0
    %v488 = vpop.f32.mrb[0].mxu0
    %v489 = vadd.f32 %v280, %v488
    %v490 = vpop.f32.mrb[0].mxu0
    %491 = vmatprep.mubr.bf16.mxu0 0
    %492 = vmatmul.mubr.bf16.gmra.mrb[0].mxu0 %v71
    %v493 = vpop.f32.mrb[0].mxu0
    %v494 = vadd.f32 %v285, %v493
    %v495 = vpop.f32.mrb[0].mxu0
    %v496 = vpop.f32.mrb[0].mxu0
    %v497 = vadd.f32 %v288, %v496
    %v498 = vpop.f32.mrb[0].mxu0
    %499 = vmatprep.mubr.bf16.mxu0 0
    %500 = vmatmul.mubr.bf16.gmra.mrb[0].mxu0 %v72
    %v501 = vpop.f32.mrb[0].mxu0
    %v502 = vadd.f32 %v293, %v501
    %v503 = vpop.f32.mrb[0].mxu0
    %v504 = vpop.f32.mrb[0].mxu0
    %v505 = vadd.f32 %v296, %v504
    %v506 = vpop.f32.mrb[0].mxu0
    %507 = vmatprep.mubr.bf16.mxu0 0
    %508 = vmatmul.mubr.bf16.gmra.mrb[0].mxu0 %v73
    %v509 = vpop.f32.mrb[0].mxu0
    %v510 = vadd.f32 %v301, %v509
    %v511 = vpop.f32.mrb[0].mxu0
    %v512 = vpop.f32.mrb[0].mxu0
    %v513 = vadd.f32 %v304, %v512
    %v514 = vpop.f32.mrb[0].mxu0
    %515 = vmatprep.mubr.bf16.mxu0 0
    %516 = vmatmul.mubr.bf16.gmra.mrb[0].mxu0 %v74
    %v517 = vpop.f32.mrb[0].mxu0
    %v518 = vadd.f32 %v309, %v517
    %v519 = vpop.f32.mrb[0].mxu0
    %v520 = vpop.f32.mrb[0].mxu0
    %v521 = vadd.f32 %v312, %v520
    %v522 = vpop.f32.mrb[0].mxu0
    %523 = vmatprep.mubr.bf16.mxu0 0
    %524 = vmatmul.mubr.bf16.gmra.mrb[0].mxu0 %v75
    %v525 = vpop.f32.mrb[0].mxu0
    %v526 = vadd.f32 %v317, %v525
    %v527 = vpop.f32.mrb[0].mxu0
    %v528 = vpop.f32.mrb[0].mxu0
    %v529 = vadd.f32 %v320, %v528
    %v530 = vpop.f32.mrb[0].mxu0
    %531 = vmatprep.mubr.bf16.mxu0 0
    %532 = vmatmul.mubr.bf16.gmra.mrb[0].mxu0 %v76
    %v533 = vpop.f32.mrb[0].mxu0
    %v534 = vadd.f32 %v325, %v533
    %v535 = vpop.f32.mrb[0].mxu0
    %v536 = vpop.f32.mrb[0].mxu0
    %v537 = vadd.f32 %v328, %v536
    %v538 = vpop.f32.mrb[0].mxu0
    %539 = vmatprep.mubr.bf16.mxu0 0
    %540 = vmatmul.mubr.bf16.gmra.mrb[0].mxu0 %v77
    %v541 = vpop.f32.mrb[0].mxu0
    %v542 = vadd.f32 %v333, %v541
    %v543 = vpop.f32.mrb[0].mxu0
    %v544 = vpop.f32.mrb[0].mxu0
    %v545 = vadd.f32 %v336, %v544
    %v546 = vpop.f32.mrb[0].mxu0
    %547 = vmatprep.mubr.bf16.mxu0 0
    %548 = vmatmul.mubr.bf16.gmra.mrb[0].mxu0 %v78
    %v549 = vpop.f32.mrb[0].mxu0
    %v550 = vadd.f32 %v341, %v549
    %v551 = vpop.f32.mrb[0].mxu0
    %v552 = vpop.f32.mrb[0].mxu0
    %v553 = vadd.f32 %v344, %v552
    %v554 = vpop.f32.mrb[0].mxu0
    %555 = vmatprep.mubr.bf16.mxu0 0
    %556 = vmatmul.mubr.bf16.gmra.mrb[0].mxu0 %v79
    %v557 = vpop.f32.mrb[0].mxu0
    %v558 = vadd.f32 %v349, %v557
    %v559 = vpop.f32.mrb[0].mxu0
    %v560 = vpop.f32.mrb[0].mxu0
    %v561 = vadd.f32 %v352, %v560
    %v562 = vpop.f32.mrb[0].mxu0
    %563 = vmatprep.mubr.bf16.mxu0 0
    %564 = vmatmul.mubr.bf16.gmra.mrb[0].mxu0 %v80
    %v565 = vpop.f32.mrb[0].mxu0
    %v566 = vadd.f32 %v357, %v565
    %v567 = vpop.f32.mrb[0].mxu0
    %v568 = vpop.f32.mrb[0].mxu0
    %v569 = vadd.f32 %v360, %v568
    %v570 = vpop.f32.mrb[0].mxu0
    %571 = vmatprep.mubr.bf16.mxu0 0
    %572 = vmatmul.mubr.bf16.gmra.mrb[0].mxu0 %v81
    %v573 = vpop.f32.mrb[0].mxu0
    %v574 = vadd.f32 %v365, %v573
    %v575 = vpop.f32.mrb[0].mxu0
    %v576 = vpop.f32.mrb[0].mxu0
    %v577 = vadd.f32 %v368, %v576
    %v578 = vpop.f32.mrb[0].mxu0
    %579 = vdwg.mxu0
    %v580 = vld [vmem:[%s4] sm:$0x1]
    %v582 = vlaneseq
    %v583 = vshrl.u32 %v582, 7
    %v584 = vsub.s32 0, %v583
    %v585 = vrot.slane %v580, %v584
    %v587 = vadd.f32 %v454, %v585
    %v588 = vadd.f32 %v457, %v585
    %v589 = vadd.f32 %v462, %v585
    %v590 = vadd.f32 %v465, %v585
    %v591 = vadd.f32 %v470, %v585
    %v592 = vadd.f32 %v473, %v585
    %v593 = vadd.f32 %v478, %v585
    %v594 = vadd.f32 %v481, %v585
    %v595 = vadd.f32 %v486, %v585
    %v596 = vadd.f32 %v489, %v585
    %v597 = vadd.f32 %v494, %v585
    %v598 = vadd.f32 %v497, %v585
    %v599 = vadd.f32 %v502, %v585
    %v600 = vadd.f32 %v505, %v585
    %v601 = vadd.f32 %v510, %v585
    %v602 = vadd.f32 %v513, %v585
    %v603 = vadd.f32 %v518, %v585
    %v604 = vadd.f32 %v521, %v585
    %v605 = vadd.f32 %v526, %v585
    %v606 = vadd.f32 %v529, %v585
    %v607 = vadd.f32 %v534, %v585
    %v608 = vadd.f32 %v537, %v585
    %v609 = vadd.f32 %v542, %v585
    %v610 = vadd.f32 %v545, %v585
    %v611 = vadd.f32 %v550, %v585
    %v612 = vadd.f32 %v553, %v585
    %v613 = vadd.f32 %v558, %v585
    %v614 = vadd.f32 %v561, %v585
    %v615 = vadd.f32 %v566, %v585
    %v616 = vadd.f32 %v569, %v585
    %v617 = vadd.f32 %v574, %v585
    %v618 = vadd.f32 %v577, %v585
    %v619 = vxor.u32 %v587, 2147483648
    %v620 = vxor.u32 %v588, 2147483648
    %v621 = vxor.u32 %v589, 2147483648
    %v622 = vxor.u32 %v590, 2147483648
    %v623 = vxor.u32 %v591, 2147483648
    %v624 = vxor.u32 %v592, 2147483648
    %v625 = vxor.u32 %v593, 2147483648
    %v626 = vxor.u32 %v594, 2147483648
    %v627 = vxor.u32 %v595, 2147483648
    %v628 = vxor.u32 %v596, 2147483648
    %v629 = vxor.u32 %v597, 2147483648
    %v630 = vxor.u32 %v598, 2147483648
    %v631 = vxor.u32 %v599, 2147483648
    %v632 = vxor.u32 %v600, 2147483648
    %v633 = vxor.u32 %v601, 2147483648
    %v634 = vxor.u32 %v602, 2147483648
    %v635 = vxor.u32 %v603, 2147483648
    %v636 = vxor.u32 %v604, 2147483648
    %v637 = vxor.u32 %v605, 2147483648
    %v638 = vxor.u32 %v606, 2147483648
    %v639 = vxor.u32 %v607, 2147483648
    %v640 = vxor.u32 %v608, 2147483648
    %v641 = vxor.u32 %v609, 2147483648
    %v642 = vxor.u32 %v610, 2147483648
    %v643 = vxor.u32 %v611, 2147483648
    %v644 = vxor.u32 %v612, 2147483648
    %v645 = vxor.u32 %v613, 2147483648
    %v646 = vxor.u32 %v614, 2147483648
    %v647 = vxor.u32 %v615, 2147483648
    %v648 = vxor.u32 %v616, 2147483648
    %v649 = vxor.u32 %v617, 2147483648
    %v650 = vxor.u32 %v618, 2147483648
    %v651 = vmul.f32 %v619, 1.442695
    %v652 = vpow.pop %v651
    %v653 = vmul.f32 %v620, 1.442695
    %v654 = vpow.pop %v653
    %v655 = vmul.f32 %v621, 1.442695
    %v656 = vpow.pop %v655
    %v657 = vmul.f32 %v622, 1.442695
    %v658 = vpow.pop %v657
    %v659 = vmul.f32 %v623, 1.442695
    %v660 = vpow.pop %v659
    %v661 = vmul.f32 %v624, 1.442695
    %v662 = vpow.pop %v661
    %v663 = vmul.f32 %v625, 1.442695
    %v664 = vpow.pop %v663
    %v665 = vmul.f32 %v626, 1.442695
    %v666 = vpow.pop %v665
    %v667 = vmul.f32 %v627, 1.442695
    %v668 = vpow.pop %v667
    %v669 = vmul.f32 %v628, 1.442695
    %v670 = vpow.pop %v669
    %v671 = vmul.f32 %v629, 1.442695
    %v672 = vpow.pop %v671
    %v673 = vmul.f32 %v630, 1.442695
    %v674 = vpow.pop %v673
    %v675 = vmul.f32 %v631, 1.442695
    %v676 = vpow.pop %v675
    %v677 = vmul.f32 %v632, 1.442695
    %v678 = vpow.pop %v677
    %v679 = vmul.f32 %v633, 1.442695
    %v680 = vpow.pop %v679
    %v681 = vmul.f32 %v634, 1.442695
    %v682 = vpow.pop %v681
    %v683 = vmul.f32 %v635, 1.442695
    %v684 = vpow.pop %v683
    %v685 = vmul.f32 %v636, 1.442695
    %v686 = vpow.pop %v685
    %v687 = vmul.f32 %v637, 1.442695
    %v688 = vpow.pop %v687
    %v689 = vmul.f32 %v638, 1.442695
    %v690 = vpow.pop %v689
    %v691 = vmul.f32 %v639, 1.442695
    %v692 = vpow.pop %v691
    %v693 = vmul.f32 %v640, 1.442695
    %v694 = vpow.pop %v693
    %v695 = vmul.f32 %v641, 1.442695
    %v696 = vpow.pop %v695
    %v697 = vmul.f32 %v642, 1.442695
    %v698 = vpow.pop %v697
    %v699 = vmul.f32 %v643, 1.442695
    %v700 = vpow.pop %v699
    %v701 = vmul.f32 %v644, 1.442695
    %v702 = vpow.pop %v701
    %v703 = vmul.f32 %v645, 1.442695
    %v704 = vpow.pop %v703
    %v705 = vmul.f32 %v646, 1.442695
    %v706 = vpow.pop %v705
    %v707 = vmul.f32 %v647, 1.442695
    %v708 = vpow.pop %v707
    %v709 = vmul.f32 %v648, 1.442695
    %v710 = vpow.pop %v709
    %v711 = vmul.f32 %v649, 1.442695
    %v712 = vpow.pop %v711
    %v713 = vmul.f32 %v650, 1.442695
    %v714 = vpow.pop %v713
    %v715 = vadd.f32 %v652, 1.0
    %v716 = vadd.f32 %v654, 1.0
    %v717 = vadd.f32 %v656, 1.0
    %v718 = vadd.f32 %v658, 1.0
    %v719 = vadd.f32 %v660, 1.0
    %v720 = vadd.f32 %v662, 1.0
    %v721 = vadd.f32 %v664, 1.0
    %v722 = vadd.f32 %v666, 1.0
    %v723 = vadd.f32 %v668, 1.0
    %v724 = vadd.f32 %v670, 1.0
    %v725 = vadd.f32 %v672, 1.0
    %v726 = vadd.f32 %v674, 1.0
    %v727 = vadd.f32 %v676, 1.0
    %v728 = vadd.f32 %v678, 1.0
    %v729 = vadd.f32 %v680, 1.0
    %v730 = vadd.f32 %v682, 1.0
    %v731 = vadd.f32 %v684, 1.0
    %v732 = vadd.f32 %v686, 1.0
    %v733 = vadd.f32 %v688, 1.0
    %v734 = vadd.f32 %v690, 1.0
    %v735 = vadd.f32 %v692, 1.0
    %v736 = vadd.f32 %v694, 1.0
    %v737 = vadd.f32 %v696, 1.0
    %v738 = vadd.f32 %v698, 1.0
    %v739 = vadd.f32 %v700, 1.0
    %v740 = vadd.f32 %v702, 1.0
    %v741 = vadd.f32 %v704, 1.0
    %v742 = vadd.f32 %v706, 1.0
    %v743 = vadd.f32 %v708, 1.0
    %v744 = vadd.f32 %v710, 1.0
    %v745 = vadd.f32 %v712, 1.0
    %v746 = vadd.f32 %v714, 1.0
    %v747 = vrcp.pop %v715
    %v748 = vmul.f32 1.0, %v747
    %v749 = vrcp.pop %v716
    %v750 = vmul.f32 1.0, %v749
    %v751 = vrcp.pop %v717
    %v752 = vmul.f32 1.0, %v751
    %v753 = vrcp.pop %v718
    %v754 = vmul.f32 1.0, %v753
    %v755 = vrcp.pop %v719
    %v756 = vmul.f32 1.0, %v755
    %v757 = vrcp.pop %v720
    %v758 = vmul.f32 1.0, %v757
    %v759 = vrcp.pop %v721
    %v760 = vmul.f32 1.0, %v759
    %v761 = vrcp.pop %v722
    %v762 = vmul.f32 1.0, %v761
    %v763 = vrcp.pop %v723
    %v764 = vmul.f32 1.0, %v763
    %v765 = vrcp.pop %v724
    %v766 = vmul.f32 1.0, %v765
    %v767 = vrcp.pop %v725
    %v768 = vmul.f32 1.0, %v767
    %v769 = vrcp.pop %v726
    %v770 = vmul.f32 1.0, %v769
    %v771 = vrcp.pop %v727
    %v772 = vmul.f32 1.0, %v771
    %v773 = vrcp.pop %v728
    %v774 = vmul.f32 1.0, %v773
    %v775 = vrcp.pop %v729
    %v776 = vmul.f32 1.0, %v775
    %v777 = vrcp.pop %v730
    %v778 = vmul.f32 1.0, %v777
    %v779 = vrcp.pop %v731
    %v780 = vmul.f32 1.0, %v779
    %v781 = vrcp.pop %v732
    %v782 = vmul.f32 1.0, %v781
    %v783 = vrcp.pop %v733
    %v784 = vmul.f32 1.0, %v783
    %v785 = vrcp.pop %v734
    %v786 = vmul.f32 1.0, %v785
    %v787 = vrcp.pop %v735
    %v788 = vmul.f32 1.0, %v787
    %v789 = vrcp.pop %v736
    %v790 = vmul.f32 1.0, %v789
    %v791 = vrcp.pop %v737
    %v792 = vmul.f32 1.0, %v791
    %v793 = vrcp.pop %v738
    %v794 = vmul.f32 1.0, %v793
    %v795 = vrcp.pop %v739
    %v796 = vmul.f32 1.0, %v795
    %v797 = vrcp.pop %v740
    %v798 = vmul.f32 1.0, %v797
    %v799 = vrcp.pop %v741
    %v800 = vmul.f32 1.0, %v799
    %v801 = vrcp.pop %v742
    %v802 = vmul.f32 1.0, %v801
    %v803 = vrcp.pop %v743
    %v804 = vmul.f32 1.0, %v803
    %v805 = vrcp.pop %v744
    %v806 = vmul.f32 1.0, %v805
    %v807 = vrcp.pop %v745
    %v808 = vmul.f32 1.0, %v807
    %v809 = vrcp.pop %v746
    %v810 = vmul.f32 1.0, %v809
    %v811 = vmul.f32 %v587, %v748
    %v812 = vmul.f32 %v588, %v750
    %v813 = vmul.f32 %v589, %v752
    %v814 = vmul.f32 %v590, %v754
    %v815 = vmul.f32 %v591, %v756
    %v816 = vmul.f32 %v592, %v758
    %v817 = vmul.f32 %v593, %v760
    %v818 = vmul.f32 %v594, %v762
    %v819 = vmul.f32 %v595, %v764
    %v820 = vmul.f32 %v596, %v766
    %v821 = vmul.f32 %v597, %v768
    %v822 = vmul.f32 %v598, %v770
    %v823 = vmul.f32 %v599, %v772
    %v824 = vmul.f32 %v600, %v774
    %v825 = vmul.f32 %v601, %v776
    %v826 = vmul.f32 %v602, %v778
    %v827 = vmul.f32 %v603, %v780
    %v828 = vmul.f32 %v604, %v782
    %v829 = vmul.f32 %v605, %v784
    %v830 = vmul.f32 %v606, %v786
    %v831 = vmul.f32 %v607, %v788
    %v832 = vmul.f32 %v608, %v790
    %v833 = vmul.f32 %v609, %v792
    %v834 = vmul.f32 %v610, %v794
    %v835 = vmul.f32 %v611, %v796
    %v836 = vmul.f32 %v612, %v798
    %v837 = vmul.f32 %v613, %v800
    %v838 = vmul.f32 %v614, %v802
    %v839 = vmul.f32 %v615, %v804
    %v840 = vmul.f32 %v616, %v806
    %v841 = vmul.f32 %v617, %v808
    %v842 = vmul.f32 %v618, %v810
    %v843 = vpack.c.bf16 %v812, %v811
    %v844 = vpack.c.bf16 %v814, %v813
    %v845 = vpack.c.bf16 %v816, %v815
    %v846 = vpack.c.bf16 %v818, %v817
    %v847 = vpack.c.bf16 %v820, %v819
    %v848 = vpack.c.bf16 %v822, %v821
    %v849 = vpack.c.bf16 %v824, %v823
    %v850 = vpack.c.bf16 %v826, %v825
    %v851 = vpack.c.bf16 %v828, %v827
    %v852 = vpack.c.bf16 %v830, %v829
    %v853 = vpack.c.bf16 %v832, %v831
    %v854 = vpack.c.bf16 %v834, %v833
    %v855 = vpack.c.bf16 %v836, %v835
    %v856 = vpack.c.bf16 %v838, %v837
    %v857 = vpack.c.bf16 %v840, %v839
    %v858 = vpack.c.bf16 %v842, %v841
    %v859 = vld [vmem:[%s5] sm:$0xf]
    %v860 = vld [vmem:[%s5 + $0x4] sm:$0xf]
    %v861 = vld [vmem:[%s5 + $0x8] sm:$0xf]
    %v862 = vld [vmem:[%s5 + $0xc] sm:$0xf]
    %v863 = vld [vmem:[%s5 + $0x10] sm:$0xf]
    %v864 = vld [vmem:[%s5 + $0x14] sm:$0xf]
    %v865 = vld [vmem:[%s5 + $0x18] sm:$0xf]
    %v866 = vld [vmem:[%s5 + $0x1c] sm:$0xf]
    %v867 = vld [vmem:[%s5 + $0x20] sm:$0xf]
    %v868 = vld [vmem:[%s5 + $0x24] sm:$0xf]
    %v869 = vld [vmem:[%s5 + $0x28] sm:$0xf]
    %v870 = vld [vmem:[%s5 + $0x2c] sm:$0xf]
    %v871 = vld [vmem:[%s5 + $0x30] sm:$0xf]
    %v872 = vld [vmem:[%s5 + $0x34] sm:$0xf]
    %v873 = vld [vmem:[%s5 + $0x38] sm:$0xf]
    %v874 = vld [vmem:[%s5 + $0x3c] sm:$0xf]
    %v875 = vld [vmem:[%s6] sm:$0x1]
    %v877 = vlaneseq
    %v878 = vshrl.u32 %v877, 7
    %v879 = vsub.s32 0, %v878
    %v880 = vrot.slane %v875, %v879
    %v898 = vunpack.c.l.b16 %v859
    %v899 = vunpack.c.l.b16 %v860
    %v900 = vunpack.c.l.b16 %v861
    %v901 = vunpack.c.l.b16 %v862
    %v902 = vunpack.c.l.b16 %v863
    %v903 = vunpack.c.l.b16 %v864
    %v904 = vunpack.c.l.b16 %v865
    %v905 = vunpack.c.l.b16 %v866
    %v906 = vunpack.c.l.b16 %v867
    %v907 = vunpack.c.l.b16 %v868
    %v908 = vunpack.c.l.b16 %v869
    %v909 = vunpack.c.l.b16 %v870
    %v910 = vunpack.c.l.b16 %v871
    %v911 = vunpack.c.l.b16 %v872
    %v912 = vunpack.c.l.b16 %v873
    %v913 = vunpack.c.l.b16 %v874
    %v914 = vpack.c.b16 %v899, %v898
    %v915 = vpack.c.b16 %v901, %v900
    %v916 = vpack.c.b16 %v903, %v902
    %v917 = vpack.c.b16 %v905, %v904
    %v918 = vpack.c.b16 %v907, %v906
    %v919 = vpack.c.b16 %v909, %v908
    %v920 = vpack.c.b16 %v911, %v910
    %v921 = vpack.c.b16 %v913, %v912
    %930 = vmatprep.subr.bf16.mxu0 0
    %931 = vmatpush1.bf16.msra.mxu0 %v914
    %932 = vmatprep.subr.bf16.mxu0 0
    %933 = vmatpush1.bf16.msra.mxu0 %v915
    %934 = vmatprep.subr.bf16.mxu0 0
    %935 = vmatpush1.bf16.msra.mxu0 %v916
    %936 = vmatprep.subr.bf16.mxu0 0
    %937 = vmatpush1.bf16.msra.mxu0 %v917
    %938 = vmatprep.subr.bf16.mxu0 0
    %939 = vmatpush1.bf16.msra.mxu0 %v918
    %940 = vmatprep.subr.bf16.mxu0 0
    %941 = vmatpush1.bf16.msra.mxu0 %v919
    %942 = vmatprep.subr.bf16.mxu0 0
    %943 = vmatpush1.bf16.msra.mxu0 %v920
    %944 = vmatprep.subr.bf16.mxu0 0
    %945 = vmatpush1.bf16.msra.mxu0 %v921
    %946 = vmatprep.subr.bf16.mxu0 0
    %947 = vmatpush1.bf16.msra.mxu0 0
    %948 = vmatprep.subr.bf16.mxu0 0
    %949 = vmatpush1.bf16.msra.mxu0 0
    %950 = vmatprep.subr.bf16.mxu0 0
    %951 = vmatpush1.bf16.msra.mxu0 0
    %952 = vmatprep.subr.bf16.mxu0 0
    %953 = vmatpush1.bf16.msra.mxu0 0
    %954 = vmatprep.subr.bf16.mxu0 0
    %955 = vmatpush1.bf16.msra.mxu0 0
    %956 = vmatprep.subr.bf16.mxu0 0
    %957 = vmatpush1.bf16.msra.mxu0 0
    %958 = vmatprep.subr.bf16.mxu0 0
    %959 = vmatpush1.bf16.msra.mxu0 0
    %960 = vmatprep.subr.bf16.mxu0 0
    %961 = vmatpush1.bf16.msra.mxu0 0
    %962 = vmatprep.mubr.bf16.mxu0 0
    %963 = vmatmul.mubr.bf16.gmra.mrb[0].mxu0 %v843
    %v964 = vpop.f32.mrb[0].mxu0
    %v965 = vadd.f32 %v880, %v964
    %v966 = vpop.f32.mrb[0].mxu0
    %v967 = vpop.f32.mrb[0].mxu0
    %v968 = vadd.f32 %v880, %v967
    %v969 = vpop.f32.mrb[0].mxu0
    %970 = vmatprep.mubr.bf16.mxu0 0
    %971 = vmatmul.mubr.bf16.gmra.mrb[0].mxu0 %v844
    %v972 = vpop.f32.mrb[0].mxu0
    %v973 = vadd.f32 %v880, %v972
    %v974 = vpop.f32.mrb[0].mxu0
    %v975 = vpop.f32.mrb[0].mxu0
    %v976 = vadd.f32 %v880, %v975
    %v977 = vpop.f32.mrb[0].mxu0
    %978 = vmatprep.mubr.bf16.mxu0 0
    %979 = vmatmul.mubr.bf16.gmra.mrb[0].mxu0 %v845
    %v980 = vpop.f32.mrb[0].mxu0
    %v981 = vadd.f32 %v880, %v980
    %v982 = vpop.f32.mrb[0].mxu0
    %v983 = vpop.f32.mrb[0].mxu0
    %v984 = vadd.f32 %v880, %v983
    %v985 = vpop.f32.mrb[0].mxu0
    %986 = vmatprep.mubr.bf16.mxu0 0
    %987 = vmatmul.mubr.bf16.gmra.mrb[0].mxu0 %v846
    %v988 = vpop.f32.mrb[0].mxu0
    %v989 = vadd.f32 %v880, %v988
    %v990 = vpop.f32.mrb[0].mxu0
    %v991 = vpop.f32.mrb[0].mxu0
    %v992 = vadd.f32 %v880, %v991
    %v993 = vpop.f32.mrb[0].mxu0
    %994 = vmatprep.mubr.bf16.mxu0 0
    %995 = vmatmul.mubr.bf16.gmra.mrb[0].mxu0 %v847
    %v996 = vpop.f32.mrb[0].mxu0
    %v997 = vadd.f32 %v880, %v996
    %v998 = vpop.f32.mrb[0].mxu0
    %v999 = vpop.f32.mrb[0].mxu0
    %v1000 = vadd.f32 %v880, %v999
    %v1001 = vpop.f32.mrb[0].mxu0
    %1002 = vmatprep.mubr.bf16.mxu0 0
    %1003 = vmatmul.mubr.bf16.gmra.mrb[0].mxu0 %v848
    %v1004 = vpop.f32.mrb[0].mxu0
    %v1005 = vadd.f32 %v880, %v1004
    %v1006 = vpop.f32.mrb[0].mxu0
    %v1007 = vpop.f32.mrb[0].mxu0
    %v1008 = vadd.f32 %v880, %v1007
    %v1009 = vpop.f32.mrb[0].mxu0
    %1010 = vmatprep.mubr.bf16.mxu0 0
    %1011 = vmatmul.mubr.bf16.gmra.mrb[0].mxu0 %v849
    %v1012 = vpop.f32.mrb[0].mxu0
    %v1013 = vadd.f32 %v880, %v1012
    %v1014 = vpop.f32.mrb[0].mxu0
    %v1015 = vpop.f32.mrb[0].mxu0
    %v1016 = vadd.f32 %v880, %v1015
    %v1017 = vpop.f32.mrb[0].mxu0
    %1018 = vmatprep.mubr.bf16.mxu0 0
    %1019 = vmatmul.mubr.bf16.gmra.mrb[0].mxu0 %v850
    %v1020 = vpop.f32.mrb[0].mxu0
    %v1021 = vadd.f32 %v880, %v1020
    %v1022 = vpop.f32.mrb[0].mxu0
    %v1023 = vpop.f32.mrb[0].mxu0
    %v1024 = vadd.f32 %v880, %v1023
    %v1025 = vpop.f32.mrb[0].mxu0
    %1026 = vmatprep.mubr.bf16.mxu0 0
    %1027 = vmatmul.mubr.bf16.gmra.mrb[0].mxu0 %v851
    %v1028 = vpop.f32.mrb[0].mxu0
    %v1029 = vadd.f32 %v880, %v1028
    %v1030 = vpop.f32.mrb[0].mxu0
    %v1031 = vpop.f32.mrb[0].mxu0
    %v1032 = vadd.f32 %v880, %v1031
    %v1033 = vpop.f32.mrb[0].mxu0
    %1034 = vmatprep.mubr.bf16.mxu0 0
    %1035 = vmatmul.mubr.bf16.gmra.mrb[0].mxu0 %v852
    %v1036 = vpop.f32.mrb[0].mxu0
    %v1037 = vadd.f32 %v880, %v1036
    %v1038 = vpop.f32.mrb[0].mxu0
    %v1039 = vpop.f32.mrb[0].mxu0
    %v1040 = vadd.f32 %v880, %v1039
    %v1041 = vpop.f32.mrb[0].mxu0
    %1042 = vmatprep.mubr.bf16.mxu0 0
    %1043 = vmatmul.mubr.bf16.gmra.mrb[0].mxu0 %v853
    %v1044 = vpop.f32.mrb[0].mxu0
    %v1045 = vadd.f32 %v880, %v1044
    %v1046 = vpop.f32.mrb[0].mxu0
    %v1047 = vpop.f32.mrb[0].mxu0
    %v1048 = vadd.f32 %v880, %v1047
    %v1049 = vpop.f32.mrb[0].mxu0
    %1050 = vmatprep.mubr.bf16.mxu0 0
    %1051 = vmatmul.mubr.bf16.gmra.mrb[0].mxu0 %v854
    %v1052 = vpop.f32.mrb[0].mxu0
    %v1053 = vadd.f32 %v880, %v1052
    %v1054 = vpop.f32.mrb[0].mxu0
    %v1055 = vpop.f32.mrb[0].mxu0
    %v1056 = vadd.f32 %v880, %v1055
    %v1057 = vpop.f32.mrb[0].mxu0
    %1058 = vmatprep.mubr.bf16.mxu0 0
    %1059 = vmatmul.mubr.bf16.gmra.mrb[0].mxu0 %v855
    %v1060 = vpop.f32.mrb[0].mxu0
    %v1061 = vadd.f32 %v880, %v1060
    %v1062 = vpop.f32.mrb[0].mxu0
    %v1063 = vpop.f32.mrb[0].mxu0
    %v1064 = vadd.f32 %v880, %v1063
    %v1065 = vpop.f32.mrb[0].mxu0
    %1066 = vmatprep.mubr.bf16.mxu0 0
    %1067 = vmatmul.mubr.bf16.gmra.mrb[0].mxu0 %v856
    %v1068 = vpop.f32.mrb[0].mxu0
    %v1069 = vadd.f32 %v880, %v1068
    %v1070 = vpop.f32.mrb[0].mxu0
    %v1071 = vpop.f32.mrb[0].mxu0
    %v1072 = vadd.f32 %v880, %v1071
    %v1073 = vpop.f32.mrb[0].mxu0
    %1074 = vmatprep.mubr.bf16.mxu0 0
    %1075 = vmatmul.mubr.bf16.gmra.mrb[0].mxu0 %v857
    %v1076 = vpop.f32.mrb[0].mxu0
    %v1077 = vadd.f32 %v880, %v1076
    %v1078 = vpop.f32.mrb[0].mxu0
    %v1079 = vpop.f32.mrb[0].mxu0
    %v1080 = vadd.f32 %v880, %v1079
    %v1081 = vpop.f32.mrb[0].mxu0
    %1082 = vmatprep.mubr.bf16.mxu0 0
    %1083 = vmatmul.mubr.bf16.gmra.mrb[0].mxu0 %v858
    %v1084 = vpop.f32.mrb[0].mxu0
    %v1085 = vadd.f32 %v880, %v1084
    %v1086 = vpop.f32.mrb[0].mxu0
    %v1087 = vpop.f32.mrb[0].mxu0
    %v1088 = vadd.f32 %v880, %v1087
    %v1089 = vpop.f32.mrb[0].mxu0
    %1090 = vdwg.mxu0
    %1091 = vadd.xlane.f32.xlu0 %v965
    %v1092 = vpop.xlane.xlu0 %1091
    %1093 = vadd.xlane.f32.xlu0 %v968
    %v1094 = vpop.xlane.xlu0 %1093
    %1095 = vadd.xlane.f32.xlu0 %v973
    %v1096 = vpop.xlane.xlu0 %1095
    %1097 = vadd.xlane.f32.xlu0 %v976
    %v1098 = vpop.xlane.xlu0 %1097
    %1099 = vadd.xlane.f32.xlu0 %v981
    %v1100 = vpop.xlane.xlu0 %1099
    %1101 = vadd.xlane.f32.xlu0 %v984
    %v1102 = vpop.xlane.xlu0 %1101
    %1103 = vadd.xlane.f32.xlu0 %v989
    %v1104 = vpop.xlane.xlu0 %1103
    %1105 = vadd.xlane.f32.xlu0 %v992
    %v1106 = vpop.xlane.xlu0 %1105
    %1107 = vadd.xlane.f32.xlu0 %v997
    %v1108 = vpop.xlane.xlu0 %1107
    %1109 = vadd.xlane.f32.xlu0 %v1000
    %v1110 = vpop.xlane.xlu0 %1109
    %1111 = vadd.xlane.f32.xlu0 %v1005
    %v1112 = vpop.xlane.xlu0 %1111
    %1113 = vadd.xlane.f32.xlu0 %v1008
    %v1114 = vpop.xlane.xlu0 %1113
    %1115 = vadd.xlane.f32.xlu0 %v1013
    %v1116 = vpop.xlane.xlu0 %1115
    %1117 = vadd.xlane.f32.xlu0 %v1016
    %v1118 = vpop.xlane.xlu0 %1117
    %1119 = vadd.xlane.f32.xlu0 %v1021
    %v1120 = vpop.xlane.xlu0 %1119
    %1121 = vadd.xlane.f32.xlu0 %v1024
    %v1122 = vpop.xlane.xlu0 %1121
    %1123 = vadd.xlane.f32.xlu0 %v1029
    %v1124 = vpop.xlane.xlu0 %1123
    %1125 = vadd.xlane.f32.xlu0 %v1032
    %v1126 = vpop.xlane.xlu0 %1125
    %1127 = vadd.xlane.f32.xlu0 %v1037
    %v1128 = vpop.xlane.xlu0 %1127
    %1129 = vadd.xlane.f32.xlu0 %v1040
    %v1130 = vpop.xlane.xlu0 %1129
    %1131 = vadd.xlane.f32.xlu0 %v1045
    %v1132 = vpop.xlane.xlu0 %1131
    %1133 = vadd.xlane.f32.xlu0 %v1048
    %v1134 = vpop.xlane.xlu0 %1133
    %1135 = vadd.xlane.f32.xlu0 %v1053
    %v1136 = vpop.xlane.xlu0 %1135
    %1137 = vadd.xlane.f32.xlu0 %v1056
    %v1138 = vpop.xlane.xlu0 %1137
    %1139 = vadd.xlane.f32.xlu0 %v1061
    %v1140 = vpop.xlane.xlu0 %1139
    %1141 = vadd.xlane.f32.xlu0 %v1064
    %v1142 = vpop.xlane.xlu0 %1141
    %1143 = vadd.xlane.f32.xlu0 %v1069
    %v1144 = vpop.xlane.xlu0 %1143
    %1145 = vadd.xlane.f32.xlu0 %v1072
    %v1146 = vpop.xlane.xlu0 %1145
    %1147 = vadd.xlane.f32.xlu0 %v1077
    %v1148 = vpop.xlane.xlu0 %1147
    %1149 = vadd.xlane.f32.xlu0 %v1080
    %v1150 = vpop.xlane.xlu0 %1149
    %1151 = vadd.xlane.f32.xlu0 %v1085
    %v1152 = vpop.xlane.xlu0 %1151
    %1153 = vadd.xlane.f32.xlu0 %v1088
    %v1154 = vpop.xlane.xlu0 %1153
    %v1155 = vrcp.pop 128.0
    %v1156 = vmul.f32 %v1092, %v1155
    %v1157 = vmul.f32 %v1094, %v1155
    %v1158 = vmul.f32 %v1096, %v1155
    %v1159 = vmul.f32 %v1098, %v1155
    %v1160 = vmul.f32 %v1100, %v1155
    %v1161 = vmul.f32 %v1102, %v1155
    %v1162 = vmul.f32 %v1104, %v1155
    %v1163 = vmul.f32 %v1106, %v1155
    %v1164 = vmul.f32 %v1108, %v1155
    %v1165 = vmul.f32 %v1110, %v1155
    %v1166 = vmul.f32 %v1112, %v1155
    %v1167 = vmul.f32 %v1114, %v1155
    %v1168 = vmul.f32 %v1116, %v1155
    %v1169 = vmul.f32 %v1118, %v1155
    %v1170 = vmul.f32 %v1120, %v1155
    %v1171 = vmul.f32 %v1122, %v1155
    %v1172 = vmul.f32 %v1124, %v1155
    %v1173 = vmul.f32 %v1126, %v1155
    %v1174 = vmul.f32 %v1128, %v1155
    %v1175 = vmul.f32 %v1130, %v1155
    %v1176 = vmul.f32 %v1132, %v1155
    %v1177 = vmul.f32 %v1134, %v1155
    %v1178 = vmul.f32 %v1136, %v1155
    %v1179 = vmul.f32 %v1138, %v1155
    %v1180 = vmul.f32 %v1140, %v1155
    %v1181 = vmul.f32 %v1142, %v1155
    %v1182 = vmul.f32 %v1144, %v1155
    %v1183 = vmul.f32 %v1146, %v1155
    %v1184 = vmul.f32 %v1148, %v1155
    %v1185 = vmul.f32 %v1150, %v1155
    %v1186 = vmul.f32 %v1152, %v1155
    %v1187 = vmul.f32 %v1154, %v1155
    %v1188 = vmul.f32 %v965, %v965
    %v1189 = vmul.f32 %v968, %v968
    %v1190 = vmul.f32 %v973, %v973
    %v1191 = vmul.f32 %v976, %v976
    %v1192 = vmul.f32 %v981, %v981
    %v1193 = vmul.f32 %v984, %v984
    %v1194 = vmul.f32 %v989, %v989
    %v1195 = vmul.f32 %v992, %v992
    %v1196 = vmul.f32 %v997, %v997
    %v1197 = vmul.f32 %v1000, %v1000
    %v1198 = vmul.f32 %v1005, %v1005
    %v1199 = vmul.f32 %v1008, %v1008
    %v1200 = vmul.f32 %v1013, %v1013
    %v1201 = vmul.f32 %v1016, %v1016
    %v1202 = vmul.f32 %v1021, %v1021
    %v1203 = vmul.f32 %v1024, %v1024
    %v1204 = vmul.f32 %v1029, %v1029
    %v1205 = vmul.f32 %v1032, %v1032
    %v1206 = vmul.f32 %v1037, %v1037
    %v1207 = vmul.f32 %v1040, %v1040
    %v1208 = vmul.f32 %v1045, %v1045
    %v1209 = vmul.f32 %v1048, %v1048
    %v1210 = vmul.f32 %v1053, %v1053
    %v1211 = vmul.f32 %v1056, %v1056
    %v1212 = vmul.f32 %v1061, %v1061
    %v1213 = vmul.f32 %v1064, %v1064
    %v1214 = vmul.f32 %v1069, %v1069
    %v1215 = vmul.f32 %v1072, %v1072
    %v1216 = vmul.f32 %v1077, %v1077
    %v1217 = vmul.f32 %v1080, %v1080
    %v1218 = vmul.f32 %v1085, %v1085
    %v1219 = vmul.f32 %v1088, %v1088
    %1220 = vadd.xlane.f32.xlu0 %v1188
    %v1221 = vpop.xlane.xlu0 %1220
    %1222 = vadd.xlane.f32.xlu0 %v1189
    %v1223 = vpop.xlane.xlu0 %1222
    %1224 = vadd.xlane.f32.xlu0 %v1190
    %v1225 = vpop.xlane.xlu0 %1224
    %1226 = vadd.xlane.f32.xlu0 %v1191
    %v1227 = vpop.xlane.xlu0 %1226
    %1228 = vadd.xlane.f32.xlu0 %v1192
    %v1229 = vpop.xlane.xlu0 %1228
    %1230 = vadd.xlane.f32.xlu0 %v1193
    %v1231 = vpop.xlane.xlu0 %1230
    %1232 = vadd.xlane.f32.xlu0 %v1194
    %v1233 = vpop.xlane.xlu0 %1232
    %1234 = vadd.xlane.f32.xlu0 %v1195
    %v1235 = vpop.xlane.xlu0 %1234
    %1236 = vadd.xlane.f32.xlu0 %v1196
    %v1237 = vpop.xlane.xlu0 %1236
    %1238 = vadd.xlane.f32.xlu0 %v1197
    %v1239 = vpop.xlane.xlu0 %1238
    %1240 = vadd.xlane.f32.xlu0 %v1198
    %v1241 = vpop.xlane.xlu0 %1240
    %1242 = vadd.xlane.f32.xlu0 %v1199
    %v1243 = vpop.xlane.xlu0 %1242
    %1244 = vadd.xlane.f32.xlu0 %v1200
    %v1245 = vpop.xlane.xlu0 %1244
    %1246 = vadd.xlane.f32.xlu0 %v1201
    %v1247 = vpop.xlane.xlu0 %1246
    %1248 = vadd.xlane.f32.xlu0 %v1202
    %v1249 = vpop.xlane.xlu0 %1248
    %1250 = vadd.xlane.f32.xlu0 %v1203
    %v1251 = vpop.xlane.xlu0 %1250
    %1252 = vadd.xlane.f32.xlu0 %v1204
    %v1253 = vpop.xlane.xlu0 %1252
    %1254 = vadd.xlane.f32.xlu0 %v1205
    %v1255 = vpop.xlane.xlu0 %1254
    %1256 = vadd.xlane.f32.xlu0 %v1206
    %v1257 = vpop.xlane.xlu0 %1256
    %1258 = vadd.xlane.f32.xlu0 %v1207
    %v1259 = vpop.xlane.xlu0 %1258
    %1260 = vadd.xlane.f32.xlu0 %v1208
    %v1261 = vpop.xlane.xlu0 %1260
    %1262 = vadd.xlane.f32.xlu0 %v1209
    %v1263 = vpop.xlane.xlu0 %1262
    %1264 = vadd.xlane.f32.xlu0 %v1210
    %v1265 = vpop.xlane.xlu0 %1264
    %1266 = vadd.xlane.f32.xlu0 %v1211
    %v1267 = vpop.xlane.xlu0 %1266
    %1268 = vadd.xlane.f32.xlu0 %v1212
    %v1269 = vpop.xlane.xlu0 %1268
    %1270 = vadd.xlane.f32.xlu0 %v1213
    %v1271 = vpop.xlane.xlu0 %1270
    %1272 = vadd.xlane.f32.xlu0 %v1214
    %v1273 = vpop.xlane.xlu0 %1272
    %1274 = vadd.xlane.f32.xlu0 %v1215
    %v1275 = vpop.xlane.xlu0 %1274
    %1276 = vadd.xlane.f32.xlu0 %v1216
    %v1277 = vpop.xlane.xlu0 %1276
    %1278 = vadd.xlane.f32.xlu0 %v1217
    %v1279 = vpop.xlane.xlu0 %1278
    %1280 = vadd.xlane.f32.xlu0 %v1218
    %v1281 = vpop.xlane.xlu0 %1280
    %1282 = vadd.xlane.f32.xlu0 %v1219
    %v1283 = vpop.xlane.xlu0 %1282
    %v1284 = vmul.f32 %v1221, %v1155
    %v1285 = vmul.f32 %v1223, %v1155
    %v1286 = vmul.f32 %v1225, %v1155
    %v1287 = vmul.f32 %v1227, %v1155
    %v1288 = vmul.f32 %v1229, %v1155
    %v1289 = vmul.f32 %v1231, %v1155
    %v1290 = vmul.f32 %v1233, %v1155
    %v1291 = vmul.f32 %v1235, %v1155
    %v1292 = vmul.f32 %v1237, %v1155
    %v1293 = vmul.f32 %v1239, %v1155
    %v1294 = vmul.f32 %v1241, %v1155
    %v1295 = vmul.f32 %v1243, %v1155
    %v1296 = vmul.f32 %v1245, %v1155
    %v1297 = vmul.f32 %v1247, %v1155
    %v1298 = vmul.f32 %v1249, %v1155
    %v1299 = vmul.f32 %v1251, %v1155
    %v1300 = vmul.f32 %v1253, %v1155
    %v1301 = vmul.f32 %v1255, %v1155
    %v1302 = vmul.f32 %v1257, %v1155
    %v1303 = vmul.f32 %v1259, %v1155
    %v1304 = vmul.f32 %v1261, %v1155
    %v1305 = vmul.f32 %v1263, %v1155
    %v1306 = vmul.f32 %v1265, %v1155
    %v1307 = vmul.f32 %v1267, %v1155
    %v1308 = vmul.f32 %v1269, %v1155
    %v1309 = vmul.f32 %v1271, %v1155
    %v1310 = vmul.f32 %v1273, %v1155
    %v1311 = vmul.f32 %v1275, %v1155
    %v1312 = vmul.f32 %v1277, %v1155
    %v1313 = vmul.f32 %v1279, %v1155
    %v1314 = vmul.f32 %v1281, %v1155
    %v1315 = vmul.f32 %v1283, %v1155
    %v1316 = vmul.f32 %v1156, %v1156
    %v1317 = vmul.f32 %v1157, %v1157
    %v1318 = vmul.f32 %v1158, %v1158
    %v1319 = vmul.f32 %v1159, %v1159
    %v1320 = vmul.f32 %v1160, %v1160
    %v1321 = vmul.f32 %v1161, %v1161
    %v1322 = vmul.f32 %v1162, %v1162
    %v1323 = vmul.f32 %v1163, %v1163
    %v1324 = vmul.f32 %v1164, %v1164
    %v1325 = vmul.f32 %v1165, %v1165
    %v1326 = vmul.f32 %v1166, %v1166
    %v1327 = vmul.f32 %v1167, %v1167
    %v1328 = vmul.f32 %v1168, %v1168
    %v1329 = vmul.f32 %v1169, %v1169
    %v1330 = vmul.f32 %v1170, %v1170
    %v1331 = vmul.f32 %v1171, %v1171
    %v1332 = vmul.f32 %v1172, %v1172
    %v1333 = vmul.f32 %v1173, %v1173
    %v1334 = vmul.f32 %v1174, %v1174
    %v1335 = vmul.f32 %v1175, %v1175
    %v1336 = vmul.f32 %v1176, %v1176
    %v1337 = vmul.f32 %v1177, %v1177
    %v1338 = vmul.f32 %v1178, %v1178
    %v1339 = vmul.f32 %v1179, %v1179
    %v1340 = vmul.f32 %v1180, %v1180
    %v1341 = vmul.f32 %v1181, %v1181
    %v1342 = vmul.f32 %v1182, %v1182
    %v1343 = vmul.f32 %v1183, %v1183
    %v1344 = vmul.f32 %v1184, %v1184
    %v1345 = vmul.f32 %v1185, %v1185
    %v1346 = vmul.f32 %v1186, %v1186
    %v1347 = vmul.f32 %v1187, %v1187
    %v1348 = vsub.f32 %v1284, %v1316
    %v1349 = vsub.f32 %v1285, %v1317
    %v1350 = vsub.f32 %v1286, %v1318
    %v1351 = vsub.f32 %v1287, %v1319
    %v1352 = vsub.f32 %v1288, %v1320
    %v1353 = vsub.f32 %v1289, %v1321
    %v1354 = vsub.f32 %v1290, %v1322
    %v1355 = vsub.f32 %v1291, %v1323
    %v1356 = vsub.f32 %v1292, %v1324
    %v1357 = vsub.f32 %v1293, %v1325
    %v1358 = vsub.f32 %v1294, %v1326
    %v1359 = vsub.f32 %v1295, %v1327
    %v1360 = vsub.f32 %v1296, %v1328
    %v1361 = vsub.f32 %v1297, %v1329
    %v1362 = vsub.f32 %v1298, %v1330
    %v1363 = vsub.f32 %v1299, %v1331
    %v1364 = vsub.f32 %v1300, %v1332
    %v1365 = vsub.f32 %v1301, %v1333
    %v1366 = vsub.f32 %v1302, %v1334
    %v1367 = vsub.f32 %v1303, %v1335
    %v1368 = vsub.f32 %v1304, %v1336
    %v1369 = vsub.f32 %v1305, %v1337
    %v1370 = vsub.f32 %v1306, %v1338
    %v1371 = vsub.f32 %v1307, %v1339
    %v1372 = vsub.f32 %v1308, %v1340
    %v1373 = vsub.f32 %v1309, %v1341
    %v1374 = vsub.f32 %v1310, %v1342
    %v1375 = vsub.f32 %v1311, %v1343
    %v1376 = vsub.f32 %v1312, %v1344
    %v1377 = vsub.f32 %v1313, %v1345
    %v1378 = vsub.f32 %v1314, %v1346
    %v1379 = vsub.f32 %v1315, %v1347
    %v1380 = vsub.f32 %v965, %v1156
    %v1381 = vsub.f32 %v968, %v1157
    %v1382 = vsub.f32 %v973, %v1158
    %v1383 = vsub.f32 %v976, %v1159
    %v1384 = vsub.f32 %v981, %v1160
    %v1385 = vsub.f32 %v984, %v1161
    %v1386 = vsub.f32 %v989, %v1162
    %v1387 = vsub.f32 %v992, %v1163
    %v1388 = vsub.f32 %v997, %v1164
    %v1389 = vsub.f32 %v1000, %v1165
    %v1390 = vsub.f32 %v1005, %v1166
    %v1391 = vsub.f32 %v1008, %v1167
    %v1392 = vsub.f32 %v1013, %v1168
    %v1393 = vsub.f32 %v1016, %v1169
    %v1394 = vsub.f32 %v1021, %v1170
    %v1395 = vsub.f32 %v1024, %v1171
    %v1396 = vsub.f32 %v1029, %v1172
    %v1397 = vsub.f32 %v1032, %v1173
    %v1398 = vsub.f32 %v1037, %v1174
    %v1399 = vsub.f32 %v1040, %v1175
    %v1400 = vsub.f32 %v1045, %v1176
    %v1401 = vsub.f32 %v1048, %v1177
    %v1402 = vsub.f32 %v1053, %v1178
    %v1403 = vsub.f32 %v1056, %v1179
    %v1404 = vsub.f32 %v1061, %v1180
    %v1405 = vsub.f32 %v1064, %v1181
    %v1406 = vsub.f32 %v1069, %v1182
    %v1407 = vsub.f32 %v1072, %v1183
    %v1408 = vsub.f32 %v1077, %v1184
    %v1409 = vsub.f32 %v1080, %v1185
    %v1410 = vsub.f32 %v1085, %v1186
    %v1411 = vsub.f32 %v1088, %v1187
    %v1412 = vadd.f32 %v1348, 1e-05
    %v1413 = vadd.f32 %v1349, 1e-05
    %v1414 = vadd.f32 %v1350, 1e-05
    %v1415 = vadd.f32 %v1351, 1e-05
    %v1416 = vadd.f32 %v1352, 1e-05
    %v1417 = vadd.f32 %v1353, 1e-05
    %v1418 = vadd.f32 %v1354, 1e-05
    %v1419 = vadd.f32 %v1355, 1e-05
    %v1420 = vadd.f32 %v1356, 1e-05
    %v1421 = vadd.f32 %v1357, 1e-05
    %v1422 = vadd.f32 %v1358, 1e-05
    %v1423 = vadd.f32 %v1359, 1e-05
    %v1424 = vadd.f32 %v1360, 1e-05
    %v1425 = vadd.f32 %v1361, 1e-05
    %v1426 = vadd.f32 %v1362, 1e-05
    %v1427 = vadd.f32 %v1363, 1e-05
    %v1428 = vadd.f32 %v1364, 1e-05
    %v1429 = vadd.f32 %v1365, 1e-05
    %v1430 = vadd.f32 %v1366, 1e-05
    %v1431 = vadd.f32 %v1367, 1e-05
    %v1432 = vadd.f32 %v1368, 1e-05
    %v1433 = vadd.f32 %v1369, 1e-05
    %v1434 = vadd.f32 %v1370, 1e-05
    %v1435 = vadd.f32 %v1371, 1e-05
    %v1436 = vadd.f32 %v1372, 1e-05
    %v1437 = vadd.f32 %v1373, 1e-05
    %v1438 = vadd.f32 %v1374, 1e-05
    %v1439 = vadd.f32 %v1375, 1e-05
    %v1440 = vadd.f32 %v1376, 1e-05
    %v1441 = vadd.f32 %v1377, 1e-05
    %v1442 = vadd.f32 %v1378, 1e-05
    %v1443 = vadd.f32 %v1379, 1e-05
    %v1444 = vrsqrt.pop %v1412
    %v1445 = vrsqrt.pop %v1413
    %v1446 = vrsqrt.pop %v1414
    %v1447 = vrsqrt.pop %v1415
    %v1448 = vrsqrt.pop %v1416
    %v1449 = vrsqrt.pop %v1417
    %v1450 = vrsqrt.pop %v1418
    %v1451 = vrsqrt.pop %v1419
    %v1452 = vrsqrt.pop %v1420
    %v1453 = vrsqrt.pop %v1421
    %v1454 = vrsqrt.pop %v1422
    %v1455 = vrsqrt.pop %v1423
    %v1456 = vrsqrt.pop %v1424
    %v1457 = vrsqrt.pop %v1425
    %v1458 = vrsqrt.pop %v1426
    %v1459 = vrsqrt.pop %v1427
    %v1460 = vrsqrt.pop %v1428
    %v1461 = vrsqrt.pop %v1429
    %v1462 = vrsqrt.pop %v1430
    %v1463 = vrsqrt.pop %v1431
    %v1464 = vrsqrt.pop %v1432
    %v1465 = vrsqrt.pop %v1433
    %v1466 = vrsqrt.pop %v1434
    %v1467 = vrsqrt.pop %v1435
    %v1468 = vrsqrt.pop %v1436
    %v1469 = vrsqrt.pop %v1437
    %v1470 = vrsqrt.pop %v1438
    %v1471 = vrsqrt.pop %v1439
    %v1472 = vrsqrt.pop %v1440
    %v1473 = vrsqrt.pop %v1441
    %v1474 = vrsqrt.pop %v1442
    %v1475 = vrsqrt.pop %v1443
    %v1476 = vmul.f32 %v1380, %v1444
    %v1477 = vmul.f32 %v1381, %v1445
    %v1478 = vmul.f32 %v1382, %v1446
    %v1479 = vmul.f32 %v1383, %v1447
    %v1480 = vmul.f32 %v1384, %v1448
    %v1481 = vmul.f32 %v1385, %v1449
    %v1482 = vmul.f32 %v1386, %v1450
    %v1483 = vmul.f32 %v1387, %v1451
    %v1484 = vmul.f32 %v1388, %v1452
    %v1485 = vmul.f32 %v1389, %v1453
    %v1486 = vmul.f32 %v1390, %v1454
    %v1487 = vmul.f32 %v1391, %v1455
    %v1488 = vmul.f32 %v1392, %v1456
    %v1489 = vmul.f32 %v1393, %v1457
    %v1490 = vmul.f32 %v1394, %v1458
    %v1491 = vmul.f32 %v1395, %v1459
    %v1492 = vmul.f32 %v1396, %v1460
    %v1493 = vmul.f32 %v1397, %v1461
    %v1494 = vmul.f32 %v1398, %v1462
    %v1495 = vmul.f32 %v1399, %v1463
    %v1496 = vmul.f32 %v1400, %v1464
    %v1497 = vmul.f32 %v1401, %v1465
    %v1498 = vmul.f32 %v1402, %v1466
    %v1499 = vmul.f32 %v1403, %v1467
    %v1500 = vmul.f32 %v1404, %v1468
    %v1501 = vmul.f32 %v1405, %v1469
    %v1502 = vmul.f32 %v1406, %v1470
    %v1503 = vmul.f32 %v1407, %v1471
    %v1504 = vmul.f32 %v1408, %v1472
    %v1505 = vmul.f32 %v1409, %v1473
    %v1506 = vmul.f32 %v1410, %v1474
    %v1507 = vmul.f32 %v1411, %v1475
    %v1508 = vld [vmem:[%s7] sm:$0x1]
    %v1510 = vlaneseq
    %v1511 = vshrl.u32 %v1510, 7
    %v1512 = vsub.s32 0, %v1511
    %v1513 = vrot.slane %v1508, %v1512
    %v1515 = vmul.f32 %v1476, %v1513
    %v1516 = vmul.f32 %v1477, %v1513
    %v1517 = vmul.f32 %v1478, %v1513
    %v1518 = vmul.f32 %v1479, %v1513
    %v1519 = vmul.f32 %v1480, %v1513
    %v1520 = vmul.f32 %v1481, %v1513
    %v1521 = vmul.f32 %v1482, %v1513
    %v1522 = vmul.f32 %v1483, %v1513
    %v1523 = vmul.f32 %v1484, %v1513
    %v1524 = vmul.f32 %v1485, %v1513
    %v1525 = vmul.f32 %v1486, %v1513
    %v1526 = vmul.f32 %v1487, %v1513
    %v1527 = vmul.f32 %v1488, %v1513
    %v1528 = vmul.f32 %v1489, %v1513
    %v1529 = vmul.f32 %v1490, %v1513
    %v1530 = vmul.f32 %v1491, %v1513
    %v1531 = vmul.f32 %v1492, %v1513
    %v1532 = vmul.f32 %v1493, %v1513
    %v1533 = vmul.f32 %v1494, %v1513
    %v1534 = vmul.f32 %v1495, %v1513
    %v1535 = vmul.f32 %v1496, %v1513
    %v1536 = vmul.f32 %v1497, %v1513
    %v1537 = vmul.f32 %v1498, %v1513
    %v1538 = vmul.f32 %v1499, %v1513
    %v1539 = vmul.f32 %v1500, %v1513
    %v1540 = vmul.f32 %v1501, %v1513
    %v1541 = vmul.f32 %v1502, %v1513
    %v1542 = vmul.f32 %v1503, %v1513
    %v1543 = vmul.f32 %v1504, %v1513
    %v1544 = vmul.f32 %v1505, %v1513
    %v1545 = vmul.f32 %v1506, %v1513
    %v1546 = vmul.f32 %v1507, %v1513
    %v1547 = vld [vmem:[%s8] sm:$0x1]
    %v1549 = vlaneseq
    %v1550 = vshrl.u32 %v1549, 7
    %v1551 = vsub.s32 0, %v1550
    %v1552 = vrot.slane %v1547, %v1551
    %v1554 = vadd.f32 %v1515, %v1552
    %v1555 = vadd.f32 %v1516, %v1552
    %v1556 = vadd.f32 %v1517, %v1552
    %v1557 = vadd.f32 %v1518, %v1552
    %v1558 = vadd.f32 %v1519, %v1552
    %v1559 = vadd.f32 %v1520, %v1552
    %v1560 = vadd.f32 %v1521, %v1552
    %v1561 = vadd.f32 %v1522, %v1552
    %v1562 = vadd.f32 %v1523, %v1552
    %v1563 = vadd.f32 %v1524, %v1552
    %v1564 = vadd.f32 %v1525, %v1552
    %v1565 = vadd.f32 %v1526, %v1552
    %v1566 = vadd.f32 %v1527, %v1552
    %v1567 = vadd.f32 %v1528, %v1552
    %v1568 = vadd.f32 %v1529, %v1552
    %v1569 = vadd.f32 %v1530, %v1552
    %v1570 = vadd.f32 %v1531, %v1552
    %v1571 = vadd.f32 %v1532, %v1552
    %v1572 = vadd.f32 %v1533, %v1552
    %v1573 = vadd.f32 %v1534, %v1552
    %v1574 = vadd.f32 %v1535, %v1552
    %v1575 = vadd.f32 %v1536, %v1552
    %v1576 = vadd.f32 %v1537, %v1552
    %v1577 = vadd.f32 %v1538, %v1552
    %v1578 = vadd.f32 %v1539, %v1552
    %v1579 = vadd.f32 %v1540, %v1552
    %v1580 = vadd.f32 %v1541, %v1552
    %v1581 = vadd.f32 %v1542, %v1552
    %v1582 = vadd.f32 %v1543, %v1552
    %v1583 = vadd.f32 %v1544, %v1552
    %v1584 = vadd.f32 %v1545, %v1552
    %v1585 = vadd.f32 %v1546, %v1552
    %v1586 = vadd.f32 %v1554, %v34
    %v1587 = vadd.f32 %v1555, %v35
    %v1588 = vadd.f32 %v1556, %v36
    %v1589 = vadd.f32 %v1557, %v37
    %v1590 = vadd.f32 %v1558, %v38
    %v1591 = vadd.f32 %v1559, %v39
    %v1592 = vadd.f32 %v1560, %v40
    %v1593 = vadd.f32 %v1561, %v41
    %v1594 = vadd.f32 %v1562, %v42
    %v1595 = vadd.f32 %v1563, %v43
    %v1596 = vadd.f32 %v1564, %v44
    %v1597 = vadd.f32 %v1565, %v45
    %v1598 = vadd.f32 %v1566, %v46
    %v1599 = vadd.f32 %v1567, %v47
    %v1600 = vadd.f32 %v1568, %v48
    %v1601 = vadd.f32 %v1569, %v49
    %v1602 = vadd.f32 %v1570, %v50
    %v1603 = vadd.f32 %v1571, %v51
    %v1604 = vadd.f32 %v1572, %v52
    %v1605 = vadd.f32 %v1573, %v53
    %v1606 = vadd.f32 %v1574, %v54
    %v1607 = vadd.f32 %v1575, %v55
    %v1608 = vadd.f32 %v1576, %v56
    %v1609 = vadd.f32 %v1577, %v57
    %v1610 = vadd.f32 %v1578, %v58
    %v1611 = vadd.f32 %v1579, %v59
    %v1612 = vadd.f32 %v1580, %v60
    %v1613 = vadd.f32 %v1581, %v61
    %v1614 = vadd.f32 %v1582, %v62
    %v1615 = vadd.f32 %v1583, %v63
    %v1616 = vadd.f32 %v1584, %v64
    %v1617 = vadd.f32 %v1585, %v65
    %1618 = vst [vmem:[#allocation2] sm:$0xff] %v1586
    %1619 = vst [vmem:[#allocation2 + $0x8] sm:$0xff] %v1587
    %1620 = vst [vmem:[#allocation2 + $0x10] sm:$0xff] %v1588
    %1621 = vst [vmem:[#allocation2 + $0x18] sm:$0xff] %v1589
    %1622 = vst [vmem:[#allocation2 + $0x20] sm:$0xff] %v1590
    %1623 = vst [vmem:[#allocation2 + $0x28] sm:$0xff] %v1591
    %1624 = vst [vmem:[#allocation2 + $0x30] sm:$0xff] %v1592
    %1625 = vst [vmem:[#allocation2 + $0x38] sm:$0xff] %v1593
    %1626 = vst [vmem:[#allocation2 + $0x40] sm:$0xff] %v1594
    %1627 = vst [vmem:[#allocation2 + $0x48] sm:$0xff] %v1595
    %1628 = vst [vmem:[#allocation2 + $0x50] sm:$0xff] %v1596
    %1629 = vst [vmem:[#allocation2 + $0x58] sm:$0xff] %v1597
    %1630 = vst [vmem:[#allocation2 + $0x60] sm:$0xff] %v1598
    %1631 = vst [vmem:[#allocation2 + $0x68] sm:$0xff] %v1599
    %1632 = vst [vmem:[#allocation2 + $0x70] sm:$0xff] %v1600
    %1633 = vst [vmem:[#allocation2 + $0x78] sm:$0xff] %v1601
    %1634 = vst [vmem:[#allocation2 + $0x80] sm:$0xff] %v1602
    %1635 = vst [vmem:[#allocation2 + $0x88] sm:$0xff] %v1603
    %1636 = vst [vmem:[#allocation2 + $0x90] sm:$0xff] %v1604
    %1637 = vst [vmem:[#allocation2 + $0x98] sm:$0xff] %v1605
    %1638 = vst [vmem:[#allocation2 + $0xa0] sm:$0xff] %v1606
    %1639 = vst [vmem:[#allocation2 + $0xa8] sm:$0xff] %v1607
    %1640 = vst [vmem:[#allocation2 + $0xb0] sm:$0xff] %v1608
    %1641 = vst [vmem:[#allocation2 + $0xb8] sm:$0xff] %v1609
    %1642 = vst [vmem:[#allocation2 + $0xc0] sm:$0xff] %v1610
    %1643 = vst [vmem:[#allocation2 + $0xc8] sm:$0xff] %v1611
    %1644 = vst [vmem:[#allocation2 + $0xd0] sm:$0xff] %v1612
    %1645 = vst [vmem:[#allocation2 + $0xd8] sm:$0xff] %v1613
    %1646 = vst [vmem:[#allocation2 + $0xe0] sm:$0xff] %v1614
    %1647 = vst [vmem:[#allocation2 + $0xe8] sm:$0xff] %v1615
    %1648 = vst [vmem:[#allocation2 + $0xf0] sm:$0xff] %v1616
    %1649 = vst [vmem:[#allocation2 + $0xf8] sm:$0xff] %v1617
    // Predicated region
    $region38: #{graphcast_processor_forward.11} parent=1 // pred_check
      _
    $region39: #{graphcast_processor_forward.11} parent=1 // pred_check_branch
      %1651 = sbr.rel (0) target = $region41
    $region40: #{graphcast_processor_forward.11} parent=1 // pred_region
      %s1653 = ssub.s32 4096, 4096
      %1654 = vsyncadd [#allocation3], %s1653
      %s1655 = sshll.u32 [#allocation2], 4
      %s1656 = int_to_ptr.vmem [resolvable:$true] %s1655
      %1661 = dma.vmem_to_hbm [thread:$0]  %s1656, 4096, %s9, [#allocation3], 128, 128, 8
    $region41: #{graphcast_processor_forward.11} parent=1 // pred_fallthru
      _
    // Predicated region
    $region42: #{graphcast_processor_forward.11} parent=1 // pred_check
      _
    $region43: #{graphcast_processor_forward.11} parent=1 // pred_check_branch
      %1663 = sbr.rel (0) target = $region45
    $region44: #{graphcast_processor_forward.11} parent=1 // pred_region
      %1664 = dma.done [#allocation3], 4096
    $region45: #{graphcast_processor_forward.11} parent=1 // pred_fallthru
      _
    %1665 = vsyncpa [#allocation3], 1

</llo_original>
